<compile_context>
chip_gen: v7x
topology: tpu7x:2x2x1
jax: 0.10.0
libtpu: 0.0.40
codegen_flags: <defaults>
</compile_context>

<pallas_src>
import jax
import jax.numpy as jnp
import numpy as np
from jax.experimental import pallas as pl
from jax.experimental.pallas import tpu as pltpu

HIDDEN = 512
NUM_BLOCKS = 4
BN_EPS = 1e-5


def dc_kernel(h_ref, ws_ref, g_ref, bt_ref, w5_ref, b5_ref, o_ref):
    # h_ref:  (B, 512)        f32 input activations
    # ws_ref: (4, 512, 512)   bf16 hidden-layer weights, stored as (in, out)
    # g_ref:  (4, 1, 512)     f32 batchnorm gamma
    # bt_ref: (4, 1, 512)     f32 batchnorm beta
    # w5_ref: (1, 512)        f32 final linear weight (row layout)
    # b5_ref: (1, 1)          f32 final linear bias
    # o_ref:  (B, 1)          f32 output
    B = h_ref.shape[0]
    inv_b = jnp.float32(1.0 / B)

    x = h_ref[...].astype(jnp.float32)
    for i in range(NUM_BLOCKS):
        # Linear on the MXU (bf16 operands, f32 accumulation).  Bias omitted:
        # training-mode BN's batch-mean subtraction cancels it exactly.
        z = jnp.dot(x.astype(jnp.bfloat16), ws_ref[i],
                    preferred_element_type=jnp.float32)

        # One-pass biased batch statistics (BatchNorm1d training semantics).
        s1 = jnp.sum(z, axis=0, keepdims=True)          # (1, 512)
        s2 = jnp.sum(z * z, axis=0, keepdims=True)      # (1, 512)
        mean = s1 * inv_b
        var = jnp.maximum(s2 * inv_b - mean * mean, 0.0)

        # Fused BN affine + ReLU: single full-width pass over (B, 512).
        scale = g_ref[i] * jax.lax.rsqrt(var + BN_EPS)   # (1, 512), EUP rsqrt
        shift = bt_ref[i] - mean * scale                 # (1, 512)
        x = jnp.maximum(z * scale + shift, 0.0)

    # Final Linear(512 -> 1): VPU multiply + lane (XLU) reduction.
    y = jnp.sum(x * w5_ref[...], axis=-1, keepdims=True) + b5_ref[...]
    o_ref[...] = y.astype(o_ref.dtype)


@jax.jit
def domain_classifier(h, ws_bf16, gammas, betas, w5_row, b5):
    B = h.shape[0]
    cost = pl.CostEstimate(
        flops=2 * NUM_BLOCKS * B * HIDDEN * HIDDEN + 2 * B * HIDDEN,
        transcendentals=NUM_BLOCKS * HIDDEN,
        bytes_accessed=(ws_bf16.size * 2 + gammas.size * 4 + betas.size * 4
                        + h.size * 4 + w5_row.size * 4 + 4 + B * 4),
    )
    return pl.pallas_call(
        dc_kernel,
        out_shape=jax.ShapeDtypeStruct((B, 1), jnp.float32),
        in_specs=[pl.BlockSpec(memory_space=pltpu.VMEM)] * 6,
        out_specs=pl.BlockSpec(memory_space=pltpu.VMEM),
        compiler_params=pltpu.CompilerParams(vmem_limit_bytes=32 * 1024 * 1024),
        cost_estimate=cost,
    )(h, ws_bf16, gammas, betas, w5_row, b5)


def reference_kernel_precision(h, ws_bf16, gammas, betas, w5_row, b5):
    """Pure-JAX reference mirroring the kernel's bf16-at-matmul precision."""
    x = h.astype(jnp.float32)
    for i in range(NUM_BLOCKS):
        z = jnp.dot(x.astype(jnp.bfloat16).astype(jnp.float32),
                    ws_bf16[i].astype(jnp.float32))
        mean = jnp.mean(z, axis=0, keepdims=True)
        var = jnp.maximum(jnp.mean(z * z, axis=0, keepdims=True) - mean * mean, 0.0)
        scale = gammas[i] * jax.lax.rsqrt(var + BN_EPS)
        shift = betas[i] - mean * scale
        x = jnp.maximum(z * scale + shift, 0.0)
    return jnp.sum(x * w5_row, axis=-1, keepdims=True) + b5


def reference_full_f32(h, ws, bs, gammas, betas, w5_row, b5):
    """Original-module semantics: f32 weights WITH hidden-layer biases."""
    x = h.astype(jnp.float32)
    for i in range(NUM_BLOCKS):
        x = x @ ws[i] + bs[i]
        mean = jnp.mean(x, axis=0, keepdims=True)
        var = jnp.mean(jnp.square(x - mean), axis=0, keepdims=True)
        x = (x - mean) / jnp.sqrt(var + BN_EPS)
        x = x * gammas[i] + betas[i]
        x = jnp.maximum(x, 0.0)
    return x @ w5_row.T + b5


if __name__ == "__main__":
    key = jax.random.PRNGKey(0)
    kh, kw, kb, kg, kbt, kw5, kb5 = jax.random.split(key, 7)

    B = 8  # batch (features are fixed at 512 by the module)

    h = jax.random.normal(kh, (B, HIDDEN), dtype=jnp.float32)
    ws = jax.random.normal(kw, (NUM_BLOCKS, HIDDEN, HIDDEN), dtype=jnp.float32) * 0.05
    bs = jax.random.normal(kb, (NUM_BLOCKS, 1, HIDDEN), dtype=jnp.float32) * 0.05
    gammas = 1.0 + 0.1 * jax.random.normal(kg, (NUM_BLOCKS, 1, HIDDEN), dtype=jnp.float32)
    betas = 0.1 * jax.random.normal(kbt, (NUM_BLOCKS, 1, HIDDEN), dtype=jnp.float32)
    w5_row = jax.random.normal(kw5, (1, HIDDEN), dtype=jnp.float32) * 0.05
    b5 = jax.random.normal(kb5, (1, 1), dtype=jnp.float32) * 0.05

    ws_bf16 = ws.astype(jnp.bfloat16)

    out = domain_classifier(h, ws_bf16, gammas, betas, w5_row, b5)
    out = jax.block_until_ready(out)
    assert out.shape == (B, 1)

    # Strict check vs. a reference matching the kernel's matmul precision.
    ref_p = reference_kernel_precision(h, ws_bf16, gammas, betas, w5_row, b5)
    np.testing.assert_allclose(np.asarray(out), np.asarray(ref_p),
                               rtol=1e-3, atol=1e-3)

    # Loose semantic check vs. the original f32-with-bias module math
    # (differences come only from bf16 weight rounding; bias drop is exact).
    ref_f = reference_full_f32(h, ws, bs, gammas, betas, w5_row, b5)
    max_diff = float(np.max(np.abs(np.asarray(out) - np.asarray(ref_f))))
    assert max_diff < 0.25, f"semantic drift too large: {max_diff}"

    print("KERNEL_OK")
</pallas_src>

<mosaic_0001>
module attributes {stable_mosaic.version = 11 : i64} {
  func.func @dc_kernel(%arg0: memref<8x512xf32, #tpu.memory_space<vmem>>, %arg1: memref<4x512x512xbf16, #tpu.memory_space<vmem>>, %arg2: memref<4x1x512xf32, #tpu.memory_space<vmem>>, %arg3: memref<4x1x512xf32, #tpu.memory_space<vmem>>, %arg4: memref<1x512xf32, #tpu.memory_space<vmem>>, %arg5: memref<1x1xf32, #tpu.memory_space<vmem>>, %arg6: memref<8x1xf32, #tpu.memory_space<vmem>>) attributes {dimension_semantics = [], scalar_prefetch = 0 : i64, scratch_operands = 0 : i64, tpu.core_type = #tpu.core_type<tc>} {
    %c0 = arith.constant 0 : index
    %c0_0 = arith.constant 0 : index
    %0 = vector.load %arg0[%c0, %c0_0] : memref<8x512xf32, #tpu.memory_space<vmem>>, vector<8x512xf32>
    %1 = arith.truncf %0 : vector<8x512xf32> to vector<8x512xbf16>
    %c0_1 = arith.constant 0 : index
    %c0_2 = arith.constant 0 : index
    %c0_3 = arith.constant 0 : index
    %2 = vector.load %arg1[%c0_1, %c0_2, %c0_3] : memref<4x512x512xbf16, #tpu.memory_space<vmem>>, vector<1x512x512xbf16>
    %3 = vector.shape_cast %2 : vector<1x512x512xbf16> to vector<512x512xbf16>
    %cst = arith.constant dense<0.000000e+00> : vector<8x512xf32>
    %4 = tpu.matmul %1, %3, %cst {dimension_numbers = #tpu.dot_dimension_numbers<[1], [0], [0], [1], [0, 0, 1, 1], [], []>} : vector<8x512xbf16>, vector<512x512xbf16>, vector<8x512xf32> -> vector<8x512xf32>
    %cst_4 = arith.constant dense<0.000000e+00> : vector<512xf32>
    %5 = vector.multi_reduction <add>, %4, %cst_4 [0] : vector<8x512xf32> to vector<512xf32>
    %6 = vector.shape_cast %5 : vector<512xf32> to vector<1x512xf32>
    %7 = arith.mulf %4, %4 : vector<8x512xf32>
    %cst_5 = arith.constant dense<0.000000e+00> : vector<512xf32>
    %8 = vector.multi_reduction <add>, %7, %cst_5 [0] : vector<8x512xf32> to vector<512xf32>
    %9 = vector.shape_cast %8 : vector<512xf32> to vector<1x512xf32>
    %cst_6 = arith.constant 1.250000e-01 : f32
    %10 = vector.broadcast %cst_6 : f32 to vector<1x512xf32>
    %11 = arith.mulf %6, %10 : vector<1x512xf32>
    %cst_7 = arith.constant 1.250000e-01 : f32
    %12 = vector.broadcast %cst_7 : f32 to vector<1x512xf32>
    %13 = arith.mulf %9, %12 : vector<1x512xf32>
    %14 = arith.mulf %11, %11 : vector<1x512xf32>
    %15 = arith.subf %13, %14 : vector<1x512xf32>
    %cst_8 = arith.constant 0.000000e+00 : f32
    %16 = vector.broadcast %cst_8 : f32 to vector<1x512xf32>
    %17 = arith.maximumf %15, %16 : vector<1x512xf32>
    %c0_9 = arith.constant 0 : index
    %c0_10 = arith.constant 0 : index
    %c0_11 = arith.constant 0 : index
    %18 = vector.load %arg2[%c0_9, %c0_10, %c0_11] : memref<4x1x512xf32, #tpu.memory_space<vmem>>, vector<1x1x512xf32>
    %19 = vector.shape_cast %18 : vector<1x1x512xf32> to vector<1x512xf32>
    %cst_12 = arith.constant 9.99999974E-6 : f32
    %20 = vector.broadcast %cst_12 : f32 to vector<1x512xf32>
    %21 = arith.addf %17, %20 : vector<1x512xf32>
    %22 = math.rsqrt %21 : vector<1x512xf32>
    %23 = arith.mulf %19, %22 : vector<1x512xf32>
    %c0_13 = arith.constant 0 : index
    %c0_14 = arith.constant 0 : index
    %c0_15 = arith.constant 0 : index
    %24 = vector.load %arg3[%c0_13, %c0_14, %c0_15] : memref<4x1x512xf32, #tpu.memory_space<vmem>>, vector<1x1x512xf32>
    %25 = vector.shape_cast %24 : vector<1x1x512xf32> to vector<1x512xf32>
    %26 = arith.mulf %11, %23 : vector<1x512xf32>
    %27 = arith.subf %25, %26 : vector<1x512xf32>
    %28 = vector.broadcast %23 : vector<1x512xf32> to vector<8x512xf32>
    %29 = arith.mulf %4, %28 : vector<8x512xf32>
    %30 = vector.broadcast %27 : vector<1x512xf32> to vector<8x512xf32>
    %31 = arith.addf %29, %30 : vector<8x512xf32>
    %cst_16 = arith.constant 0.000000e+00 : f32
    %32 = vector.broadcast %cst_16 : f32 to vector<8x512xf32>
    %33 = arith.maximumf %31, %32 : vector<8x512xf32>
    %34 = arith.truncf %33 : vector<8x512xf32> to vector<8x512xbf16>
    %c1 = arith.constant 1 : index
    %c0_17 = arith.constant 0 : index
    %c0_18 = arith.constant 0 : index
    %35 = vector.load %arg1[%c1, %c0_17, %c0_18] : memref<4x512x512xbf16, #tpu.memory_space<vmem>>, vector<1x512x512xbf16>
    %36 = vector.shape_cast %35 : vector<1x512x512xbf16> to vector<512x512xbf16>
    %cst_19 = arith.constant dense<0.000000e+00> : vector<8x512xf32>
    %37 = tpu.matmul %34, %36, %cst_19 {dimension_numbers = #tpu.dot_dimension_numbers<[1], [0], [0], [1], [0, 0, 1, 1], [], []>} : vector<8x512xbf16>, vector<512x512xbf16>, vector<8x512xf32> -> vector<8x512xf32>
    %cst_20 = arith.constant dense<0.000000e+00> : vector<512xf32>
    %38 = vector.multi_reduction <add>, %37, %cst_20 [0] : vector<8x512xf32> to vector<512xf32>
    %39 = vector.shape_cast %38 : vector<512xf32> to vector<1x512xf32>
    %40 = arith.mulf %37, %37 : vector<8x512xf32>
    %cst_21 = arith.constant dense<0.000000e+00> : vector<512xf32>
    %41 = vector.multi_reduction <add>, %40, %cst_21 [0] : vector<8x512xf32> to vector<512xf32>
    %42 = vector.shape_cast %41 : vector<512xf32> to vector<1x512xf32>
    %cst_22 = arith.constant 1.250000e-01 : f32
    %43 = vector.broadcast %cst_22 : f32 to vector<1x512xf32>
    %44 = arith.mulf %39, %43 : vector<1x512xf32>
    %cst_23 = arith.constant 1.250000e-01 : f32
    %45 = vector.broadcast %cst_23 : f32 to vector<1x512xf32>
    %46 = arith.mulf %42, %45 : vector<1x512xf32>
    %47 = arith.mulf %44, %44 : vector<1x512xf32>
    %48 = arith.subf %46, %47 : vector<1x512xf32>
    %cst_24 = arith.constant 0.000000e+00 : f32
    %49 = vector.broadcast %cst_24 : f32 to vector<1x512xf32>
    %50 = arith.maximumf %48, %49 : vector<1x512xf32>
    %c1_25 = arith.constant 1 : index
    %c0_26 = arith.constant 0 : index
    %c0_27 = arith.constant 0 : index
    %51 = vector.load %arg2[%c1_25, %c0_26, %c0_27] : memref<4x1x512xf32, #tpu.memory_space<vmem>>, vector<1x1x512xf32>
    %52 = vector.shape_cast %51 : vector<1x1x512xf32> to vector<1x512xf32>
    %cst_28 = arith.constant 9.99999974E-6 : f32
    %53 = vector.broadcast %cst_28 : f32 to vector<1x512xf32>
    %54 = arith.addf %50, %53 : vector<1x512xf32>
    %55 = math.rsqrt %54 : vector<1x512xf32>
    %56 = arith.mulf %52, %55 : vector<1x512xf32>
    %c1_29 = arith.constant 1 : index
    %c0_30 = arith.constant 0 : index
    %c0_31 = arith.constant 0 : index
    %57 = vector.load %arg3[%c1_29, %c0_30, %c0_31] : memref<4x1x512xf32, #tpu.memory_space<vmem>>, vector<1x1x512xf32>
    %58 = vector.shape_cast %57 : vector<1x1x512xf32> to vector<1x512xf32>
    %59 = arith.mulf %44, %56 : vector<1x512xf32>
    %60 = arith.subf %58, %59 : vector<1x512xf32>
    %61 = vector.broadcast %56 : vector<1x512xf32> to vector<8x512xf32>
    %62 = arith.mulf %37, %61 : vector<8x512xf32>
    %63 = vector.broadcast %60 : vector<1x512xf32> to vector<8x512xf32>
    %64 = arith.addf %62, %63 : vector<8x512xf32>
    %cst_32 = arith.constant 0.000000e+00 : f32
    %65 = vector.broadcast %cst_32 : f32 to vector<8x512xf32>
    %66 = arith.maximumf %64, %65 : vector<8x512xf32>
    %67 = arith.truncf %66 : vector<8x512xf32> to vector<8x512xbf16>
    %c2 = arith.constant 2 : index
    %c0_33 = arith.constant 0 : index
    %c0_34 = arith.constant 0 : index
    %68 = vector.load %arg1[%c2, %c0_33, %c0_34] : memref<4x512x512xbf16, #tpu.memory_space<vmem>>, vector<1x512x512xbf16>
    %69 = vector.shape_cast %68 : vector<1x512x512xbf16> to vector<512x512xbf16>
    %cst_35 = arith.constant dense<0.000000e+00> : vector<8x512xf32>
    %70 = tpu.matmul %67, %69, %cst_35 {dimension_numbers = #tpu.dot_dimension_numbers<[1], [0], [0], [1], [0, 0, 1, 1], [], []>} : vector<8x512xbf16>, vector<512x512xbf16>, vector<8x512xf32> -> vector<8x512xf32>
    %cst_36 = arith.constant dense<0.000000e+00> : vector<512xf32>
    %71 = vector.multi_reduction <add>, %70, %cst_36 [0] : vector<8x512xf32> to vector<512xf32>
    %72 = vector.shape_cast %71 : vector<512xf32> to vector<1x512xf32>
    %73 = arith.mulf %70, %70 : vector<8x512xf32>
    %cst_37 = arith.constant dense<0.000000e+00> : vector<512xf32>
    %74 = vector.multi_reduction <add>, %73, %cst_37 [0] : vector<8x512xf32> to vector<512xf32>
    %75 = vector.shape_cast %74 : vector<512xf32> to vector<1x512xf32>
    %cst_38 = arith.constant 1.250000e-01 : f32
    %76 = vector.broadcast %cst_38 : f32 to vector<1x512xf32>
    %77 = arith.mulf %72, %76 : vector<1x512xf32>
    %cst_39 = arith.constant 1.250000e-01 : f32
    %78 = vector.broadcast %cst_39 : f32 to vector<1x512xf32>
    %79 = arith.mulf %75, %78 : vector<1x512xf32>
    %80 = arith.mulf %77, %77 : vector<1x512xf32>
    %81 = arith.subf %79, %80 : vector<1x512xf32>
    %cst_40 = arith.constant 0.000000e+00 : f32
    %82 = vector.broadcast %cst_40 : f32 to vector<1x512xf32>
    %83 = arith.maximumf %81, %82 : vector<1x512xf32>
    %c2_41 = arith.constant 2 : index
    %c0_42 = arith.constant 0 : index
    %c0_43 = arith.constant 0 : index
    %84 = vector.load %arg2[%c2_41, %c0_42, %c0_43] : memref<4x1x512xf32, #tpu.memory_space<vmem>>, vector<1x1x512xf32>
    %85 = vector.shape_cast %84 : vector<1x1x512xf32> to vector<1x512xf32>
    %cst_44 = arith.constant 9.99999974E-6 : f32
    %86 = vector.broadcast %cst_44 : f32 to vector<1x512xf32>
    %87 = arith.addf %83, %86 : vector<1x512xf32>
    %88 = math.rsqrt %87 : vector<1x512xf32>
    %89 = arith.mulf %85, %88 : vector<1x512xf32>
    %c2_45 = arith.constant 2 : index
    %c0_46 = arith.constant 0 : index
    %c0_47 = arith.constant 0 : index
    %90 = vector.load %arg3[%c2_45, %c0_46, %c0_47] : memref<4x1x512xf32, #tpu.memory_space<vmem>>, vector<1x1x512xf32>
    %91 = vector.shape_cast %90 : vector<1x1x512xf32> to vector<1x512xf32>
    %92 = arith.mulf %77, %89 : vector<1x512xf32>
    %93 = arith.subf %91, %92 : vector<1x512xf32>
    %94 = vector.broadcast %89 : vector<1x512xf32> to vector<8x512xf32>
    %95 = arith.mulf %70, %94 : vector<8x512xf32>
    %96 = vector.broadcast %93 : vector<1x512xf32> to vector<8x512xf32>
    %97 = arith.addf %95, %96 : vector<8x512xf32>
    %cst_48 = arith.constant 0.000000e+00 : f32
    %98 = vector.broadcast %cst_48 : f32 to vector<8x512xf32>
    %99 = arith.maximumf %97, %98 : vector<8x512xf32>
    %100 = arith.truncf %99 : vector<8x512xf32> to vector<8x512xbf16>
    %c3 = arith.constant 3 : index
    %c0_49 = arith.constant 0 : index
    %c0_50 = arith.constant 0 : index
    %101 = vector.load %arg1[%c3, %c0_49, %c0_50] : memref<4x512x512xbf16, #tpu.memory_space<vmem>>, vector<1x512x512xbf16>
    %102 = vector.shape_cast %101 : vector<1x512x512xbf16> to vector<512x512xbf16>
    %cst_51 = arith.constant dense<0.000000e+00> : vector<8x512xf32>
    %103 = tpu.matmul %100, %102, %cst_51 {dimension_numbers = #tpu.dot_dimension_numbers<[1], [0], [0], [1], [0, 0, 1, 1], [], []>} : vector<8x512xbf16>, vector<512x512xbf16>, vector<8x512xf32> -> vector<8x512xf32>
    %cst_52 = arith.constant dense<0.000000e+00> : vector<512xf32>
    %104 = vector.multi_reduction <add>, %103, %cst_52 [0] : vector<8x512xf32> to vector<512xf32>
    %105 = vector.shape_cast %104 : vector<512xf32> to vector<1x512xf32>
    %106 = arith.mulf %103, %103 : vector<8x512xf32>
    %cst_53 = arith.constant dense<0.000000e+00> : vector<512xf32>
    %107 = vector.multi_reduction <add>, %106, %cst_53 [0] : vector<8x512xf32> to vector<512xf32>
    %108 = vector.shape_cast %107 : vector<512xf32> to vector<1x512xf32>
    %cst_54 = arith.constant 1.250000e-01 : f32
    %109 = vector.broadcast %cst_54 : f32 to vector<1x512xf32>
    %110 = arith.mulf %105, %109 : vector<1x512xf32>
    %cst_55 = arith.constant 1.250000e-01 : f32
    %111 = vector.broadcast %cst_55 : f32 to vector<1x512xf32>
    %112 = arith.mulf %108, %111 : vector<1x512xf32>
    %113 = arith.mulf %110, %110 : vector<1x512xf32>
    %114 = arith.subf %112, %113 : vector<1x512xf32>
    %cst_56 = arith.constant 0.000000e+00 : f32
    %115 = vector.broadcast %cst_56 : f32 to vector<1x512xf32>
    %116 = arith.maximumf %114, %115 : vector<1x512xf32>
    %c3_57 = arith.constant 3 : index
    %c0_58 = arith.constant 0 : index
    %c0_59 = arith.constant 0 : index
    %117 = vector.load %arg2[%c3_57, %c0_58, %c0_59] : memref<4x1x512xf32, #tpu.memory_space<vmem>>, vector<1x1x512xf32>
    %118 = vector.shape_cast %117 : vector<1x1x512xf32> to vector<1x512xf32>
    %cst_60 = arith.constant 9.99999974E-6 : f32
    %119 = vector.broadcast %cst_60 : f32 to vector<1x512xf32>
    %120 = arith.addf %116, %119 : vector<1x512xf32>
    %121 = math.rsqrt %120 : vector<1x512xf32>
    %122 = arith.mulf %118, %121 : vector<1x512xf32>
    %c3_61 = arith.constant 3 : index
    %c0_62 = arith.constant 0 : index
    %c0_63 = arith.constant 0 : index
    %123 = vector.load %arg3[%c3_61, %c0_62, %c0_63] : memref<4x1x512xf32, #tpu.memory_space<vmem>>, vector<1x1x512xf32>
    %124 = vector.shape_cast %123 : vector<1x1x512xf32> to vector<1x512xf32>
    %125 = arith.mulf %110, %122 : vector<1x512xf32>
    %126 = arith.subf %124, %125 : vector<1x512xf32>
    %127 = vector.broadcast %122 : vector<1x512xf32> to vector<8x512xf32>
    %128 = arith.mulf %103, %127 : vector<8x512xf32>
    %129 = vector.broadcast %126 : vector<1x512xf32> to vector<8x512xf32>
    %130 = arith.addf %128, %129 : vector<8x512xf32>
    %cst_64 = arith.constant 0.000000e+00 : f32
    %131 = vector.broadcast %cst_64 : f32 to vector<8x512xf32>
    %132 = arith.maximumf %130, %131 : vector<8x512xf32>
    %c0_65 = arith.constant 0 : index
    %c0_66 = arith.constant 0 : index
    %133 = vector.load %arg4[%c0_65, %c0_66] : memref<1x512xf32, #tpu.memory_space<vmem>>, vector<1x512xf32>
    %134 = vector.broadcast %133 : vector<1x512xf32> to vector<8x512xf32>
    %135 = arith.mulf %132, %134 : vector<8x512xf32>
    %cst_67 = arith.constant dense<0.000000e+00> : vector<8xf32>
    %136 = vector.multi_reduction <add>, %135, %cst_67 [1] : vector<8x512xf32> to vector<8xf32>
    %137 = vector.shape_cast %136 : vector<8xf32> to vector<8x1xf32>
    %c0_68 = arith.constant 0 : index
    %c0_69 = arith.constant 0 : index
    %138 = vector.load %arg5[%c0_68, %c0_69] : memref<1x1xf32, #tpu.memory_space<vmem>>, vector<1x1xf32>
    %139 = vector.broadcast %138 : vector<1x1xf32> to vector<8x1xf32>
    %140 = arith.addf %137, %139 : vector<8x1xf32>
    %c0_70 = arith.constant 0 : index
    %c0_71 = arith.constant 0 : index
    %141 = vector.load %arg6[%c0_70, %c0_71] : memref<8x1xf32, #tpu.memory_space<vmem>>, vector<8x1xf32>
    tpu.vector_store %arg6[%c0_70, %c0_71], %140 {strides = array<i32>} : memref<8x1xf32, #tpu.memory_space<vmem>>, vector<8x1xf32>,
    return
  }
}

</mosaic_0001>

<llo_original>
// kernel: domain_classifier.1
$region0: #{domain_classifier.1}
  #allocation0 [shape = 'u32[]', space=smem, size = 0x4, offset = 0x4, fixed_abs, tag = 'smem constant byte address 0x4 - core index']
  #allocation1 [shape = 'u32[144,128]{1,0:T(1,128)}', space=vmem, size = 0x12000, scoped, tag = 'internal scratch']
  #allocation2 [shape = 'f32[1,1]{1,0:T(1,128)S(1)}', space=vmem, size = 0x200, scoped, tag = 'scoped memory for domain_classifier.1']
  %s0 = inlined_call_operand.hbm [shape: f32[8,512], index: 0, kind: input, shape index: {}]
  %s1 = inlined_call_operand.hbm [shape: bf16[4,512,512], index: 1, kind: input, shape index: {}]
  %s2 = inlined_call_operand.hbm [shape: f32[4,1,512], index: 2, kind: input, shape index: {}]
  %s3 = inlined_call_operand.hbm [shape: f32[4,1,512], index: 3, kind: input, shape index: {}]
  %s4 = inlined_call_operand.hbm [shape: f32[1,512], index: 4, kind: input, shape index: {}]
  %s5 = inlined_call_operand.<no memory space> [shape: f32[1,1], index: 5, kind: input, shape index: {}]
  %s6 = inlined_call_operand.vmem [shape: f32[8,1], index: 6, kind: output, shape index: {}]
  %s7 = sld [smem:[#allocation0]]
  $region54: #{domain_classifier.1} parent=0
    _
  %s9 = ssub.s32 1, %s7
  %s10 = scalar_select 0, %s9, %s7
  %v11 = vstv %s5
  %12 = vst [vmem:[#allocation2] sm:$0x1] %v11
  $region1: #{domain_classifier.1} parent=0
    #allocation3 [shape = 'u8[16384]{0}', space=vmem, size = 0x4000, scoped, tag = 'input window, operand 0, single buffered']
    #allocation4 [shape = 's32[1]{0}', space=sflag, size = 0x4, scoped, tag = 'scoped memory for domain_classifier.1']
    #allocation5 [shape = 'u8[2097152]{0}', space=vmem, size = 0x200000, scoped, tag = 'input window, operand 1, single buffered']
    #allocation6 [shape = 's32[1]{0}', space=sflag, size = 0x4, scoped, tag = 'scoped memory for domain_classifier.1']
    #allocation7 [shape = 'u8[8192]{0}', space=vmem, size = 0x2000, scoped, tag = 'input window, operand 2, single buffered']
    #allocation8 [shape = 'u8[8192]{0}', space=vmem, size = 0x2000, scoped, tag = 'input window, operand 3, single buffered']
    #allocation9 [shape = 's32[1]{0}', space=sflag, size = 0x4, scoped, tag = 'scoped memory for domain_classifier.1']
    #allocation10 [shape = 'u8[2048]{0}', space=vmem, size = 0x800, scoped, tag = 'input window, operand 4, single buffered']
    %13 = vsyncpa [#allocation4], 0
    %14 = vsyncpa [#allocation6], 0
    %15 = vsyncpa [#allocation9], 0
    // Predicated region
    $region2: #{domain_classifier.1} parent=1 // pred_check
      _
    $region3: #{domain_classifier.1} parent=1 // pred_check_branch
      %17 = sbr.rel (0) target = $region5
    $region4: #{domain_classifier.1} parent=1 // pred_region
      %s19 = ssub.s32 512, 512
      %20 = vsyncadd [#allocation4], %s19
      %s22 = sshll.u32 [#allocation3], 4
      %s23 = int_to_ptr.vmem [resolvable:$true] %s22
      %25 = dma.hbm_to_vmem [thread:$0]  %s0, 512, %s23, [#allocation4]
    $region5: #{domain_classifier.1} parent=1 // pred_fallthru
      _
    // Predicated region
    $region6: #{domain_classifier.1} parent=1 // pred_check
      _
    $region7: #{domain_classifier.1} parent=1 // pred_check_branch
      %27 = sbr.rel (0) target = $region9
    $region8: #{domain_classifier.1} parent=1 // pred_region
      %s29 = ssub.s32 65536, 65536
      %30 = vsyncadd [#allocation6], %s29
      %s31 = sshll.u32 [#allocation5], 4
      %s32 = int_to_ptr.vmem [resolvable:$true] %s31
      %37 = dma.hbm_to_vmem [thread:$0]  %s1, 65536, %s32, [#allocation6], 256, 256, 16
    $region9: #{domain_classifier.1} parent=1 // pred_fallthru
      _
    // Predicated region
    $region10: #{domain_classifier.1} parent=1 // pred_check
      _
    $region11: #{domain_classifier.1} parent=1 // pred_check_branch
      %39 = sbr.rel (0) target = $region13
    $region12: #{domain_classifier.1} parent=1 // pred_region
      %s41 = ssub.s32 256, 256
      %42 = vsyncadd [#allocation6], %s41
      %s43 = sshll.u32 [#allocation7], 4
      %s44 = int_to_ptr.vmem [resolvable:$true] %s43
      %49 = dma.hbm_to_vmem [thread:$0]  %s2, 256, %s44, [#allocation6], 64, 64, 4
    $region13: #{domain_classifier.1} parent=1 // pred_fallthru
      _
    // Predicated region
    $region14: #{domain_classifier.1} parent=1 // pred_check
      _
    $region15: #{domain_classifier.1} parent=1 // pred_check_branch
      %51 = sbr.rel (0) target = $region17
    $region16: #{domain_classifier.1} parent=1 // pred_region
      %s53 = ssub.s32 256, 256
      %54 = vsyncadd [#allocation9], %s53
      %s55 = sshll.u32 [#allocation8], 4
      %s56 = int_to_ptr.vmem [resolvable:$true] %s55
      %61 = dma.hbm_to_vmem [thread:$0]  %s3, 256, %s56, [#allocation9], 64, 64, 4
    $region17: #{domain_classifier.1} parent=1 // pred_fallthru
      _
    // Predicated region
    $region18: #{domain_classifier.1} parent=1 // pred_check
      _
    $region19: #{domain_classifier.1} parent=1 // pred_check_branch
      %63 = sbr.rel (0) target = $region21
    $region20: #{domain_classifier.1} parent=1 // pred_region
      %s65 = ssub.s32 64, 64
      %66 = vsyncadd [#allocation9], %s65
      %s68 = sshll.u32 [#allocation10], 4
      %s69 = int_to_ptr.vmem [resolvable:$true] %s68
      %71 = dma.hbm_to_vmem [thread:$0]  %s4, 64, %s69, [#allocation9]
    $region21: #{domain_classifier.1} parent=1 // pred_fallthru
      _
    // Predicated region
    $region22: #{domain_classifier.1} parent=1 // pred_check
      _
    $region23: #{domain_classifier.1} parent=1 // pred_check_branch
      %73 = sbr.rel (0) target = $region25
    $region24: #{domain_classifier.1} parent=1 // pred_region
      _
    $region25: #{domain_classifier.1} parent=1 // pred_fallthru
      _
    // Predicated region
    $region26: #{domain_classifier.1} parent=1 // pred_check
      _
    $region27: #{domain_classifier.1} parent=1 // pred_check_branch
      %75 = sbr.rel (0) target = $region29
    $region28: #{domain_classifier.1} parent=1 // pred_region
      %76 = dma.done [#allocation4], 512
    $region29: #{domain_classifier.1} parent=1 // pred_fallthru
      _
    // Predicated region
    $region30: #{domain_classifier.1} parent=1 // pred_check
      _
    $region31: #{domain_classifier.1} parent=1 // pred_check_branch
      %78 = sbr.rel (0) target = $region33
    $region32: #{domain_classifier.1} parent=1 // pred_region
      %79 = dma.done [#allocation6], 65536
    $region33: #{domain_classifier.1} parent=1 // pred_fallthru
      _
    // Predicated region
    $region34: #{domain_classifier.1} parent=1 // pred_check
      _
    $region35: #{domain_classifier.1} parent=1 // pred_check_branch
      %81 = sbr.rel (0) target = $region37
    $region36: #{domain_classifier.1} parent=1 // pred_region
      %82 = dma.done [#allocation6], 256
    $region37: #{domain_classifier.1} parent=1 // pred_fallthru
      _
    // Predicated region
    $region38: #{domain_classifier.1} parent=1 // pred_check
      _
    $region39: #{domain_classifier.1} parent=1 // pred_check_branch
      %84 = sbr.rel (0) target = $region41
    $region40: #{domain_classifier.1} parent=1 // pred_region
      %85 = dma.done [#allocation9], 256
    $region41: #{domain_classifier.1} parent=1 // pred_fallthru
      _
    // Predicated region
    $region42: #{domain_classifier.1} parent=1 // pred_check
      _
    $region43: #{domain_classifier.1} parent=1 // pred_check_branch
      %87 = sbr.rel (0) target = $region45
    $region44: #{domain_classifier.1} parent=1 // pred_region
      %88 = dma.done [#allocation9], 64
    $region45: #{domain_classifier.1} parent=1 // pred_fallthru
      _
    %v89 = vld [vmem:[#allocation3] sm:$0xff]
    %v90 = vld [vmem:[#allocation3 + $0x8] sm:$0xff]
    %v91 = vld [vmem:[#allocation3 + $0x10] sm:$0xff]
    %v92 = vld [vmem:[#allocation3 + $0x18] sm:$0xff]
    %v93 = vpack.c.bf16 %v89, %v89
    %v94 = vpack.c.bf16 %v90, %v90
    %v95 = vpack.c.bf16 %v91, %v91
    %v96 = vpack.c.bf16 %v92, %v92
    %v97 = vld [vmem:[#allocation5] sm:$0xff]
    %v98 = vld [vmem:[#allocation5 + $0x8] sm:$0xff]
    %v99 = vld [vmem:[#allocation5 + $0x10] sm:$0xff]
    %v100 = vld [vmem:[#allocation5 + $0x18] sm:$0xff]
    %v101 = vld [vmem:[#allocation5 + $0x20] sm:$0xff]
    %v102 = vld [vmem:[#allocation5 + $0x28] sm:$0xff]
    %v103 = vld [vmem:[#allocation5 + $0x30] sm:$0xff]
    %v104 = vld [vmem:[#allocation5 + $0x38] sm:$0xff]
    %v105 = vld [vmem:[#allocation5 + $0x40] sm:$0xff]
    %v106 = vld [vmem:[#allocation5 + $0x48] sm:$0xff]
    %v107 = vld [vmem:[#allocation5 + $0x50] sm:$0xff]
    %v108 = vld [vmem:[#allocation5 + $0x58] sm:$0xff]
    %v109 = vld [vmem:[#allocation5 + $0x60] sm:$0xff]
    %v110 = vld [vmem:[#allocation5 + $0x68] sm:$0xff]
    %v111 = vld [vmem:[#allocation5 + $0x70] sm:$0xff]
    %v112 = vld [vmem:[#allocation5 + $0x78] sm:$0xff]
    %v113 = vld [vmem:[#allocation5 + $0x80] sm:$0xff]
    %v114 = vld [vmem:[#allocation5 + $0x88] sm:$0xff]
    %v115 = vld [vmem:[#allocation5 + $0x90] sm:$0xff]
    %v116 = vld [vmem:[#allocation5 + $0x98] sm:$0xff]
    %v117 = vld [vmem:[#allocation5 + $0xa0] sm:$0xff]
    %v118 = vld [vmem:[#allocation5 + $0xa8] sm:$0xff]
    %v119 = vld [vmem:[#allocation5 + $0xb0] sm:$0xff]
    %v120 = vld [vmem:[#allocation5 + $0xb8] sm:$0xff]
    %v121 = vld [vmem:[#allocation5 + $0xc0] sm:$0xff]
    %v122 = vld [vmem:[#allocation5 + $0xc8] sm:$0xff]
    %v123 = vld [vmem:[#allocation5 + $0xd0] sm:$0xff]
    %v124 = vld [vmem:[#allocation5 + $0xd8] sm:$0xff]
    %v125 = vld [vmem:[#allocation5 + $0xe0] sm:$0xff]
    %v126 = vld [vmem:[#allocation5 + $0xe8] sm:$0xff]
    %v127 = vld [vmem:[#allocation5 + $0xf0] sm:$0xff]
    %v128 = vld [vmem:[#allocation5 + $0xf8] sm:$0xff]
    %v129 = vld [vmem:[#allocation5 + $0x100] sm:$0xff]
    %v130 = vld [vmem:[#allocation5 + $0x108] sm:$0xff]
    %v131 = vld [vmem:[#allocation5 + $0x110] sm:$0xff]
    %v132 = vld [vmem:[#allocation5 + $0x118] sm:$0xff]
    %v133 = vld [vmem:[#allocation5 + $0x120] sm:$0xff]
    %v134 = vld [vmem:[#allocation5 + $0x128] sm:$0xff]
    %v135 = vld [vmem:[#allocation5 + $0x130] sm:$0xff]
    %v136 = vld [vmem:[#allocation5 + $0x138] sm:$0xff]
    %v137 = vld [vmem:[#allocation5 + $0x140] sm:$0xff]
    %v138 = vld [vmem:[#allocation5 + $0x148] sm:$0xff]
    %v139 = vld [vmem:[#allocation5 + $0x150] sm:$0xff]
    %v140 = vld [vmem:[#allocation5 + $0x158] sm:$0xff]
    %v141 = vld [vmem:[#allocation5 + $0x160] sm:$0xff]
    %v142 = vld [vmem:[#allocation5 + $0x168] sm:$0xff]
    %v143 = vld [vmem:[#allocation5 + $0x170] sm:$0xff]
    %v144 = vld [vmem:[#allocation5 + $0x178] sm:$0xff]
    %v145 = vld [vmem:[#allocation5 + $0x180] sm:$0xff]
    %v146 = vld [vmem:[#allocation5 + $0x188] sm:$0xff]
    %v147 = vld [vmem:[#allocation5 + $0x190] sm:$0xff]
    %v148 = vld [vmem:[#allocation5 + $0x198] sm:$0xff]
    %v149 = vld [vmem:[#allocation5 + $0x1a0] sm:$0xff]
    %v150 = vld [vmem:[#allocation5 + $0x1a8] sm:$0xff]
    %v151 = vld [vmem:[#allocation5 + $0x1b0] sm:$0xff]
    %v152 = vld [vmem:[#allocation5 + $0x1b8] sm:$0xff]
    %v153 = vld [vmem:[#allocation5 + $0x1c0] sm:$0xff]
    %v154 = vld [vmem:[#allocation5 + $0x1c8] sm:$0xff]
    %v155 = vld [vmem:[#allocation5 + $0x1d0] sm:$0xff]
    %v156 = vld [vmem:[#allocation5 + $0x1d8] sm:$0xff]
    %v157 = vld [vmem:[#allocation5 + $0x1e0] sm:$0xff]
    %v158 = vld [vmem:[#allocation5 + $0x1e8] sm:$0xff]
    %v159 = vld [vmem:[#allocation5 + $0x1f0] sm:$0xff]
    %v160 = vld [vmem:[#allocation5 + $0x1f8] sm:$0xff]
    %v161 = vld [vmem:[#allocation5 + $0x200] sm:$0xff]
    %v162 = vld [vmem:[#allocation5 + $0x208] sm:$0xff]
    %v163 = vld [vmem:[#allocation5 + $0x210] sm:$0xff]
    %v164 = vld [vmem:[#allocation5 + $0x218] sm:$0xff]
    %v165 = vld [vmem:[#allocation5 + $0x220] sm:$0xff]
    %v166 = vld [vmem:[#allocation5 + $0x228] sm:$0xff]
    %v167 = vld [vmem:[#allocation5 + $0x230] sm:$0xff]
    %v168 = vld [vmem:[#allocation5 + $0x238] sm:$0xff]
    %v169 = vld [vmem:[#allocation5 + $0x240] sm:$0xff]
    %v170 = vld [vmem:[#allocation5 + $0x248] sm:$0xff]
    %v171 = vld [vmem:[#allocation5 + $0x250] sm:$0xff]
    %v172 = vld [vmem:[#allocation5 + $0x258] sm:$0xff]
    %v173 = vld [vmem:[#allocation5 + $0x260] sm:$0xff]
    %v174 = vld [vmem:[#allocation5 + $0x268] sm:$0xff]
    %v175 = vld [vmem:[#allocation5 + $0x270] sm:$0xff]
    %v176 = vld [vmem:[#allocation5 + $0x278] sm:$0xff]
    %v177 = vld [vmem:[#allocation5 + $0x280] sm:$0xff]
    %v178 = vld [vmem:[#allocation5 + $0x288] sm:$0xff]
    %v179 = vld [vmem:[#allocation5 + $0x290] sm:$0xff]
    %v180 = vld [vmem:[#allocation5 + $0x298] sm:$0xff]
    %v181 = vld [vmem:[#allocation5 + $0x2a0] sm:$0xff]
    %v182 = vld [vmem:[#allocation5 + $0x2a8] sm:$0xff]
    %v183 = vld [vmem:[#allocation5 + $0x2b0] sm:$0xff]
    %v184 = vld [vmem:[#allocation5 + $0x2b8] sm:$0xff]
    %v185 = vld [vmem:[#allocation5 + $0x2c0] sm:$0xff]
    %v186 = vld [vmem:[#allocation5 + $0x2c8] sm:$0xff]
    %v187 = vld [vmem:[#allocation5 + $0x2d0] sm:$0xff]
    %v188 = vld [vmem:[#allocation5 + $0x2d8] sm:$0xff]
    %v189 = vld [vmem:[#allocation5 + $0x2e0] sm:$0xff]
    %v190 = vld [vmem:[#allocation5 + $0x2e8] sm:$0xff]
    %v191 = vld [vmem:[#allocation5 + $0x2f0] sm:$0xff]
    %v192 = vld [vmem:[#allocation5 + $0x2f8] sm:$0xff]
    %v193 = vld [vmem:[#allocation5 + $0x300] sm:$0xff]
    %v194 = vld [vmem:[#allocation5 + $0x308] sm:$0xff]
    %v195 = vld [vmem:[#allocation5 + $0x310] sm:$0xff]
    %v196 = vld [vmem:[#allocation5 + $0x318] sm:$0xff]
    %v197 = vld [vmem:[#allocation5 + $0x320] sm:$0xff]
    %v198 = vld [vmem:[#allocation5 + $0x328] sm:$0xff]
    %v199 = vld [vmem:[#allocation5 + $0x330] sm:$0xff]
    %v200 = vld [vmem:[#allocation5 + $0x338] sm:$0xff]
    %v201 = vld [vmem:[#allocation5 + $0x340] sm:$0xff]
    %v202 = vld [vmem:[#allocation5 + $0x348] sm:$0xff]
    %v203 = vld [vmem:[#allocation5 + $0x350] sm:$0xff]
    %v204 = vld [vmem:[#allocation5 + $0x358] sm:$0xff]
    %v205 = vld [vmem:[#allocation5 + $0x360] sm:$0xff]
    %v206 = vld [vmem:[#allocation5 + $0x368] sm:$0xff]
    %v207 = vld [vmem:[#allocation5 + $0x370] sm:$0xff]
    %v208 = vld [vmem:[#allocation5 + $0x378] sm:$0xff]
    %v209 = vld [vmem:[#allocation5 + $0x380] sm:$0xff]
    %v210 = vld [vmem:[#allocation5 + $0x388] sm:$0xff]
    %v211 = vld [vmem:[#allocation5 + $0x390] sm:$0xff]
    %v212 = vld [vmem:[#allocation5 + $0x398] sm:$0xff]
    %v213 = vld [vmem:[#allocation5 + $0x3a0] sm:$0xff]
    %v214 = vld [vmem:[#allocation5 + $0x3a8] sm:$0xff]
    %v215 = vld [vmem:[#allocation5 + $0x3b0] sm:$0xff]
    %v216 = vld [vmem:[#allocation5 + $0x3b8] sm:$0xff]
    %v217 = vld [vmem:[#allocation5 + $0x3c0] sm:$0xff]
    %v218 = vld [vmem:[#allocation5 + $0x3c8] sm:$0xff]
    %v219 = vld [vmem:[#allocation5 + $0x3d0] sm:$0xff]
    %v220 = vld [vmem:[#allocation5 + $0x3d8] sm:$0xff]
    %v221 = vld [vmem:[#allocation5 + $0x3e0] sm:$0xff]
    %v222 = vld [vmem:[#allocation5 + $0x3e8] sm:$0xff]
    %v223 = vld [vmem:[#allocation5 + $0x3f0] sm:$0xff]
    %v224 = vld [vmem:[#allocation5 + $0x3f8] sm:$0xff]
    %v353 = vunpack.c.l.b16 %v97
    %v354 = vunpack.c.h.b16 %v97
    %v355 = vunpack.c.l.b16 %v98
    %v356 = vunpack.c.h.b16 %v98
    %v357 = vunpack.c.l.b16 %v99
    %v358 = vunpack.c.h.b16 %v99
    %v359 = vunpack.c.l.b16 %v100
    %v360 = vunpack.c.h.b16 %v100
    %v361 = vunpack.c.l.b16 %v101
    %v362 = vunpack.c.h.b16 %v101
    %v363 = vunpack.c.l.b16 %v102
    %v364 = vunpack.c.h.b16 %v102
    %v365 = vunpack.c.l.b16 %v103
    %v366 = vunpack.c.h.b16 %v103
    %v367 = vunpack.c.l.b16 %v104
    %v368 = vunpack.c.h.b16 %v104
    %v369 = vunpack.c.l.b16 %v105
    %v370 = vunpack.c.h.b16 %v105
    %v371 = vunpack.c.l.b16 %v106
    %v372 = vunpack.c.h.b16 %v106
    %v373 = vunpack.c.l.b16 %v107
    %v374 = vunpack.c.h.b16 %v107
    %v375 = vunpack.c.l.b16 %v108
    %v376 = vunpack.c.h.b16 %v108
    %v377 = vunpack.c.l.b16 %v109
    %v378 = vunpack.c.h.b16 %v109
    %v379 = vunpack.c.l.b16 %v110
    %v380 = vunpack.c.h.b16 %v110
    %v381 = vunpack.c.l.b16 %v111
    %v382 = vunpack.c.h.b16 %v111
    %v383 = vunpack.c.l.b16 %v112
    %v384 = vunpack.c.h.b16 %v112
    %v385 = vunpack.c.l.b16 %v113
    %v386 = vunpack.c.h.b16 %v113
    %v387 = vunpack.c.l.b16 %v114
    %v388 = vunpack.c.h.b16 %v114
    %v389 = vunpack.c.l.b16 %v115
    %v390 = vunpack.c.h.b16 %v115
    %v391 = vunpack.c.l.b16 %v116
    %v392 = vunpack.c.h.b16 %v116
    %v393 = vunpack.c.l.b16 %v117
    %v394 = vunpack.c.h.b16 %v117
    %v395 = vunpack.c.l.b16 %v118
    %v396 = vunpack.c.h.b16 %v118
    %v397 = vunpack.c.l.b16 %v119
    %v398 = vunpack.c.h.b16 %v119
    %v399 = vunpack.c.l.b16 %v120
    %v400 = vunpack.c.h.b16 %v120
    %v401 = vunpack.c.l.b16 %v121
    %v402 = vunpack.c.h.b16 %v121
    %v403 = vunpack.c.l.b16 %v122
    %v404 = vunpack.c.h.b16 %v122
    %v405 = vunpack.c.l.b16 %v123
    %v406 = vunpack.c.h.b16 %v123
    %v407 = vunpack.c.l.b16 %v124
    %v408 = vunpack.c.h.b16 %v124
    %v409 = vunpack.c.l.b16 %v125
    %v410 = vunpack.c.h.b16 %v125
    %v411 = vunpack.c.l.b16 %v126
    %v412 = vunpack.c.h.b16 %v126
    %v413 = vunpack.c.l.b16 %v127
    %v414 = vunpack.c.h.b16 %v127
    %v415 = vunpack.c.l.b16 %v128
    %v416 = vunpack.c.h.b16 %v128
    %v417 = vunpack.c.l.b16 %v129
    %v418 = vunpack.c.h.b16 %v129
    %v419 = vunpack.c.l.b16 %v130
    %v420 = vunpack.c.h.b16 %v130
    %v421 = vunpack.c.l.b16 %v131
    %v422 = vunpack.c.h.b16 %v131
    %v423 = vunpack.c.l.b16 %v132
    %v424 = vunpack.c.h.b16 %v132
    %v425 = vunpack.c.l.b16 %v133
    %v426 = vunpack.c.h.b16 %v133
    %v427 = vunpack.c.l.b16 %v134
    %v428 = vunpack.c.h.b16 %v134
    %v429 = vunpack.c.l.b16 %v135
    %v430 = vunpack.c.h.b16 %v135
    %v431 = vunpack.c.l.b16 %v136
    %v432 = vunpack.c.h.b16 %v136
    %v433 = vunpack.c.l.b16 %v137
    %v434 = vunpack.c.h.b16 %v137
    %v435 = vunpack.c.l.b16 %v138
    %v436 = vunpack.c.h.b16 %v138
    %v437 = vunpack.c.l.b16 %v139
    %v438 = vunpack.c.h.b16 %v139
    %v439 = vunpack.c.l.b16 %v140
    %v440 = vunpack.c.h.b16 %v140
    %v441 = vunpack.c.l.b16 %v141
    %v442 = vunpack.c.h.b16 %v141
    %v443 = vunpack.c.l.b16 %v142
    %v444 = vunpack.c.h.b16 %v142
    %v445 = vunpack.c.l.b16 %v143
    %v446 = vunpack.c.h.b16 %v143
    %v447 = vunpack.c.l.b16 %v144
    %v448 = vunpack.c.h.b16 %v144
    %v449 = vunpack.c.l.b16 %v145
    %v450 = vunpack.c.h.b16 %v145
    %v451 = vunpack.c.l.b16 %v146
    %v452 = vunpack.c.h.b16 %v146
    %v453 = vunpack.c.l.b16 %v147
    %v454 = vunpack.c.h.b16 %v147
    %v455 = vunpack.c.l.b16 %v148
    %v456 = vunpack.c.h.b16 %v148
    %v457 = vunpack.c.l.b16 %v149
    %v458 = vunpack.c.h.b16 %v149
    %v459 = vunpack.c.l.b16 %v150
    %v460 = vunpack.c.h.b16 %v150
    %v461 = vunpack.c.l.b16 %v151
    %v462 = vunpack.c.h.b16 %v151
    %v463 = vunpack.c.l.b16 %v152
    %v464 = vunpack.c.h.b16 %v152
    %v465 = vunpack.c.l.b16 %v153
    %v466 = vunpack.c.h.b16 %v153
    %v467 = vunpack.c.l.b16 %v154
    %v468 = vunpack.c.h.b16 %v154
    %v469 = vunpack.c.l.b16 %v155
    %v470 = vunpack.c.h.b16 %v155
    %v471 = vunpack.c.l.b16 %v156
    %v472 = vunpack.c.h.b16 %v156
    %v473 = vunpack.c.l.b16 %v157
    %v474 = vunpack.c.h.b16 %v157
    %v475 = vunpack.c.l.b16 %v158
    %v476 = vunpack.c.h.b16 %v158
    %v477 = vunpack.c.l.b16 %v159
    %v478 = vunpack.c.h.b16 %v159
    %v479 = vunpack.c.l.b16 %v160
    %v480 = vunpack.c.h.b16 %v160
    %v481 = vunpack.c.l.b16 %v161
    %v482 = vunpack.c.h.b16 %v161
    %v483 = vunpack.c.l.b16 %v162
    %v484 = vunpack.c.h.b16 %v162
    %v485 = vunpack.c.l.b16 %v163
    %v486 = vunpack.c.h.b16 %v163
    %v487 = vunpack.c.l.b16 %v164
    %v488 = vunpack.c.h.b16 %v164
    %v489 = vunpack.c.l.b16 %v165
    %v490 = vunpack.c.h.b16 %v165
    %v491 = vunpack.c.l.b16 %v166
    %v492 = vunpack.c.h.b16 %v166
    %v493 = vunpack.c.l.b16 %v167
    %v494 = vunpack.c.h.b16 %v167
    %v495 = vunpack.c.l.b16 %v168
    %v496 = vunpack.c.h.b16 %v168
    %v497 = vunpack.c.l.b16 %v169
    %v498 = vunpack.c.h.b16 %v169
    %v499 = vunpack.c.l.b16 %v170
    %v500 = vunpack.c.h.b16 %v170
    %v501 = vunpack.c.l.b16 %v171
    %v502 = vunpack.c.h.b16 %v171
    %v503 = vunpack.c.l.b16 %v172
    %v504 = vunpack.c.h.b16 %v172
    %v505 = vunpack.c.l.b16 %v173
    %v506 = vunpack.c.h.b16 %v173
    %v507 = vunpack.c.l.b16 %v174
    %v508 = vunpack.c.h.b16 %v174
    %v509 = vunpack.c.l.b16 %v175
    %v510 = vunpack.c.h.b16 %v175
    %v511 = vunpack.c.l.b16 %v176
    %v512 = vunpack.c.h.b16 %v176
    %v513 = vunpack.c.l.b16 %v177
    %v514 = vunpack.c.h.b16 %v177
    %v515 = vunpack.c.l.b16 %v178
    %v516 = vunpack.c.h.b16 %v178
    %v517 = vunpack.c.l.b16 %v179
    %v518 = vunpack.c.h.b16 %v179
    %v519 = vunpack.c.l.b16 %v180
    %v520 = vunpack.c.h.b16 %v180
    %v521 = vunpack.c.l.b16 %v181
    %v522 = vunpack.c.h.b16 %v181
    %v523 = vunpack.c.l.b16 %v182
    %v524 = vunpack.c.h.b16 %v182
    %v525 = vunpack.c.l.b16 %v183
    %v526 = vunpack.c.h.b16 %v183
    %v527 = vunpack.c.l.b16 %v184
    %v528 = vunpack.c.h.b16 %v184
    %v529 = vunpack.c.l.b16 %v185
    %v530 = vunpack.c.h.b16 %v185
    %v531 = vunpack.c.l.b16 %v186
    %v532 = vunpack.c.h.b16 %v186
    %v533 = vunpack.c.l.b16 %v187
    %v534 = vunpack.c.h.b16 %v187
    %v535 = vunpack.c.l.b16 %v188
    %v536 = vunpack.c.h.b16 %v188
    %v537 = vunpack.c.l.b16 %v189
    %v538 = vunpack.c.h.b16 %v189
    %v539 = vunpack.c.l.b16 %v190
    %v540 = vunpack.c.h.b16 %v190
    %v541 = vunpack.c.l.b16 %v191
    %v542 = vunpack.c.h.b16 %v191
    %v543 = vunpack.c.l.b16 %v192
    %v544 = vunpack.c.h.b16 %v192
    %v545 = vunpack.c.l.b16 %v193
    %v546 = vunpack.c.h.b16 %v193
    %v547 = vunpack.c.l.b16 %v194
    %v548 = vunpack.c.h.b16 %v194
    %v549 = vunpack.c.l.b16 %v195
    %v550 = vunpack.c.h.b16 %v195
    %v551 = vunpack.c.l.b16 %v196
    %v552 = vunpack.c.h.b16 %v196
    %v553 = vunpack.c.l.b16 %v197
    %v554 = vunpack.c.h.b16 %v197
    %v555 = vunpack.c.l.b16 %v198
    %v556 = vunpack.c.h.b16 %v198
    %v557 = vunpack.c.l.b16 %v199
    %v558 = vunpack.c.h.b16 %v199
    %v559 = vunpack.c.l.b16 %v200
    %v560 = vunpack.c.h.b16 %v200
    %v561 = vunpack.c.l.b16 %v201
    %v562 = vunpack.c.h.b16 %v201
    %v563 = vunpack.c.l.b16 %v202
    %v564 = vunpack.c.h.b16 %v202
    %v565 = vunpack.c.l.b16 %v203
    %v566 = vunpack.c.h.b16 %v203
    %v567 = vunpack.c.l.b16 %v204
    %v568 = vunpack.c.h.b16 %v204
    %v569 = vunpack.c.l.b16 %v205
    %v570 = vunpack.c.h.b16 %v205
    %v571 = vunpack.c.l.b16 %v206
    %v572 = vunpack.c.h.b16 %v206
    %v573 = vunpack.c.l.b16 %v207
    %v574 = vunpack.c.h.b16 %v207
    %v575 = vunpack.c.l.b16 %v208
    %v576 = vunpack.c.h.b16 %v208
    %v577 = vunpack.c.l.b16 %v209
    %v578 = vunpack.c.h.b16 %v209
    %v579 = vunpack.c.l.b16 %v210
    %v580 = vunpack.c.h.b16 %v210
    %v581 = vunpack.c.l.b16 %v211
    %v582 = vunpack.c.h.b16 %v211
    %v583 = vunpack.c.l.b16 %v212
    %v584 = vunpack.c.h.b16 %v212
    %v585 = vunpack.c.l.b16 %v213
    %v586 = vunpack.c.h.b16 %v213
    %v587 = vunpack.c.l.b16 %v214
    %v588 = vunpack.c.h.b16 %v214
    %v589 = vunpack.c.l.b16 %v215
    %v590 = vunpack.c.h.b16 %v215
    %v591 = vunpack.c.l.b16 %v216
    %v592 = vunpack.c.h.b16 %v216
    %v593 = vunpack.c.l.b16 %v217
    %v594 = vunpack.c.h.b16 %v217
    %v595 = vunpack.c.l.b16 %v218
    %v596 = vunpack.c.h.b16 %v218
    %v597 = vunpack.c.l.b16 %v219
    %v598 = vunpack.c.h.b16 %v219
    %v599 = vunpack.c.l.b16 %v220
    %v600 = vunpack.c.h.b16 %v220
    %v601 = vunpack.c.l.b16 %v221
    %v602 = vunpack.c.h.b16 %v221
    %v603 = vunpack.c.l.b16 %v222
    %v604 = vunpack.c.h.b16 %v222
    %v605 = vunpack.c.l.b16 %v223
    %v606 = vunpack.c.h.b16 %v223
    %v607 = vunpack.c.l.b16 %v224
    %v608 = vunpack.c.h.b16 %v224
    %v609 = vpack.c.b16 %v357, %v353
    %v610 = vpack.c.b16 %v358, %v354
    %v611 = vpack.c.b16 %v359, %v355
    %v612 = vpack.c.b16 %v360, %v356
    %v613 = vpack.c.b16 %v365, %v361
    %v614 = vpack.c.b16 %v366, %v362
    %v615 = vpack.c.b16 %v367, %v363
    %v616 = vpack.c.b16 %v368, %v364
    %v617 = vpack.c.b16 %v373, %v369
    %v618 = vpack.c.b16 %v374, %v370
    %v619 = vpack.c.b16 %v375, %v371
    %v620 = vpack.c.b16 %v376, %v372
    %v621 = vpack.c.b16 %v381, %v377
    %v622 = vpack.c.b16 %v382, %v378
    %v623 = vpack.c.b16 %v383, %v379
    %v624 = vpack.c.b16 %v384, %v380
    %v625 = vpack.c.b16 %v389, %v385
    %v626 = vpack.c.b16 %v390, %v386
    %v627 = vpack.c.b16 %v391, %v387
    %v628 = vpack.c.b16 %v392, %v388
    %v629 = vpack.c.b16 %v397, %v393
    %v630 = vpack.c.b16 %v398, %v394
    %v631 = vpack.c.b16 %v399, %v395
    %v632 = vpack.c.b16 %v400, %v396
    %v633 = vpack.c.b16 %v405, %v401
    %v634 = vpack.c.b16 %v406, %v402
    %v635 = vpack.c.b16 %v407, %v403
    %v636 = vpack.c.b16 %v408, %v404
    %v637 = vpack.c.b16 %v413, %v409
    %v638 = vpack.c.b16 %v414, %v410
    %v639 = vpack.c.b16 %v415, %v411
    %v640 = vpack.c.b16 %v416, %v412
    %v641 = vpack.c.b16 %v421, %v417
    %v642 = vpack.c.b16 %v422, %v418
    %v643 = vpack.c.b16 %v423, %v419
    %v644 = vpack.c.b16 %v424, %v420
    %v645 = vpack.c.b16 %v429, %v425
    %v646 = vpack.c.b16 %v430, %v426
    %v647 = vpack.c.b16 %v431, %v427
    %v648 = vpack.c.b16 %v432, %v428
    %v649 = vpack.c.b16 %v437, %v433
    %v650 = vpack.c.b16 %v438, %v434
    %v651 = vpack.c.b16 %v439, %v435
    %v652 = vpack.c.b16 %v440, %v436
    %v653 = vpack.c.b16 %v445, %v441
    %v654 = vpack.c.b16 %v446, %v442
    %v655 = vpack.c.b16 %v447, %v443
    %v656 = vpack.c.b16 %v448, %v444
    %v657 = vpack.c.b16 %v453, %v449
    %v658 = vpack.c.b16 %v454, %v450
    %v659 = vpack.c.b16 %v455, %v451
    %v660 = vpack.c.b16 %v456, %v452
    %v661 = vpack.c.b16 %v461, %v457
    %v662 = vpack.c.b16 %v462, %v458
    %v663 = vpack.c.b16 %v463, %v459
    %v664 = vpack.c.b16 %v464, %v460
    %v665 = vpack.c.b16 %v469, %v465
    %v666 = vpack.c.b16 %v470, %v466
    %v667 = vpack.c.b16 %v471, %v467
    %v668 = vpack.c.b16 %v472, %v468
    %v669 = vpack.c.b16 %v477, %v473
    %v670 = vpack.c.b16 %v478, %v474
    %v671 = vpack.c.b16 %v479, %v475
    %v672 = vpack.c.b16 %v480, %v476
    %v673 = vpack.c.b16 %v485, %v481
    %v674 = vpack.c.b16 %v486, %v482
    %v675 = vpack.c.b16 %v487, %v483
    %v676 = vpack.c.b16 %v488, %v484
    %v677 = vpack.c.b16 %v493, %v489
    %v678 = vpack.c.b16 %v494, %v490
    %v679 = vpack.c.b16 %v495, %v491
    %v680 = vpack.c.b16 %v496, %v492
    %v681 = vpack.c.b16 %v501, %v497
    %v682 = vpack.c.b16 %v502, %v498
    %v683 = vpack.c.b16 %v503, %v499
    %v684 = vpack.c.b16 %v504, %v500
    %v685 = vpack.c.b16 %v509, %v505
    %v686 = vpack.c.b16 %v510, %v506
    %v687 = vpack.c.b16 %v511, %v507
    %v688 = vpack.c.b16 %v512, %v508
    %v689 = vpack.c.b16 %v517, %v513
    %v690 = vpack.c.b16 %v518, %v514
    %v691 = vpack.c.b16 %v519, %v515
    %v692 = vpack.c.b16 %v520, %v516
    %v693 = vpack.c.b16 %v525, %v521
    %v694 = vpack.c.b16 %v526, %v522
    %v695 = vpack.c.b16 %v527, %v523
    %v696 = vpack.c.b16 %v528, %v524
    %v697 = vpack.c.b16 %v533, %v529
    %v698 = vpack.c.b16 %v534, %v530
    %v699 = vpack.c.b16 %v535, %v531
    %v700 = vpack.c.b16 %v536, %v532
    %v701 = vpack.c.b16 %v541, %v537
    %v702 = vpack.c.b16 %v542, %v538
    %v703 = vpack.c.b16 %v543, %v539
    %v704 = vpack.c.b16 %v544, %v540
    %v705 = vpack.c.b16 %v549, %v545
    %v706 = vpack.c.b16 %v550, %v546
    %v707 = vpack.c.b16 %v551, %v547
    %v708 = vpack.c.b16 %v552, %v548
    %v709 = vpack.c.b16 %v557, %v553
    %v710 = vpack.c.b16 %v558, %v554
    %v711 = vpack.c.b16 %v559, %v555
    %v712 = vpack.c.b16 %v560, %v556
    %v713 = vpack.c.b16 %v565, %v561
    %v714 = vpack.c.b16 %v566, %v562
    %v715 = vpack.c.b16 %v567, %v563
    %v716 = vpack.c.b16 %v568, %v564
    %v717 = vpack.c.b16 %v573, %v569
    %v718 = vpack.c.b16 %v574, %v570
    %v719 = vpack.c.b16 %v575, %v571
    %v720 = vpack.c.b16 %v576, %v572
    %v721 = vpack.c.b16 %v581, %v577
    %v722 = vpack.c.b16 %v582, %v578
    %v723 = vpack.c.b16 %v583, %v579
    %v724 = vpack.c.b16 %v584, %v580
    %v725 = vpack.c.b16 %v589, %v585
    %v726 = vpack.c.b16 %v590, %v586
    %v727 = vpack.c.b16 %v591, %v587
    %v728 = vpack.c.b16 %v592, %v588
    %v729 = vpack.c.b16 %v597, %v593
    %v730 = vpack.c.b16 %v598, %v594
    %v731 = vpack.c.b16 %v599, %v595
    %v732 = vpack.c.b16 %v600, %v596
    %v733 = vpack.c.b16 %v605, %v601
    %v734 = vpack.c.b16 %v606, %v602
    %v735 = vpack.c.b16 %v607, %v603
    %v736 = vpack.c.b16 %v608, %v604
    %865 = vmatprep.subr.bf16.mxu0 %v610
    %866 = vmatpush1.bf16.msra.mxu0 %v609
    %867 = vmatprep.subr.bf16.mxu0 %v614
    %868 = vmatpush1.bf16.msra.mxu0 %v613
    %869 = vmatprep.subr.bf16.mxu0 %v618
    %870 = vmatpush1.bf16.msra.mxu0 %v617
    %871 = vmatprep.subr.bf16.mxu0 %v622
    %872 = vmatpush1.bf16.msra.mxu0 %v621
    %873 = vmatprep.subr.bf16.mxu0 %v626
    %874 = vmatpush1.bf16.msra.mxu0 %v625
    %875 = vmatprep.subr.bf16.mxu0 %v630
    %876 = vmatpush1.bf16.msra.mxu0 %v629
    %877 = vmatprep.subr.bf16.mxu0 %v634
    %878 = vmatpush1.bf16.msra.mxu0 %v633
    %879 = vmatprep.subr.bf16.mxu0 %v638
    %880 = vmatpush1.bf16.msra.mxu0 %v637
    %881 = vmatprep.subr.bf16.mxu0 %v642
    %882 = vmatpush1.bf16.msra.mxu0 %v641
    %883 = vmatprep.subr.bf16.mxu0 %v646
    %884 = vmatpush1.bf16.msra.mxu0 %v645
    %885 = vmatprep.subr.bf16.mxu0 %v650
    %886 = vmatpush1.bf16.msra.mxu0 %v649
    %887 = vmatprep.subr.bf16.mxu0 %v654
    %888 = vmatpush1.bf16.msra.mxu0 %v653
    %889 = vmatprep.subr.bf16.mxu0 %v658
    %890 = vmatpush1.bf16.msra.mxu0 %v657
    %891 = vmatprep.subr.bf16.mxu0 %v662
    %892 = vmatpush1.bf16.msra.mxu0 %v661
    %893 = vmatprep.subr.bf16.mxu0 %v666
    %894 = vmatpush1.bf16.msra.mxu0 %v665
    %895 = vmatprep.subr.bf16.mxu0 %v670
    %896 = vmatpush1.bf16.msra.mxu0 %v669
    %897 = vmatprep.mubr.bf16.mxu0 %v94
    %898 = vmatmul.mubr.bf16.gmra.mrb[0].mxu0 %v93
    %v899 = vpop.f32.mrb[0].mxu0
    %v900 = vadd.f32 0.0, %v899
    %v901 = vpop.f32.mrb[0].mxu0
    %v902 = vadd.f32 0.0, %v901
    %v903 = vpop.f32.mrb[0].mxu0
    %v904 = vpop.f32.mrb[0].mxu0
    %905 = vdwg.mxu0
    %906 = vmatprep.subr.bf16.mxu0 %v674
    %907 = vmatpush1.bf16.msra.mxu0 %v673
    %908 = vmatprep.subr.bf16.mxu0 %v678
    %909 = vmatpush1.bf16.msra.mxu0 %v677
    %910 = vmatprep.subr.bf16.mxu0 %v682
    %911 = vmatpush1.bf16.msra.mxu0 %v681
    %912 = vmatprep.subr.bf16.mxu0 %v686
    %913 = vmatpush1.bf16.msra.mxu0 %v685
    %914 = vmatprep.subr.bf16.mxu0 %v690
    %915 = vmatpush1.bf16.msra.mxu0 %v689
    %916 = vmatprep.subr.bf16.mxu0 %v694
    %917 = vmatpush1.bf16.msra.mxu0 %v693
    %918 = vmatprep.subr.bf16.mxu0 %v698
    %919 = vmatpush1.bf16.msra.mxu0 %v697
    %920 = vmatprep.subr.bf16.mxu0 %v702
    %921 = vmatpush1.bf16.msra.mxu0 %v701
    %922 = vmatprep.subr.bf16.mxu0 %v706
    %923 = vmatpush1.bf16.msra.mxu0 %v705
    %924 = vmatprep.subr.bf16.mxu0 %v710
    %925 = vmatpush1.bf16.msra.mxu0 %v709
    %926 = vmatprep.subr.bf16.mxu0 %v714
    %927 = vmatpush1.bf16.msra.mxu0 %v713
    %928 = vmatprep.subr.bf16.mxu0 %v718
    %929 = vmatpush1.bf16.msra.mxu0 %v717
    %930 = vmatprep.subr.bf16.mxu0 %v722
    %931 = vmatpush1.bf16.msra.mxu0 %v721
    %932 = vmatprep.subr.bf16.mxu0 %v726
    %933 = vmatpush1.bf16.msra.mxu0 %v725
    %934 = vmatprep.subr.bf16.mxu0 %v730
    %935 = vmatpush1.bf16.msra.mxu0 %v729
    %936 = vmatprep.subr.bf16.mxu0 %v734
    %937 = vmatpush1.bf16.msra.mxu0 %v733
    %938 = vmatprep.mubr.bf16.mxu0 %v96
    %939 = vmatmul.mubr.bf16.gmra.mrb[0].mxu0 %v95
    %v940 = vpop.f32.mrb[0].mxu0
    %v941 = vadd.f32 %v900, %v940
    %v942 = vpop.f32.mrb[0].mxu0
    %v943 = vadd.f32 %v902, %v942
    %v944 = vpop.f32.mrb[0].mxu0
    %v945 = vpop.f32.mrb[0].mxu0
    %946 = vdwg.mxu0
    %947 = vmatprep.subr.bf16.mxu0 %v612
    %948 = vmatpush1.bf16.msra.mxu0 %v611
    %949 = vmatprep.subr.bf16.mxu0 %v616
    %950 = vmatpush1.bf16.msra.mxu0 %v615
    %951 = vmatprep.subr.bf16.mxu0 %v620
    %952 = vmatpush1.bf16.msra.mxu0 %v619
    %953 = vmatprep.subr.bf16.mxu0 %v624
    %954 = vmatpush1.bf16.msra.mxu0 %v623
    %955 = vmatprep.subr.bf16.mxu0 %v628
    %956 = vmatpush1.bf16.msra.mxu0 %v627
    %957 = vmatprep.subr.bf16.mxu0 %v632
    %958 = vmatpush1.bf16.msra.mxu0 %v631
    %959 = vmatprep.subr.bf16.mxu0 %v636
    %960 = vmatpush1.bf16.msra.mxu0 %v635
    %961 = vmatprep.subr.bf16.mxu0 %v640
    %962 = vmatpush1.bf16.msra.mxu0 %v639
    %963 = vmatprep.subr.bf16.mxu0 %v644
    %964 = vmatpush1.bf16.msra.mxu0 %v643
    %965 = vmatprep.subr.bf16.mxu0 %v648
    %966 = vmatpush1.bf16.msra.mxu0 %v647
    %967 = vmatprep.subr.bf16.mxu0 %v652
    %968 = vmatpush1.bf16.msra.mxu0 %v651
    %969 = vmatprep.subr.bf16.mxu0 %v656
    %970 = vmatpush1.bf16.msra.mxu0 %v655
    %971 = vmatprep.subr.bf16.mxu0 %v660
    %972 = vmatpush1.bf16.msra.mxu0 %v659
    %973 = vmatprep.subr.bf16.mxu0 %v664
    %974 = vmatpush1.bf16.msra.mxu0 %v663
    %975 = vmatprep.subr.bf16.mxu0 %v668
    %976 = vmatpush1.bf16.msra.mxu0 %v667
    %977 = vmatprep.subr.bf16.mxu0 %v672
    %978 = vmatpush1.bf16.msra.mxu0 %v671
    %979 = vmatprep.mubr.bf16.mxu0 %v94
    %980 = vmatmul.mubr.bf16.gmra.mrb[0].mxu0 %v93
    %v981 = vpop.f32.mrb[0].mxu0
    %v982 = vadd.f32 0.0, %v981
    %v983 = vpop.f32.mrb[0].mxu0
    %v984 = vadd.f32 0.0, %v983
    %v985 = vpop.f32.mrb[0].mxu0
    %v986 = vpop.f32.mrb[0].mxu0
    %987 = vdwg.mxu0
    %988 = vmatprep.subr.bf16.mxu0 %v676
    %989 = vmatpush1.bf16.msra.mxu0 %v675
    %990 = vmatprep.subr.bf16.mxu0 %v680
    %991 = vmatpush1.bf16.msra.mxu0 %v679
    %992 = vmatprep.subr.bf16.mxu0 %v684
    %993 = vmatpush1.bf16.msra.mxu0 %v683
    %994 = vmatprep.subr.bf16.mxu0 %v688
    %995 = vmatpush1.bf16.msra.mxu0 %v687
    %996 = vmatprep.subr.bf16.mxu0 %v692
    %997 = vmatpush1.bf16.msra.mxu0 %v691
    %998 = vmatprep.subr.bf16.mxu0 %v696
    %999 = vmatpush1.bf16.msra.mxu0 %v695
    %1000 = vmatprep.subr.bf16.mxu0 %v700
    %1001 = vmatpush1.bf16.msra.mxu0 %v699
    %1002 = vmatprep.subr.bf16.mxu0 %v704
    %1003 = vmatpush1.bf16.msra.mxu0 %v703
    %1004 = vmatprep.subr.bf16.mxu0 %v708
    %1005 = vmatpush1.bf16.msra.mxu0 %v707
    %1006 = vmatprep.subr.bf16.mxu0 %v712
    %1007 = vmatpush1.bf16.msra.mxu0 %v711
    %1008 = vmatprep.subr.bf16.mxu0 %v716
    %1009 = vmatpush1.bf16.msra.mxu0 %v715
    %1010 = vmatprep.subr.bf16.mxu0 %v720
    %1011 = vmatpush1.bf16.msra.mxu0 %v719
    %1012 = vmatprep.subr.bf16.mxu0 %v724
    %1013 = vmatpush1.bf16.msra.mxu0 %v723
    %1014 = vmatprep.subr.bf16.mxu0 %v728
    %1015 = vmatpush1.bf16.msra.mxu0 %v727
    %1016 = vmatprep.subr.bf16.mxu0 %v732
    %1017 = vmatpush1.bf16.msra.mxu0 %v731
    %1018 = vmatprep.subr.bf16.mxu0 %v736
    %1019 = vmatpush1.bf16.msra.mxu0 %v735
    %1020 = vmatprep.mubr.bf16.mxu0 %v96
    %1021 = vmatmul.mubr.bf16.gmra.mrb[0].mxu0 %v95
    %v1022 = vpop.f32.mrb[0].mxu0
    %v1023 = vadd.f32 %v982, %v1022
    %v1024 = vpop.f32.mrb[0].mxu0
    %v1025 = vadd.f32 %v984, %v1024
    %v1026 = vpop.f32.mrb[0].mxu0
    %v1027 = vpop.f32.mrb[0].mxu0
    %1028 = vdwg.mxu0
    %v1029 = vrot.slane %v941, 4
    %v1030 = vadd.f32 %v941, %v1029
    %v1031 = vrot.slane %v1030, 2
    %v1032 = vadd.f32 %v1030, %v1031
    %v1033 = vrot.slane %v1032, 1
    %v1034 = vadd.f32 %v1032, %v1033
    %v1035 = vrot.slane %v943, 4
    %v1036 = vadd.f32 %v943, %v1035
    %v1037 = vrot.slane %v1036, 2
    %v1038 = vadd.f32 %v1036, %v1037
    %v1039 = vrot.slane %v1038, 1
    %v1040 = vadd.f32 %v1038, %v1039
    %v1041 = vrot.slane %v1023, 4
    %v1042 = vadd.f32 %v1023, %v1041
    %v1043 = vrot.slane %v1042, 2
    %v1044 = vadd.f32 %v1042, %v1043
    %v1045 = vrot.slane %v1044, 1
    %v1046 = vadd.f32 %v1044, %v1045
    %v1047 = vrot.slane %v1025, 4
    %v1048 = vadd.f32 %v1025, %v1047
    %v1049 = vrot.slane %v1048, 2
    %v1050 = vadd.f32 %v1048, %v1049
    %v1051 = vrot.slane %v1050, 1
    %v1052 = vadd.f32 %v1050, %v1051
    %v1053 = vmul.f32 %v941, %v941
    %v1054 = vmul.f32 %v943, %v943
    %v1055 = vmul.f32 %v1023, %v1023
    %v1056 = vmul.f32 %v1025, %v1025
    %v1057 = vrot.slane %v1053, 4
    %v1058 = vadd.f32 %v1053, %v1057
    %v1059 = vrot.slane %v1058, 2
    %v1060 = vadd.f32 %v1058, %v1059
    %v1061 = vrot.slane %v1060, 1
    %v1062 = vadd.f32 %v1060, %v1061
    %v1063 = vrot.slane %v1054, 4
    %v1064 = vadd.f32 %v1054, %v1063
    %v1065 = vrot.slane %v1064, 2
    %v1066 = vadd.f32 %v1064, %v1065
    %v1067 = vrot.slane %v1066, 1
    %v1068 = vadd.f32 %v1066, %v1067
    %v1069 = vrot.slane %v1055, 4
    %v1070 = vadd.f32 %v1055, %v1069
    %v1071 = vrot.slane %v1070, 2
    %v1072 = vadd.f32 %v1070, %v1071
    %v1073 = vrot.slane %v1072, 1
    %v1074 = vadd.f32 %v1072, %v1073
    %v1075 = vrot.slane %v1056, 4
    %v1076 = vadd.f32 %v1056, %v1075
    %v1077 = vrot.slane %v1076, 2
    %v1078 = vadd.f32 %v1076, %v1077
    %v1079 = vrot.slane %v1078, 1
    %v1080 = vadd.f32 %v1078, %v1079
    %v1081 = vmul.f32 %v1034, 0.125
    %v1082 = vmul.f32 %v1040, 0.125
    %v1083 = vmul.f32 %v1046, 0.125
    %v1084 = vmul.f32 %v1052, 0.125
    %v1085 = vmul.f32 %v1062, 0.125
    %v1086 = vmul.f32 %v1068, 0.125
    %v1087 = vmul.f32 %v1074, 0.125
    %v1088 = vmul.f32 %v1080, 0.125
    %v1089 = vmul.f32 %v1081, %v1081
    %v1090 = vmul.f32 %v1082, %v1082
    %v1091 = vmul.f32 %v1083, %v1083
    %v1092 = vmul.f32 %v1084, %v1084
    %v1093 = vsub.f32 %v1085, %v1089
    %v1094 = vsub.f32 %v1086, %v1090
    %v1095 = vsub.f32 %v1087, %v1091
    %v1096 = vsub.f32 %v1088, %v1092
    %v1097 = vmax.f32 %v1093, 0.0
    %v1098 = vmax.f32 %v1094, 0.0
    %v1099 = vmax.f32 %v1095, 0.0
    %v1100 = vmax.f32 %v1096, 0.0
    %v1101 = vld [vmem:[#allocation7] sm:$0xf]
    %v1102 = vadd.f32 %v1097, 1e-05
    %v1103 = vadd.f32 %v1098, 1e-05
    %v1104 = vadd.f32 %v1099, 1e-05
    %v1105 = vadd.f32 %v1100, 1e-05
    %v1106 = vrsqrt.pop %v1102
    %v1107 = vrsqrt.pop %v1103
    %v1108 = vrsqrt.pop %v1104
    %v1109 = vrsqrt.pop %v1105
    %v1114 = vcombine.low %v1106, %v1107
    %v1115 = vcombine.low %v1108, %v1109
    %v1117 = vunpack.c.l.s4 1966171168
    %v1118 = vunpack.c.0.s8 %v1117
    %v1119 = vlaneseq
    %v1120 = vshrl.u32 %v1119, 7
    %v1121 = vsub.s32 %v1118, %v1120
    %v1122 = vrot.slane %v1114, %v1121
    %v1124 = vunpack.c.l.s4 1966171168
    %v1125 = vunpack.c.0.s8 %v1124
    %v1126 = vlaneseq
    %v1127 = vshrl.u32 %v1126, 7
    %v1128 = vsub.s32 %v1125, %v1127
    %v1129 = vrot.slane %v1115, %v1128
    %v1130 = vcombine.low %v1122, %v1129
    %v1132 = vunpack.c.l.s4 1966171168
    %v1133 = vunpack.c.0.s8 %v1132
    %v1134 = vlaneseq
    %v1135 = vshrl.u32 %v1134, 7
    %v1136 = vsub.s32 %v1133, %v1135
    %v1137 = vrot.slane %v1130, %v1136
    %v1139 = vmul.f32 %v1101, %v1137
    %v1140 = vld [vmem:[#allocation8] sm:$0xf]
    %v1142 = vlaneseq
    %v1143 = vshrl.u32 %v1142, 7
    %v1144 = vsub.s32 0, %v1143
    %v1145 = vrot.slane %v1139, %v1144
    %v1146 = vlaneseq
    %v1147 = vshrl.u32 %v1146, 7
    %v1148 = vsub.s32 1, %v1147
    %v1149 = vrot.slane %v1139, %v1148
    %v1150 = vlaneseq
    %v1151 = vshrl.u32 %v1150, 7
    %v1152 = vsub.s32 2, %v1151
    %v1153 = vrot.slane %v1139, %v1152
    %v1154 = vlaneseq
    %v1155 = vshrl.u32 %v1154, 7
    %v1156 = vsub.s32 3, %v1155
    %v1157 = vrot.slane %v1139, %v1156
    %v1162 = vmul.f32 %v1081, %v1145
    %v1163 = vmul.f32 %v1082, %v1149
    %v1164 = vmul.f32 %v1083, %v1153
    %v1165 = vmul.f32 %v1084, %v1157
    %v1170 = vcombine.low %v1162, %v1163
    %v1171 = vcombine.low %v1164, %v1165
    %v1173 = vunpack.c.l.s4 1966171168
    %v1174 = vunpack.c.0.s8 %v1173
    %v1175 = vlaneseq
    %v1176 = vshrl.u32 %v1175, 7
    %v1177 = vsub.s32 %v1174, %v1176
    %v1178 = vrot.slane %v1170, %v1177
    %v1180 = vunpack.c.l.s4 1966171168
    %v1181 = vunpack.c.0.s8 %v1180
    %v1182 = vlaneseq
    %v1183 = vshrl.u32 %v1182, 7
    %v1184 = vsub.s32 %v1181, %v1183
    %v1185 = vrot.slane %v1171, %v1184
    %v1186 = vcombine.low %v1178, %v1185
    %v1188 = vunpack.c.l.s4 1966171168
    %v1189 = vunpack.c.0.s8 %v1188
    %v1190 = vlaneseq
    %v1191 = vshrl.u32 %v1190, 7
    %v1192 = vsub.s32 %v1189, %v1191
    %v1193 = vrot.slane %v1186, %v1192
    %v1195 = vsub.f32 %v1140, %v1193
    %v1196 = vmul.f32 %v941, %v1145
    %v1197 = vmul.f32 %v943, %v1149
    %v1198 = vmul.f32 %v1023, %v1153
    %v1199 = vmul.f32 %v1025, %v1157
    %v1201 = vlaneseq
    %v1202 = vshrl.u32 %v1201, 7
    %v1203 = vsub.s32 0, %v1202
    %v1204 = vrot.slane %v1195, %v1203
    %v1205 = vlaneseq
    %v1206 = vshrl.u32 %v1205, 7
    %v1207 = vsub.s32 1, %v1206
    %v1208 = vrot.slane %v1195, %v1207
    %v1209 = vlaneseq
    %v1210 = vshrl.u32 %v1209, 7
    %v1211 = vsub.s32 2, %v1210
    %v1212 = vrot.slane %v1195, %v1211
    %v1213 = vlaneseq
    %v1214 = vshrl.u32 %v1213, 7
    %v1215 = vsub.s32 3, %v1214
    %v1216 = vrot.slane %v1195, %v1215
    %v1221 = vadd.f32 %v1196, %v1204
    %v1222 = vadd.f32 %v1197, %v1208
    %v1223 = vadd.f32 %v1198, %v1212
    %v1224 = vadd.f32 %v1199, %v1216
    %v1225 = vmax.f32 %v1221, 0.0
    %v1226 = vmax.f32 %v1222, 0.0
    %v1227 = vmax.f32 %v1223, 0.0
    %v1228 = vmax.f32 %v1224, 0.0
    %v1229 = vpack.c.bf16 %v1225, %v1225
    %v1230 = vpack.c.bf16 %v1226, %v1226
    %v1231 = vpack.c.bf16 %v1227, %v1227
    %v1232 = vpack.c.bf16 %v1228, %v1228
    %s1233 = scalar_lea.vmem [#allocation5], 1024
    %v1234 = vld [vmem:[%s1233] sm:$0xff]
    %v1235 = vld [vmem:[%s1233 + $0x8] sm:$0xff]
    %v1236 = vld [vmem:[%s1233 + $0x10] sm:$0xff]
    %v1237 = vld [vmem:[%s1233 + $0x18] sm:$0xff]
    %v1238 = vld [vmem:[%s1233 + $0x20] sm:$0xff]
    %v1239 = vld [vmem:[%s1233 + $0x28] sm:$0xff]
    %v1240 = vld [vmem:[%s1233 + $0x30] sm:$0xff]
    %v1241 = vld [vmem:[%s1233 + $0x38] sm:$0xff]
    %v1242 = vld [vmem:[%s1233 + $0x40] sm:$0xff]
    %v1243 = vld [vmem:[%s1233 + $0x48] sm:$0xff]
    %v1244 = vld [vmem:[%s1233 + $0x50] sm:$0xff]
    %v1245 = vld [vmem:[%s1233 + $0x58] sm:$0xff]
    %v1246 = vld [vmem:[%s1233 + $0x60] sm:$0xff]
    %v1247 = vld [vmem:[%s1233 + $0x68] sm:$0xff]
    %v1248 = vld [vmem:[%s1233 + $0x70] sm:$0xff]
    %v1249 = vld [vmem:[%s1233 + $0x78] sm:$0xff]
    %v1250 = vld [vmem:[%s1233 + $0x80] sm:$0xff]
    %v1251 = vld [vmem:[%s1233 + $0x88] sm:$0xff]
    %v1252 = vld [vmem:[%s1233 + $0x90] sm:$0xff]
    %v1253 = vld [vmem:[%s1233 + $0x98] sm:$0xff]
    %v1254 = vld [vmem:[%s1233 + $0xa0] sm:$0xff]
    %v1255 = vld [vmem:[%s1233 + $0xa8] sm:$0xff]
    %v1256 = vld [vmem:[%s1233 + $0xb0] sm:$0xff]
    %v1257 = vld [vmem:[%s1233 + $0xb8] sm:$0xff]
    %v1258 = vld [vmem:[%s1233 + $0xc0] sm:$0xff]
    %v1259 = vld [vmem:[%s1233 + $0xc8] sm:$0xff]
    %v1260 = vld [vmem:[%s1233 + $0xd0] sm:$0xff]
    %v1261 = vld [vmem:[%s1233 + $0xd8] sm:$0xff]
    %v1262 = vld [vmem:[%s1233 + $0xe0] sm:$0xff]
    %v1263 = vld [vmem:[%s1233 + $0xe8] sm:$0xff]
    %v1264 = vld [vmem:[%s1233 + $0xf0] sm:$0xff]
    %v1265 = vld [vmem:[%s1233 + $0xf8] sm:$0xff]
    %v1266 = vld [vmem:[%s1233 + $0x100] sm:$0xff]
    %v1267 = vld [vmem:[%s1233 + $0x108] sm:$0xff]
    %v1268 = vld [vmem:[%s1233 + $0x110] sm:$0xff]
    %v1269 = vld [vmem:[%s1233 + $0x118] sm:$0xff]
    %v1270 = vld [vmem:[%s1233 + $0x120] sm:$0xff]
    %v1271 = vld [vmem:[%s1233 + $0x128] sm:$0xff]
    %v1272 = vld [vmem:[%s1233 + $0x130] sm:$0xff]
    %v1273 = vld [vmem:[%s1233 + $0x138] sm:$0xff]
    %v1274 = vld [vmem:[%s1233 + $0x140] sm:$0xff]
    %v1275 = vld [vmem:[%s1233 + $0x148] sm:$0xff]
    %v1276 = vld [vmem:[%s1233 + $0x150] sm:$0xff]
    %v1277 = vld [vmem:[%s1233 + $0x158] sm:$0xff]
    %v1278 = vld [vmem:[%s1233 + $0x160] sm:$0xff]
    %v1279 = vld [vmem:[%s1233 + $0x168] sm:$0xff]
    %v1280 = vld [vmem:[%s1233 + $0x170] sm:$0xff]
    %v1281 = vld [vmem:[%s1233 + $0x178] sm:$0xff]
    %v1282 = vld [vmem:[%s1233 + $0x180] sm:$0xff]
    %v1283 = vld [vmem:[%s1233 + $0x188] sm:$0xff]
    %v1284 = vld [vmem:[%s1233 + $0x190] sm:$0xff]
    %v1285 = vld [vmem:[%s1233 + $0x198] sm:$0xff]
    %v1286 = vld [vmem:[%s1233 + $0x1a0] sm:$0xff]
    %v1287 = vld [vmem:[%s1233 + $0x1a8] sm:$0xff]
    %v1288 = vld [vmem:[%s1233 + $0x1b0] sm:$0xff]
    %v1289 = vld [vmem:[%s1233 + $0x1b8] sm:$0xff]
    %v1290 = vld [vmem:[%s1233 + $0x1c0] sm:$0xff]
    %v1291 = vld [vmem:[%s1233 + $0x1c8] sm:$0xff]
    %v1292 = vld [vmem:[%s1233 + $0x1d0] sm:$0xff]
    %v1293 = vld [vmem:[%s1233 + $0x1d8] sm:$0xff]
    %v1294 = vld [vmem:[%s1233 + $0x1e0] sm:$0xff]
    %v1295 = vld [vmem:[%s1233 + $0x1e8] sm:$0xff]
    %v1296 = vld [vmem:[%s1233 + $0x1f0] sm:$0xff]
    %v1297 = vld [vmem:[%s1233 + $0x1f8] sm:$0xff]
    %v1298 = vld [vmem:[%s1233 + $0x200] sm:$0xff]
    %v1299 = vld [vmem:[%s1233 + $0x208] sm:$0xff]
    %v1300 = vld [vmem:[%s1233 + $0x210] sm:$0xff]
    %v1301 = vld [vmem:[%s1233 + $0x218] sm:$0xff]
    %v1302 = vld [vmem:[%s1233 + $0x220] sm:$0xff]
    %v1303 = vld [vmem:[%s1233 + $0x228] sm:$0xff]
    %v1304 = vld [vmem:[%s1233 + $0x230] sm:$0xff]
    %v1305 = vld [vmem:[%s1233 + $0x238] sm:$0xff]
    %v1306 = vld [vmem:[%s1233 + $0x240] sm:$0xff]
    %v1307 = vld [vmem:[%s1233 + $0x248] sm:$0xff]
    %v1308 = vld [vmem:[%s1233 + $0x250] sm:$0xff]
    %v1309 = vld [vmem:[%s1233 + $0x258] sm:$0xff]
    %v1310 = vld [vmem:[%s1233 + $0x260] sm:$0xff]
    %v1311 = vld [vmem:[%s1233 + $0x268] sm:$0xff]
    %v1312 = vld [vmem:[%s1233 + $0x270] sm:$0xff]
    %v1313 = vld [vmem:[%s1233 + $0x278] sm:$0xff]
    %v1314 = vld [vmem:[%s1233 + $0x280] sm:$0xff]
    %v1315 = vld [vmem:[%s1233 + $0x288] sm:$0xff]
    %v1316 = vld [vmem:[%s1233 + $0x290] sm:$0xff]
    %v1317 = vld [vmem:[%s1233 + $0x298] sm:$0xff]
    %v1318 = vld [vmem:[%s1233 + $0x2a0] sm:$0xff]
    %v1319 = vld [vmem:[%s1233 + $0x2a8] sm:$0xff]
    %v1320 = vld [vmem:[%s1233 + $0x2b0] sm:$0xff]
    %v1321 = vld [vmem:[%s1233 + $0x2b8] sm:$0xff]
    %v1322 = vld [vmem:[%s1233 + $0x2c0] sm:$0xff]
    %v1323 = vld [vmem:[%s1233 + $0x2c8] sm:$0xff]
    %v1324 = vld [vmem:[%s1233 + $0x2d0] sm:$0xff]
    %v1325 = vld [vmem:[%s1233 + $0x2d8] sm:$0xff]
    %v1326 = vld [vmem:[%s1233 + $0x2e0] sm:$0xff]
    %v1327 = vld [vmem:[%s1233 + $0x2e8] sm:$0xff]
    %v1328 = vld [vmem:[%s1233 + $0x2f0] sm:$0xff]
    %v1329 = vld [vmem:[%s1233 + $0x2f8] sm:$0xff]
    %v1330 = vld [vmem:[%s1233 + $0x300] sm:$0xff]
    %v1331 = vld [vmem:[%s1233 + $0x308] sm:$0xff]
    %v1332 = vld [vmem:[%s1233 + $0x310] sm:$0xff]
    %v1333 = vld [vmem:[%s1233 + $0x318] sm:$0xff]
    %v1334 = vld [vmem:[%s1233 + $0x320] sm:$0xff]
    %v1335 = vld [vmem:[%s1233 + $0x328] sm:$0xff]
    %v1336 = vld [vmem:[%s1233 + $0x330] sm:$0xff]
    %v1337 = vld [vmem:[%s1233 + $0x338] sm:$0xff]
    %v1338 = vld [vmem:[%s1233 + $0x340] sm:$0xff]
    %v1339 = vld [vmem:[%s1233 + $0x348] sm:$0xff]
    %v1340 = vld [vmem:[%s1233 + $0x350] sm:$0xff]
    %v1341 = vld [vmem:[%s1233 + $0x358] sm:$0xff]
    %v1342 = vld [vmem:[%s1233 + $0x360] sm:$0xff]
    %v1343 = vld [vmem:[%s1233 + $0x368] sm:$0xff]
    %v1344 = vld [vmem:[%s1233 + $0x370] sm:$0xff]
    %v1345 = vld [vmem:[%s1233 + $0x378] sm:$0xff]
    %v1346 = vld [vmem:[%s1233 + $0x380] sm:$0xff]
    %v1347 = vld [vmem:[%s1233 + $0x388] sm:$0xff]
    %v1348 = vld [vmem:[%s1233 + $0x390] sm:$0xff]
    %v1349 = vld [vmem:[%s1233 + $0x398] sm:$0xff]
    %v1350 = vld [vmem:[%s1233 + $0x3a0] sm:$0xff]
    %v1351 = vld [vmem:[%s1233 + $0x3a8] sm:$0xff]
    %v1352 = vld [vmem:[%s1233 + $0x3b0] sm:$0xff]
    %v1353 = vld [vmem:[%s1233 + $0x3b8] sm:$0xff]
    %v1354 = vld [vmem:[%s1233 + $0x3c0] sm:$0xff]
    %v1355 = vld [vmem:[%s1233 + $0x3c8] sm:$0xff]
    %v1356 = vld [vmem:[%s1233 + $0x3d0] sm:$0xff]
    %v1357 = vld [vmem:[%s1233 + $0x3d8] sm:$0xff]
    %v1358 = vld [vmem:[%s1233 + $0x3e0] sm:$0xff]
    %v1359 = vld [vmem:[%s1233 + $0x3e8] sm:$0xff]
    %v1360 = vld [vmem:[%s1233 + $0x3f0] sm:$0xff]
    %v1361 = vld [vmem:[%s1233 + $0x3f8] sm:$0xff]
    %v1490 = vunpack.c.l.b16 %v1234
    %v1491 = vunpack.c.h.b16 %v1234
    %v1492 = vunpack.c.l.b16 %v1235
    %v1493 = vunpack.c.h.b16 %v1235
    %v1494 = vunpack.c.l.b16 %v1236
    %v1495 = vunpack.c.h.b16 %v1236
    %v1496 = vunpack.c.l.b16 %v1237
    %v1497 = vunpack.c.h.b16 %v1237
    %v1498 = vunpack.c.l.b16 %v1238
    %v1499 = vunpack.c.h.b16 %v1238
    %v1500 = vunpack.c.l.b16 %v1239
    %v1501 = vunpack.c.h.b16 %v1239
    %v1502 = vunpack.c.l.b16 %v1240
    %v1503 = vunpack.c.h.b16 %v1240
    %v1504 = vunpack.c.l.b16 %v1241
    %v1505 = vunpack.c.h.b16 %v1241
    %v1506 = vunpack.c.l.b16 %v1242
    %v1507 = vunpack.c.h.b16 %v1242
    %v1508 = vunpack.c.l.b16 %v1243
    %v1509 = vunpack.c.h.b16 %v1243
    %v1510 = vunpack.c.l.b16 %v1244
    %v1511 = vunpack.c.h.b16 %v1244
    %v1512 = vunpack.c.l.b16 %v1245
    %v1513 = vunpack.c.h.b16 %v1245
    %v1514 = vunpack.c.l.b16 %v1246
    %v1515 = vunpack.c.h.b16 %v1246
    %v1516 = vunpack.c.l.b16 %v1247
    %v1517 = vunpack.c.h.b16 %v1247
    %v1518 = vunpack.c.l.b16 %v1248
    %v1519 = vunpack.c.h.b16 %v1248
    %v1520 = vunpack.c.l.b16 %v1249
    %v1521 = vunpack.c.h.b16 %v1249
    %v1522 = vunpack.c.l.b16 %v1250
    %v1523 = vunpack.c.h.b16 %v1250
    %v1524 = vunpack.c.l.b16 %v1251
    %v1525 = vunpack.c.h.b16 %v1251
    %v1526 = vunpack.c.l.b16 %v1252
    %v1527 = vunpack.c.h.b16 %v1252
    %v1528 = vunpack.c.l.b16 %v1253
    %v1529 = vunpack.c.h.b16 %v1253
    %v1530 = vunpack.c.l.b16 %v1254
    %v1531 = vunpack.c.h.b16 %v1254
    %v1532 = vunpack.c.l.b16 %v1255
    %v1533 = vunpack.c.h.b16 %v1255
    %v1534 = vunpack.c.l.b16 %v1256
    %v1535 = vunpack.c.h.b16 %v1256
    %v1536 = vunpack.c.l.b16 %v1257
    %v1537 = vunpack.c.h.b16 %v1257
    %v1538 = vunpack.c.l.b16 %v1258
    %v1539 = vunpack.c.h.b16 %v1258
    %v1540 = vunpack.c.l.b16 %v1259
    %v1541 = vunpack.c.h.b16 %v1259
    %v1542 = vunpack.c.l.b16 %v1260
    %v1543 = vunpack.c.h.b16 %v1260
    %v1544 = vunpack.c.l.b16 %v1261
    %v1545 = vunpack.c.h.b16 %v1261
    %v1546 = vunpack.c.l.b16 %v1262
    %v1547 = vunpack.c.h.b16 %v1262
    %v1548 = vunpack.c.l.b16 %v1263
    %v1549 = vunpack.c.h.b16 %v1263
    %v1550 = vunpack.c.l.b16 %v1264
    %v1551 = vunpack.c.h.b16 %v1264
    %v1552 = vunpack.c.l.b16 %v1265
    %v1553 = vunpack.c.h.b16 %v1265
    %v1554 = vunpack.c.l.b16 %v1266
    %v1555 = vunpack.c.h.b16 %v1266
    %v1556 = vunpack.c.l.b16 %v1267
    %v1557 = vunpack.c.h.b16 %v1267
    %v1558 = vunpack.c.l.b16 %v1268
    %v1559 = vunpack.c.h.b16 %v1268
    %v1560 = vunpack.c.l.b16 %v1269
    %v1561 = vunpack.c.h.b16 %v1269
    %v1562 = vunpack.c.l.b16 %v1270
    %v1563 = vunpack.c.h.b16 %v1270
    %v1564 = vunpack.c.l.b16 %v1271
    %v1565 = vunpack.c.h.b16 %v1271
    %v1566 = vunpack.c.l.b16 %v1272
    %v1567 = vunpack.c.h.b16 %v1272
    %v1568 = vunpack.c.l.b16 %v1273
    %v1569 = vunpack.c.h.b16 %v1273
    %v1570 = vunpack.c.l.b16 %v1274
    %v1571 = vunpack.c.h.b16 %v1274
    %v1572 = vunpack.c.l.b16 %v1275
    %v1573 = vunpack.c.h.b16 %v1275
    %v1574 = vunpack.c.l.b16 %v1276
    %v1575 = vunpack.c.h.b16 %v1276
    %v1576 = vunpack.c.l.b16 %v1277
    %v1577 = vunpack.c.h.b16 %v1277
    %v1578 = vunpack.c.l.b16 %v1278
    %v1579 = vunpack.c.h.b16 %v1278
    %v1580 = vunpack.c.l.b16 %v1279
    %v1581 = vunpack.c.h.b16 %v1279
    %v1582 = vunpack.c.l.b16 %v1280
    %v1583 = vunpack.c.h.b16 %v1280
    %v1584 = vunpack.c.l.b16 %v1281
    %v1585 = vunpack.c.h.b16 %v1281
    %v1586 = vunpack.c.l.b16 %v1282
    %v1587 = vunpack.c.h.b16 %v1282
    %v1588 = vunpack.c.l.b16 %v1283
    %v1589 = vunpack.c.h.b16 %v1283
    %v1590 = vunpack.c.l.b16 %v1284
    %v1591 = vunpack.c.h.b16 %v1284
    %v1592 = vunpack.c.l.b16 %v1285
    %v1593 = vunpack.c.h.b16 %v1285
    %v1594 = vunpack.c.l.b16 %v1286
    %v1595 = vunpack.c.h.b16 %v1286
    %v1596 = vunpack.c.l.b16 %v1287
    %v1597 = vunpack.c.h.b16 %v1287
    %v1598 = vunpack.c.l.b16 %v1288
    %v1599 = vunpack.c.h.b16 %v1288
    %v1600 = vunpack.c.l.b16 %v1289
    %v1601 = vunpack.c.h.b16 %v1289
    %v1602 = vunpack.c.l.b16 %v1290
    %v1603 = vunpack.c.h.b16 %v1290
    %v1604 = vunpack.c.l.b16 %v1291
    %v1605 = vunpack.c.h.b16 %v1291
    %v1606 = vunpack.c.l.b16 %v1292
    %v1607 = vunpack.c.h.b16 %v1292
    %v1608 = vunpack.c.l.b16 %v1293
    %v1609 = vunpack.c.h.b16 %v1293
    %v1610 = vunpack.c.l.b16 %v1294
    %v1611 = vunpack.c.h.b16 %v1294
    %v1612 = vunpack.c.l.b16 %v1295
    %v1613 = vunpack.c.h.b16 %v1295
    %v1614 = vunpack.c.l.b16 %v1296
    %v1615 = vunpack.c.h.b16 %v1296
    %v1616 = vunpack.c.l.b16 %v1297
    %v1617 = vunpack.c.h.b16 %v1297
    %v1618 = vunpack.c.l.b16 %v1298
    %v1619 = vunpack.c.h.b16 %v1298
    %v1620 = vunpack.c.l.b16 %v1299
    %v1621 = vunpack.c.h.b16 %v1299
    %v1622 = vunpack.c.l.b16 %v1300
    %v1623 = vunpack.c.h.b16 %v1300
    %v1624 = vunpack.c.l.b16 %v1301
    %v1625 = vunpack.c.h.b16 %v1301
    %v1626 = vunpack.c.l.b16 %v1302
    %v1627 = vunpack.c.h.b16 %v1302
    %v1628 = vunpack.c.l.b16 %v1303
    %v1629 = vunpack.c.h.b16 %v1303
    %v1630 = vunpack.c.l.b16 %v1304
    %v1631 = vunpack.c.h.b16 %v1304
    %v1632 = vunpack.c.l.b16 %v1305
    %v1633 = vunpack.c.h.b16 %v1305
    %v1634 = vunpack.c.l.b16 %v1306
    %v1635 = vunpack.c.h.b16 %v1306
    %v1636 = vunpack.c.l.b16 %v1307
    %v1637 = vunpack.c.h.b16 %v1307
    %v1638 = vunpack.c.l.b16 %v1308
    %v1639 = vunpack.c.h.b16 %v1308
    %v1640 = vunpack.c.l.b16 %v1309
    %v1641 = vunpack.c.h.b16 %v1309
    %v1642 = vunpack.c.l.b16 %v1310
    %v1643 = vunpack.c.h.b16 %v1310
    %v1644 = vunpack.c.l.b16 %v1311
    %v1645 = vunpack.c.h.b16 %v1311
    %v1646 = vunpack.c.l.b16 %v1312
    %v1647 = vunpack.c.h.b16 %v1312
    %v1648 = vunpack.c.l.b16 %v1313
    %v1649 = vunpack.c.h.b16 %v1313
    %v1650 = vunpack.c.l.b16 %v1314
    %v1651 = vunpack.c.h.b16 %v1314
    %v1652 = vunpack.c.l.b16 %v1315
    %v1653 = vunpack.c.h.b16 %v1315
    %v1654 = vunpack.c.l.b16 %v1316
    %v1655 = vunpack.c.h.b16 %v1316
    %v1656 = vunpack.c.l.b16 %v1317
    %v1657 = vunpack.c.h.b16 %v1317
    %v1658 = vunpack.c.l.b16 %v1318
    %v1659 = vunpack.c.h.b16 %v1318
    %v1660 = vunpack.c.l.b16 %v1319
    %v1661 = vunpack.c.h.b16 %v1319
    %v1662 = vunpack.c.l.b16 %v1320
    %v1663 = vunpack.c.h.b16 %v1320
    %v1664 = vunpack.c.l.b16 %v1321
    %v1665 = vunpack.c.h.b16 %v1321
    %v1666 = vunpack.c.l.b16 %v1322
    %v1667 = vunpack.c.h.b16 %v1322
    %v1668 = vunpack.c.l.b16 %v1323
    %v1669 = vunpack.c.h.b16 %v1323
    %v1670 = vunpack.c.l.b16 %v1324
    %v1671 = vunpack.c.h.b16 %v1324
    %v1672 = vunpack.c.l.b16 %v1325
    %v1673 = vunpack.c.h.b16 %v1325
    %v1674 = vunpack.c.l.b16 %v1326
    %v1675 = vunpack.c.h.b16 %v1326
    %v1676 = vunpack.c.l.b16 %v1327
    %v1677 = vunpack.c.h.b16 %v1327
    %v1678 = vunpack.c.l.b16 %v1328
    %v1679 = vunpack.c.h.b16 %v1328
    %v1680 = vunpack.c.l.b16 %v1329
    %v1681 = vunpack.c.h.b16 %v1329
    %v1682 = vunpack.c.l.b16 %v1330
    %v1683 = vunpack.c.h.b16 %v1330
    %v1684 = vunpack.c.l.b16 %v1331
    %v1685 = vunpack.c.h.b16 %v1331
    %v1686 = vunpack.c.l.b16 %v1332
    %v1687 = vunpack.c.h.b16 %v1332
    %v1688 = vunpack.c.l.b16 %v1333
    %v1689 = vunpack.c.h.b16 %v1333
    %v1690 = vunpack.c.l.b16 %v1334
    %v1691 = vunpack.c.h.b16 %v1334
    %v1692 = vunpack.c.l.b16 %v1335
    %v1693 = vunpack.c.h.b16 %v1335
    %v1694 = vunpack.c.l.b16 %v1336
    %v1695 = vunpack.c.h.b16 %v1336
    %v1696 = vunpack.c.l.b16 %v1337
    %v1697 = vunpack.c.h.b16 %v1337
    %v1698 = vunpack.c.l.b16 %v1338
    %v1699 = vunpack.c.h.b16 %v1338
    %v1700 = vunpack.c.l.b16 %v1339
    %v1701 = vunpack.c.h.b16 %v1339
    %v1702 = vunpack.c.l.b16 %v1340
    %v1703 = vunpack.c.h.b16 %v1340
    %v1704 = vunpack.c.l.b16 %v1341
    %v1705 = vunpack.c.h.b16 %v1341
    %v1706 = vunpack.c.l.b16 %v1342
    %v1707 = vunpack.c.h.b16 %v1342
    %v1708 = vunpack.c.l.b16 %v1343
    %v1709 = vunpack.c.h.b16 %v1343
    %v1710 = vunpack.c.l.b16 %v1344
    %v1711 = vunpack.c.h.b16 %v1344
    %v1712 = vunpack.c.l.b16 %v1345
    %v1713 = vunpack.c.h.b16 %v1345
    %v1714 = vunpack.c.l.b16 %v1346
    %v1715 = vunpack.c.h.b16 %v1346
    %v1716 = vunpack.c.l.b16 %v1347
    %v1717 = vunpack.c.h.b16 %v1347
    %v1718 = vunpack.c.l.b16 %v1348
    %v1719 = vunpack.c.h.b16 %v1348
    %v1720 = vunpack.c.l.b16 %v1349
    %v1721 = vunpack.c.h.b16 %v1349
    %v1722 = vunpack.c.l.b16 %v1350
    %v1723 = vunpack.c.h.b16 %v1350
    %v1724 = vunpack.c.l.b16 %v1351
    %v1725 = vunpack.c.h.b16 %v1351
    %v1726 = vunpack.c.l.b16 %v1352
    %v1727 = vunpack.c.h.b16 %v1352
    %v1728 = vunpack.c.l.b16 %v1353
    %v1729 = vunpack.c.h.b16 %v1353
    %v1730 = vunpack.c.l.b16 %v1354
    %v1731 = vunpack.c.h.b16 %v1354
    %v1732 = vunpack.c.l.b16 %v1355
    %v1733 = vunpack.c.h.b16 %v1355
    %v1734 = vunpack.c.l.b16 %v1356
    %v1735 = vunpack.c.h.b16 %v1356
    %v1736 = vunpack.c.l.b16 %v1357
    %v1737 = vunpack.c.h.b16 %v1357
    %v1738 = vunpack.c.l.b16 %v1358
    %v1739 = vunpack.c.h.b16 %v1358
    %v1740 = vunpack.c.l.b16 %v1359
    %v1741 = vunpack.c.h.b16 %v1359
    %v1742 = vunpack.c.l.b16 %v1360
    %v1743 = vunpack.c.h.b16 %v1360
    %v1744 = vunpack.c.l.b16 %v1361
    %v1745 = vunpack.c.h.b16 %v1361
    %v1746 = vpack.c.b16 %v1494, %v1490
    %v1747 = vpack.c.b16 %v1495, %v1491
    %v1748 = vpack.c.b16 %v1496, %v1492
    %v1749 = vpack.c.b16 %v1497, %v1493
    %v1750 = vpack.c.b16 %v1502, %v1498
    %v1751 = vpack.c.b16 %v1503, %v1499
    %v1752 = vpack.c.b16 %v1504, %v1500
    %v1753 = vpack.c.b16 %v1505, %v1501
    %v1754 = vpack.c.b16 %v1510, %v1506
    %v1755 = vpack.c.b16 %v1511, %v1507
    %v1756 = vpack.c.b16 %v1512, %v1508
    %v1757 = vpack.c.b16 %v1513, %v1509
    %v1758 = vpack.c.b16 %v1518, %v1514
    %v1759 = vpack.c.b16 %v1519, %v1515
    %v1760 = vpack.c.b16 %v1520, %v1516
    %v1761 = vpack.c.b16 %v1521, %v1517
    %v1762 = vpack.c.b16 %v1526, %v1522
    %v1763 = vpack.c.b16 %v1527, %v1523
    %v1764 = vpack.c.b16 %v1528, %v1524
    %v1765 = vpack.c.b16 %v1529, %v1525
    %v1766 = vpack.c.b16 %v1534, %v1530
    %v1767 = vpack.c.b16 %v1535, %v1531
    %v1768 = vpack.c.b16 %v1536, %v1532
    %v1769 = vpack.c.b16 %v1537, %v1533
    %v1770 = vpack.c.b16 %v1542, %v1538
    %v1771 = vpack.c.b16 %v1543, %v1539
    %v1772 = vpack.c.b16 %v1544, %v1540
    %v1773 = vpack.c.b16 %v1545, %v1541
    %v1774 = vpack.c.b16 %v1550, %v1546
    %v1775 = vpack.c.b16 %v1551, %v1547
    %v1776 = vpack.c.b16 %v1552, %v1548
    %v1777 = vpack.c.b16 %v1553, %v1549
    %v1778 = vpack.c.b16 %v1558, %v1554
    %v1779 = vpack.c.b16 %v1559, %v1555
    %v1780 = vpack.c.b16 %v1560, %v1556
    %v1781 = vpack.c.b16 %v1561, %v1557
    %v1782 = vpack.c.b16 %v1566, %v1562
    %v1783 = vpack.c.b16 %v1567, %v1563
    %v1784 = vpack.c.b16 %v1568, %v1564
    %v1785 = vpack.c.b16 %v1569, %v1565
    %v1786 = vpack.c.b16 %v1574, %v1570
    %v1787 = vpack.c.b16 %v1575, %v1571
    %v1788 = vpack.c.b16 %v1576, %v1572
    %v1789 = vpack.c.b16 %v1577, %v1573
    %v1790 = vpack.c.b16 %v1582, %v1578
    %v1791 = vpack.c.b16 %v1583, %v1579
    %v1792 = vpack.c.b16 %v1584, %v1580
    %v1793 = vpack.c.b16 %v1585, %v1581
    %v1794 = vpack.c.b16 %v1590, %v1586
    %v1795 = vpack.c.b16 %v1591, %v1587
    %v1796 = vpack.c.b16 %v1592, %v1588
    %v1797 = vpack.c.b16 %v1593, %v1589
    %v1798 = vpack.c.b16 %v1598, %v1594
    %v1799 = vpack.c.b16 %v1599, %v1595
    %v1800 = vpack.c.b16 %v1600, %v1596
    %v1801 = vpack.c.b16 %v1601, %v1597
    %v1802 = vpack.c.b16 %v1606, %v1602
    %v1803 = vpack.c.b16 %v1607, %v1603
    %v1804 = vpack.c.b16 %v1608, %v1604
    %v1805 = vpack.c.b16 %v1609, %v1605
    %v1806 = vpack.c.b16 %v1614, %v1610
    %v1807 = vpack.c.b16 %v1615, %v1611
    %v1808 = vpack.c.b16 %v1616, %v1612
    %v1809 = vpack.c.b16 %v1617, %v1613
    %v1810 = vpack.c.b16 %v1622, %v1618
    %v1811 = vpack.c.b16 %v1623, %v1619
    %v1812 = vpack.c.b16 %v1624, %v1620
    %v1813 = vpack.c.b16 %v1625, %v1621
    %v1814 = vpack.c.b16 %v1630, %v1626
    %v1815 = vpack.c.b16 %v1631, %v1627
    %v1816 = vpack.c.b16 %v1632, %v1628
    %v1817 = vpack.c.b16 %v1633, %v1629
    %v1818 = vpack.c.b16 %v1638, %v1634
    %v1819 = vpack.c.b16 %v1639, %v1635
    %v1820 = vpack.c.b16 %v1640, %v1636
    %v1821 = vpack.c.b16 %v1641, %v1637
    %v1822 = vpack.c.b16 %v1646, %v1642
    %v1823 = vpack.c.b16 %v1647, %v1643
    %v1824 = vpack.c.b16 %v1648, %v1644
    %v1825 = vpack.c.b16 %v1649, %v1645
    %v1826 = vpack.c.b16 %v1654, %v1650
    %v1827 = vpack.c.b16 %v1655, %v1651
    %v1828 = vpack.c.b16 %v1656, %v1652
    %v1829 = vpack.c.b16 %v1657, %v1653
    %v1830 = vpack.c.b16 %v1662, %v1658
    %v1831 = vpack.c.b16 %v1663, %v1659
    %v1832 = vpack.c.b16 %v1664, %v1660
    %v1833 = vpack.c.b16 %v1665, %v1661
    %v1834 = vpack.c.b16 %v1670, %v1666
    %v1835 = vpack.c.b16 %v1671, %v1667
    %v1836 = vpack.c.b16 %v1672, %v1668
    %v1837 = vpack.c.b16 %v1673, %v1669
    %v1838 = vpack.c.b16 %v1678, %v1674
    %v1839 = vpack.c.b16 %v1679, %v1675
    %v1840 = vpack.c.b16 %v1680, %v1676
    %v1841 = vpack.c.b16 %v1681, %v1677
    %v1842 = vpack.c.b16 %v1686, %v1682
    %v1843 = vpack.c.b16 %v1687, %v1683
    %v1844 = vpack.c.b16 %v1688, %v1684
    %v1845 = vpack.c.b16 %v1689, %v1685
    %v1846 = vpack.c.b16 %v1694, %v1690
    %v1847 = vpack.c.b16 %v1695, %v1691
    %v1848 = vpack.c.b16 %v1696, %v1692
    %v1849 = vpack.c.b16 %v1697, %v1693
    %v1850 = vpack.c.b16 %v1702, %v1698
    %v1851 = vpack.c.b16 %v1703, %v1699
    %v1852 = vpack.c.b16 %v1704, %v1700
    %v1853 = vpack.c.b16 %v1705, %v1701
    %v1854 = vpack.c.b16 %v1710, %v1706
    %v1855 = vpack.c.b16 %v1711, %v1707
    %v1856 = vpack.c.b16 %v1712, %v1708
    %v1857 = vpack.c.b16 %v1713, %v1709
    %v1858 = vpack.c.b16 %v1718, %v1714
    %v1859 = vpack.c.b16 %v1719, %v1715
    %v1860 = vpack.c.b16 %v1720, %v1716
    %v1861 = vpack.c.b16 %v1721, %v1717
    %v1862 = vpack.c.b16 %v1726, %v1722
    %v1863 = vpack.c.b16 %v1727, %v1723
    %v1864 = vpack.c.b16 %v1728, %v1724
    %v1865 = vpack.c.b16 %v1729, %v1725
    %v1866 = vpack.c.b16 %v1734, %v1730
    %v1867 = vpack.c.b16 %v1735, %v1731
    %v1868 = vpack.c.b16 %v1736, %v1732
    %v1869 = vpack.c.b16 %v1737, %v1733
    %v1870 = vpack.c.b16 %v1742, %v1738
    %v1871 = vpack.c.b16 %v1743, %v1739
    %v1872 = vpack.c.b16 %v1744, %v1740
    %v1873 = vpack.c.b16 %v1745, %v1741
    %2002 = vmatprep.subr.bf16.mxu0 %v1747
    %2003 = vmatpush1.bf16.msra.mxu0 %v1746
    %2004 = vmatprep.subr.bf16.mxu0 %v1751
    %2005 = vmatpush1.bf16.msra.mxu0 %v1750
    %2006 = vmatprep.subr.bf16.mxu0 %v1755
    %2007 = vmatpush1.bf16.msra.mxu0 %v1754
    %2008 = vmatprep.subr.bf16.mxu0 %v1759
    %2009 = vmatpush1.bf16.msra.mxu0 %v1758
    %2010 = vmatprep.subr.bf16.mxu0 %v1763
    %2011 = vmatpush1.bf16.msra.mxu0 %v1762
    %2012 = vmatprep.subr.bf16.mxu0 %v1767
    %2013 = vmatpush1.bf16.msra.mxu0 %v1766
    %2014 = vmatprep.subr.bf16.mxu0 %v1771
    %2015 = vmatpush1.bf16.msra.mxu0 %v1770
    %2016 = vmatprep.subr.bf16.mxu0 %v1775
    %2017 = vmatpush1.bf16.msra.mxu0 %v1774
    %2018 = vmatprep.subr.bf16.mxu0 %v1779
    %2019 = vmatpush1.bf16.msra.mxu0 %v1778
    %2020 = vmatprep.subr.bf16.mxu0 %v1783
    %2021 = vmatpush1.bf16.msra.mxu0 %v1782
    %2022 = vmatprep.subr.bf16.mxu0 %v1787
    %2023 = vmatpush1.bf16.msra.mxu0 %v1786
    %2024 = vmatprep.subr.bf16.mxu0 %v1791
    %2025 = vmatpush1.bf16.msra.mxu0 %v1790
    %2026 = vmatprep.subr.bf16.mxu0 %v1795
    %2027 = vmatpush1.bf16.msra.mxu0 %v1794
    %2028 = vmatprep.subr.bf16.mxu0 %v1799
    %2029 = vmatpush1.bf16.msra.mxu0 %v1798
    %2030 = vmatprep.subr.bf16.mxu0 %v1803
    %2031 = vmatpush1.bf16.msra.mxu0 %v1802
    %2032 = vmatprep.subr.bf16.mxu0 %v1807
    %2033 = vmatpush1.bf16.msra.mxu0 %v1806
    %2034 = vmatprep.mubr.bf16.mxu0 %v1230
    %2035 = vmatmul.mubr.bf16.gmra.mrb[0].mxu0 %v1229
    %v2036 = vpop.f32.mrb[0].mxu0
    %v2037 = vadd.f32 0.0, %v2036
    %v2038 = vpop.f32.mrb[0].mxu0
    %v2039 = vadd.f32 0.0, %v2038
    %v2040 = vpop.f32.mrb[0].mxu0
    %v2041 = vpop.f32.mrb[0].mxu0
    %2042 = vdwg.mxu0
    %2043 = vmatprep.subr.bf16.mxu0 %v1811
    %2044 = vmatpush1.bf16.msra.mxu0 %v1810
    %2045 = vmatprep.subr.bf16.mxu0 %v1815
    %2046 = vmatpush1.bf16.msra.mxu0 %v1814
    %2047 = vmatprep.subr.bf16.mxu0 %v1819
    %2048 = vmatpush1.bf16.msra.mxu0 %v1818
    %2049 = vmatprep.subr.bf16.mxu0 %v1823
    %2050 = vmatpush1.bf16.msra.mxu0 %v1822
    %2051 = vmatprep.subr.bf16.mxu0 %v1827
    %2052 = vmatpush1.bf16.msra.mxu0 %v1826
    %2053 = vmatprep.subr.bf16.mxu0 %v1831
    %2054 = vmatpush1.bf16.msra.mxu0 %v1830
    %2055 = vmatprep.subr.bf16.mxu0 %v1835
    %2056 = vmatpush1.bf16.msra.mxu0 %v1834
    %2057 = vmatprep.subr.bf16.mxu0 %v1839
    %2058 = vmatpush1.bf16.msra.mxu0 %v1838
    %2059 = vmatprep.subr.bf16.mxu0 %v1843
    %2060 = vmatpush1.bf16.msra.mxu0 %v1842
    %2061 = vmatprep.subr.bf16.mxu0 %v1847
    %2062 = vmatpush1.bf16.msra.mxu0 %v1846
    %2063 = vmatprep.subr.bf16.mxu0 %v1851
    %2064 = vmatpush1.bf16.msra.mxu0 %v1850
    %2065 = vmatprep.subr.bf16.mxu0 %v1855
    %2066 = vmatpush1.bf16.msra.mxu0 %v1854
    %2067 = vmatprep.subr.bf16.mxu0 %v1859
    %2068 = vmatpush1.bf16.msra.mxu0 %v1858
    %2069 = vmatprep.subr.bf16.mxu0 %v1863
    %2070 = vmatpush1.bf16.msra.mxu0 %v1862
    %2071 = vmatprep.subr.bf16.mxu0 %v1867
    %2072 = vmatpush1.bf16.msra.mxu0 %v1866
    %2073 = vmatprep.subr.bf16.mxu0 %v1871
    %2074 = vmatpush1.bf16.msra.mxu0 %v1870
    %2075 = vmatprep.mubr.bf16.mxu0 %v1232
    %2076 = vmatmul.mubr.bf16.gmra.mrb[0].mxu0 %v1231
    %v2077 = vpop.f32.mrb[0].mxu0
    %v2078 = vadd.f32 %v2037, %v2077
    %v2079 = vpop.f32.mrb[0].mxu0
    %v2080 = vadd.f32 %v2039, %v2079
    %v2081 = vpop.f32.mrb[0].mxu0
    %v2082 = vpop.f32.mrb[0].mxu0
    %2083 = vdwg.mxu0
    %2084 = vmatprep.subr.bf16.mxu0 %v1749
    %2085 = vmatpush1.bf16.msra.mxu0 %v1748
    %2086 = vmatprep.subr.bf16.mxu0 %v1753
    %2087 = vmatpush1.bf16.msra.mxu0 %v1752
    %2088 = vmatprep.subr.bf16.mxu0 %v1757
    %2089 = vmatpush1.bf16.msra.mxu0 %v1756
    %2090 = vmatprep.subr.bf16.mxu0 %v1761
    %2091 = vmatpush1.bf16.msra.mxu0 %v1760
    %2092 = vmatprep.subr.bf16.mxu0 %v1765
    %2093 = vmatpush1.bf16.msra.mxu0 %v1764
    %2094 = vmatprep.subr.bf16.mxu0 %v1769
    %2095 = vmatpush1.bf16.msra.mxu0 %v1768
    %2096 = vmatprep.subr.bf16.mxu0 %v1773
    %2097 = vmatpush1.bf16.msra.mxu0 %v1772
    %2098 = vmatprep.subr.bf16.mxu0 %v1777
    %2099 = vmatpush1.bf16.msra.mxu0 %v1776
    %2100 = vmatprep.subr.bf16.mxu0 %v1781
    %2101 = vmatpush1.bf16.msra.mxu0 %v1780
    %2102 = vmatprep.subr.bf16.mxu0 %v1785
    %2103 = vmatpush1.bf16.msra.mxu0 %v1784
    %2104 = vmatprep.subr.bf16.mxu0 %v1789
    %2105 = vmatpush1.bf16.msra.mxu0 %v1788
    %2106 = vmatprep.subr.bf16.mxu0 %v1793
    %2107 = vmatpush1.bf16.msra.mxu0 %v1792
    %2108 = vmatprep.subr.bf16.mxu0 %v1797
    %2109 = vmatpush1.bf16.msra.mxu0 %v1796
    %2110 = vmatprep.subr.bf16.mxu0 %v1801
    %2111 = vmatpush1.bf16.msra.mxu0 %v1800
    %2112 = vmatprep.subr.bf16.mxu0 %v1805
    %2113 = vmatpush1.bf16.msra.mxu0 %v1804
    %2114 = vmatprep.subr.bf16.mxu0 %v1809
    %2115 = vmatpush1.bf16.msra.mxu0 %v1808
    %2116 = vmatprep.mubr.bf16.mxu0 %v1230
    %2117 = vmatmul.mubr.bf16.gmra.mrb[0].mxu0 %v1229
    %v2118 = vpop.f32.mrb[0].mxu0
    %v2119 = vadd.f32 0.0, %v2118
    %v2120 = vpop.f32.mrb[0].mxu0
    %v2121 = vadd.f32 0.0, %v2120
    %v2122 = vpop.f32.mrb[0].mxu0
    %v2123 = vpop.f32.mrb[0].mxu0
    %2124 = vdwg.mxu0
    %2125 = vmatprep.subr.bf16.mxu0 %v1813
    %2126 = vmatpush1.bf16.msra.mxu0 %v1812
    %2127 = vmatprep.subr.bf16.mxu0 %v1817
    %2128 = vmatpush1.bf16.msra.mxu0 %v1816
    %2129 = vmatprep.subr.bf16.mxu0 %v1821
    %2130 = vmatpush1.bf16.msra.mxu0 %v1820
    %2131 = vmatprep.subr.bf16.mxu0 %v1825
    %2132 = vmatpush1.bf16.msra.mxu0 %v1824
    %2133 = vmatprep.subr.bf16.mxu0 %v1829
    %2134 = vmatpush1.bf16.msra.mxu0 %v1828
    %2135 = vmatprep.subr.bf16.mxu0 %v1833
    %2136 = vmatpush1.bf16.msra.mxu0 %v1832
    %2137 = vmatprep.subr.bf16.mxu0 %v1837
    %2138 = vmatpush1.bf16.msra.mxu0 %v1836
    %2139 = vmatprep.subr.bf16.mxu0 %v1841
    %2140 = vmatpush1.bf16.msra.mxu0 %v1840
    %2141 = vmatprep.subr.bf16.mxu0 %v1845
    %2142 = vmatpush1.bf16.msra.mxu0 %v1844
    %2143 = vmatprep.subr.bf16.mxu0 %v1849
    %2144 = vmatpush1.bf16.msra.mxu0 %v1848
    %2145 = vmatprep.subr.bf16.mxu0 %v1853
    %2146 = vmatpush1.bf16.msra.mxu0 %v1852
    %2147 = vmatprep.subr.bf16.mxu0 %v1857
    %2148 = vmatpush1.bf16.msra.mxu0 %v1856
    %2149 = vmatprep.subr.bf16.mxu0 %v1861
    %2150 = vmatpush1.bf16.msra.mxu0 %v1860
    %2151 = vmatprep.subr.bf16.mxu0 %v1865
    %2152 = vmatpush1.bf16.msra.mxu0 %v1864
    %2153 = vmatprep.subr.bf16.mxu0 %v1869
    %2154 = vmatpush1.bf16.msra.mxu0 %v1868
    %2155 = vmatprep.subr.bf16.mxu0 %v1873
    %2156 = vmatpush1.bf16.msra.mxu0 %v1872
    %2157 = vmatprep.mubr.bf16.mxu0 %v1232
    %2158 = vmatmul.mubr.bf16.gmra.mrb[0].mxu0 %v1231
    %v2159 = vpop.f32.mrb[0].mxu0
    %v2160 = vadd.f32 %v2119, %v2159
    %v2161 = vpop.f32.mrb[0].mxu0
    %v2162 = vadd.f32 %v2121, %v2161
    %v2163 = vpop.f32.mrb[0].mxu0
    %v2164 = vpop.f32.mrb[0].mxu0
    %2165 = vdwg.mxu0
    %v2166 = vrot.slane %v2078, 4
    %v2167 = vadd.f32 %v2078, %v2166
    %v2168 = vrot.slane %v2167, 2
    %v2169 = vadd.f32 %v2167, %v2168
    %v2170 = vrot.slane %v2169, 1
    %v2171 = vadd.f32 %v2169, %v2170
    %v2172 = vrot.slane %v2080, 4
    %v2173 = vadd.f32 %v2080, %v2172
    %v2174 = vrot.slane %v2173, 2
    %v2175 = vadd.f32 %v2173, %v2174
    %v2176 = vrot.slane %v2175, 1
    %v2177 = vadd.f32 %v2175, %v2176
    %v2178 = vrot.slane %v2160, 4
    %v2179 = vadd.f32 %v2160, %v2178
    %v2180 = vrot.slane %v2179, 2
    %v2181 = vadd.f32 %v2179, %v2180
    %v2182 = vrot.slane %v2181, 1
    %v2183 = vadd.f32 %v2181, %v2182
    %v2184 = vrot.slane %v2162, 4
    %v2185 = vadd.f32 %v2162, %v2184
    %v2186 = vrot.slane %v2185, 2
    %v2187 = vadd.f32 %v2185, %v2186
    %v2188 = vrot.slane %v2187, 1
    %v2189 = vadd.f32 %v2187, %v2188
    %v2190 = vmul.f32 %v2078, %v2078
    %v2191 = vmul.f32 %v2080, %v2080
    %v2192 = vmul.f32 %v2160, %v2160
    %v2193 = vmul.f32 %v2162, %v2162
    %v2194 = vrot.slane %v2190, 4
    %v2195 = vadd.f32 %v2190, %v2194
    %v2196 = vrot.slane %v2195, 2
    %v2197 = vadd.f32 %v2195, %v2196
    %v2198 = vrot.slane %v2197, 1
    %v2199 = vadd.f32 %v2197, %v2198
    %v2200 = vrot.slane %v2191, 4
    %v2201 = vadd.f32 %v2191, %v2200
    %v2202 = vrot.slane %v2201, 2
    %v2203 = vadd.f32 %v2201, %v2202
    %v2204 = vrot.slane %v2203, 1
    %v2205 = vadd.f32 %v2203, %v2204
    %v2206 = vrot.slane %v2192, 4
    %v2207 = vadd.f32 %v2192, %v2206
    %v2208 = vrot.slane %v2207, 2
    %v2209 = vadd.f32 %v2207, %v2208
    %v2210 = vrot.slane %v2209, 1
    %v2211 = vadd.f32 %v2209, %v2210
    %v2212 = vrot.slane %v2193, 4
    %v2213 = vadd.f32 %v2193, %v2212
    %v2214 = vrot.slane %v2213, 2
    %v2215 = vadd.f32 %v2213, %v2214
    %v2216 = vrot.slane %v2215, 1
    %v2217 = vadd.f32 %v2215, %v2216
    %v2218 = vmul.f32 %v2171, 0.125
    %v2219 = vmul.f32 %v2177, 0.125
    %v2220 = vmul.f32 %v2183, 0.125
    %v2221 = vmul.f32 %v2189, 0.125
    %v2222 = vmul.f32 %v2199, 0.125
    %v2223 = vmul.f32 %v2205, 0.125
    %v2224 = vmul.f32 %v2211, 0.125
    %v2225 = vmul.f32 %v2217, 0.125
    %v2226 = vmul.f32 %v2218, %v2218
    %v2227 = vmul.f32 %v2219, %v2219
    %v2228 = vmul.f32 %v2220, %v2220
    %v2229 = vmul.f32 %v2221, %v2221
    %v2230 = vsub.f32 %v2222, %v2226
    %v2231 = vsub.f32 %v2223, %v2227
    %v2232 = vsub.f32 %v2224, %v2228
    %v2233 = vsub.f32 %v2225, %v2229
    %v2234 = vmax.f32 %v2230, 0.0
    %v2235 = vmax.f32 %v2231, 0.0
    %v2236 = vmax.f32 %v2232, 0.0
    %v2237 = vmax.f32 %v2233, 0.0
    %s2238 = scalar_lea.vmem [#allocation7], 4
    %v2239 = vld [vmem:[%s2238] sm:$0xf]
    %v2240 = vadd.f32 %v2234, 1e-05
    %v2241 = vadd.f32 %v2235, 1e-05
    %v2242 = vadd.f32 %v2236, 1e-05
    %v2243 = vadd.f32 %v2237, 1e-05
    %v2244 = vrsqrt.pop %v2240
    %v2245 = vrsqrt.pop %v2241
    %v2246 = vrsqrt.pop %v2242
    %v2247 = vrsqrt.pop %v2243
    %v2252 = vcombine.low %v2244, %v2245
    %v2253 = vcombine.low %v2246, %v2247
    %v2255 = vunpack.c.l.s4 1966171168
    %v2256 = vunpack.c.0.s8 %v2255
    %v2257 = vlaneseq
    %v2258 = vshrl.u32 %v2257, 7
    %v2259 = vsub.s32 %v2256, %v2258
    %v2260 = vrot.slane %v2252, %v2259
    %v2262 = vunpack.c.l.s4 1966171168
    %v2263 = vunpack.c.0.s8 %v2262
    %v2264 = vlaneseq
    %v2265 = vshrl.u32 %v2264, 7
    %v2266 = vsub.s32 %v2263, %v2265
    %v2267 = vrot.slane %v2253, %v2266
    %v2268 = vcombine.low %v2260, %v2267
    %v2270 = vunpack.c.l.s4 1966171168
    %v2271 = vunpack.c.0.s8 %v2270
    %v2272 = vlaneseq
    %v2273 = vshrl.u32 %v2272, 7
    %v2274 = vsub.s32 %v2271, %v2273
    %v2275 = vrot.slane %v2268, %v2274
    %v2277 = vmul.f32 %v2239, %v2275
    %s2278 = scalar_lea.vmem [#allocation8], 4
    %v2279 = vld [vmem:[%s2278] sm:$0xf]
    %v2281 = vlaneseq
    %v2282 = vshrl.u32 %v2281, 7
    %v2283 = vsub.s32 0, %v2282
    %v2284 = vrot.slane %v2277, %v2283
    %v2285 = vlaneseq
    %v2286 = vshrl.u32 %v2285, 7
    %v2287 = vsub.s32 1, %v2286
    %v2288 = vrot.slane %v2277, %v2287
    %v2289 = vlaneseq
    %v2290 = vshrl.u32 %v2289, 7
    %v2291 = vsub.s32 2, %v2290
    %v2292 = vrot.slane %v2277, %v2291
    %v2293 = vlaneseq
    %v2294 = vshrl.u32 %v2293, 7
    %v2295 = vsub.s32 3, %v2294
    %v2296 = vrot.slane %v2277, %v2295
    %v2301 = vmul.f32 %v2218, %v2284
    %v2302 = vmul.f32 %v2219, %v2288
    %v2303 = vmul.f32 %v2220, %v2292
    %v2304 = vmul.f32 %v2221, %v2296
    %v2309 = vcombine.low %v2301, %v2302
    %v2310 = vcombine.low %v2303, %v2304
    %v2312 = vunpack.c.l.s4 1966171168
    %v2313 = vunpack.c.0.s8 %v2312
    %v2314 = vlaneseq
    %v2315 = vshrl.u32 %v2314, 7
    %v2316 = vsub.s32 %v2313, %v2315
    %v2317 = vrot.slane %v2309, %v2316
    %v2319 = vunpack.c.l.s4 1966171168
    %v2320 = vunpack.c.0.s8 %v2319
    %v2321 = vlaneseq
    %v2322 = vshrl.u32 %v2321, 7
    %v2323 = vsub.s32 %v2320, %v2322
    %v2324 = vrot.slane %v2310, %v2323
    %v2325 = vcombine.low %v2317, %v2324
    %v2327 = vunpack.c.l.s4 1966171168
    %v2328 = vunpack.c.0.s8 %v2327
    %v2329 = vlaneseq
    %v2330 = vshrl.u32 %v2329, 7
    %v2331 = vsub.s32 %v2328, %v2330
    %v2332 = vrot.slane %v2325, %v2331
    %v2334 = vsub.f32 %v2279, %v2332
    %v2335 = vmul.f32 %v2078, %v2284
    %v2336 = vmul.f32 %v2080, %v2288
    %v2337 = vmul.f32 %v2160, %v2292
    %v2338 = vmul.f32 %v2162, %v2296
    %v2340 = vlaneseq
    %v2341 = vshrl.u32 %v2340, 7
    %v2342 = vsub.s32 0, %v2341
    %v2343 = vrot.slane %v2334, %v2342
    %v2344 = vlaneseq
    %v2345 = vshrl.u32 %v2344, 7
    %v2346 = vsub.s32 1, %v2345
    %v2347 = vrot.slane %v2334, %v2346
    %v2348 = vlaneseq
    %v2349 = vshrl.u32 %v2348, 7
    %v2350 = vsub.s32 2, %v2349
    %v2351 = vrot.slane %v2334, %v2350
    %v2352 = vlaneseq
    %v2353 = vshrl.u32 %v2352, 7
    %v2354 = vsub.s32 3, %v2353
    %v2355 = vrot.slane %v2334, %v2354
    %v2360 = vadd.f32 %v2335, %v2343
    %v2361 = vadd.f32 %v2336, %v2347
    %v2362 = vadd.f32 %v2337, %v2351
    %v2363 = vadd.f32 %v2338, %v2355
    %v2364 = vmax.f32 %v2360, 0.0
    %v2365 = vmax.f32 %v2361, 0.0
    %v2366 = vmax.f32 %v2362, 0.0
    %v2367 = vmax.f32 %v2363, 0.0
    %v2368 = vpack.c.bf16 %v2364, %v2364
    %v2369 = vpack.c.bf16 %v2365, %v2365
    %v2370 = vpack.c.bf16 %v2366, %v2366
    %v2371 = vpack.c.bf16 %v2367, %v2367
    %s2372 = scalar_lea.vmem [#allocation5], 2048
    %v2373 = vld [vmem:[%s2372] sm:$0xff]
    %v2374 = vld [vmem:[%s2372 + $0x8] sm:$0xff]
    %v2375 = vld [vmem:[%s2372 + $0x10] sm:$0xff]
    %v2376 = vld [vmem:[%s2372 + $0x18] sm:$0xff]
    %v2377 = vld [vmem:[%s2372 + $0x20] sm:$0xff]
    %v2378 = vld [vmem:[%s2372 + $0x28] sm:$0xff]
    %v2379 = vld [vmem:[%s2372 + $0x30] sm:$0xff]
    %v2380 = vld [vmem:[%s2372 + $0x38] sm:$0xff]
    %v2381 = vld [vmem:[%s2372 + $0x40] sm:$0xff]
    %v2382 = vld [vmem:[%s2372 + $0x48] sm:$0xff]
    %v2383 = vld [vmem:[%s2372 + $0x50] sm:$0xff]
    %v2384 = vld [vmem:[%s2372 + $0x58] sm:$0xff]
    %v2385 = vld [vmem:[%s2372 + $0x60] sm:$0xff]
    %v2386 = vld [vmem:[%s2372 + $0x68] sm:$0xff]
    %v2387 = vld [vmem:[%s2372 + $0x70] sm:$0xff]
    %v2388 = vld [vmem:[%s2372 + $0x78] sm:$0xff]
    %v2389 = vld [vmem:[%s2372 + $0x80] sm:$0xff]
    %v2390 = vld [vmem:[%s2372 + $0x88] sm:$0xff]
    %v2391 = vld [vmem:[%s2372 + $0x90] sm:$0xff]
    %v2392 = vld [vmem:[%s2372 + $0x98] sm:$0xff]
    %v2393 = vld [vmem:[%s2372 + $0xa0] sm:$0xff]
    %v2394 = vld [vmem:[%s2372 + $0xa8] sm:$0xff]
    %v2395 = vld [vmem:[%s2372 + $0xb0] sm:$0xff]
    %v2396 = vld [vmem:[%s2372 + $0xb8] sm:$0xff]
    %v2397 = vld [vmem:[%s2372 + $0xc0] sm:$0xff]
    %v2398 = vld [vmem:[%s2372 + $0xc8] sm:$0xff]
    %v2399 = vld [vmem:[%s2372 + $0xd0] sm:$0xff]
    %v2400 = vld [vmem:[%s2372 + $0xd8] sm:$0xff]
    %v2401 = vld [vmem:[%s2372 + $0xe0] sm:$0xff]
    %v2402 = vld [vmem:[%s2372 + $0xe8] sm:$0xff]
    %v2403 = vld [vmem:[%s2372 + $0xf0] sm:$0xff]
    %v2404 = vld [vmem:[%s2372 + $0xf8] sm:$0xff]
    %v2405 = vld [vmem:[%s2372 + $0x100] sm:$0xff]
    %v2406 = vld [vmem:[%s2372 + $0x108] sm:$0xff]
    %v2407 = vld [vmem:[%s2372 + $0x110] sm:$0xff]
    %v2408 = vld [vmem:[%s2372 + $0x118] sm:$0xff]
    %v2409 = vld [vmem:[%s2372 + $0x120] sm:$0xff]
    %v2410 = vld [vmem:[%s2372 + $0x128] sm:$0xff]
    %v2411 = vld [vmem:[%s2372 + $0x130] sm:$0xff]
    %v2412 = vld [vmem:[%s2372 + $0x138] sm:$0xff]
    %v2413 = vld [vmem:[%s2372 + $0x140] sm:$0xff]
    %v2414 = vld [vmem:[%s2372 + $0x148] sm:$0xff]
    %v2415 = vld [vmem:[%s2372 + $0x150] sm:$0xff]
    %v2416 = vld [vmem:[%s2372 + $0x158] sm:$0xff]
    %v2417 = vld [vmem:[%s2372 + $0x160] sm:$0xff]
    %v2418 = vld [vmem:[%s2372 + $0x168] sm:$0xff]
    %v2419 = vld [vmem:[%s2372 + $0x170] sm:$0xff]
    %v2420 = vld [vmem:[%s2372 + $0x178] sm:$0xff]
    %v2421 = vld [vmem:[%s2372 + $0x180] sm:$0xff]
    %v2422 = vld [vmem:[%s2372 + $0x188] sm:$0xff]
    %v2423 = vld [vmem:[%s2372 + $0x190] sm:$0xff]
    %v2424 = vld [vmem:[%s2372 + $0x198] sm:$0xff]
    %v2425 = vld [vmem:[%s2372 + $0x1a0] sm:$0xff]
    %v2426 = vld [vmem:[%s2372 + $0x1a8] sm:$0xff]
    %v2427 = vld [vmem:[%s2372 + $0x1b0] sm:$0xff]
    %v2428 = vld [vmem:[%s2372 + $0x1b8] sm:$0xff]
    %v2429 = vld [vmem:[%s2372 + $0x1c0] sm:$0xff]
    %v2430 = vld [vmem:[%s2372 + $0x1c8] sm:$0xff]
    %v2431 = vld [vmem:[%s2372 + $0x1d0] sm:$0xff]
    %v2432 = vld [vmem:[%s2372 + $0x1d8] sm:$0xff]
    %v2433 = vld [vmem:[%s2372 + $0x1e0] sm:$0xff]
    %v2434 = vld [vmem:[%s2372 + $0x1e8] sm:$0xff]
    %v2435 = vld [vmem:[%s2372 + $0x1f0] sm:$0xff]
    %v2436 = vld [vmem:[%s2372 + $0x1f8] sm:$0xff]
    %v2437 = vld [vmem:[%s2372 + $0x200] sm:$0xff]
    %v2438 = vld [vmem:[%s2372 + $0x208] sm:$0xff]
    %v2439 = vld [vmem:[%s2372 + $0x210] sm:$0xff]
    %v2440 = vld [vmem:[%s2372 + $0x218] sm:$0xff]
    %v2441 = vld [vmem:[%s2372 + $0x220] sm:$0xff]
    %v2442 = vld [vmem:[%s2372 + $0x228] sm:$0xff]
    %v2443 = vld [vmem:[%s2372 + $0x230] sm:$0xff]
    %v2444 = vld [vmem:[%s2372 + $0x238] sm:$0xff]
    %v2445 = vld [vmem:[%s2372 + $0x240] sm:$0xff]
    %v2446 = vld [vmem:[%s2372 + $0x248] sm:$0xff]
    %v2447 = vld [vmem:[%s2372 + $0x250] sm:$0xff]
    %v2448 = vld [vmem:[%s2372 + $0x258] sm:$0xff]
    %v2449 = vld [vmem:[%s2372 + $0x260] sm:$0xff]
    %v2450 = vld [vmem:[%s2372 + $0x268] sm:$0xff]
    %v2451 = vld [vmem:[%s2372 + $0x270] sm:$0xff]
    %v2452 = vld [vmem:[%s2372 + $0x278] sm:$0xff]
    %v2453 = vld [vmem:[%s2372 + $0x280] sm:$0xff]
    %v2454 = vld [vmem:[%s2372 + $0x288] sm:$0xff]
    %v2455 = vld [vmem:[%s2372 + $0x290] sm:$0xff]
    %v2456 = vld [vmem:[%s2372 + $0x298] sm:$0xff]
    %v2457 = vld [vmem:[%s2372 + $0x2a0] sm:$0xff]
    %v2458 = vld [vmem:[%s2372 + $0x2a8] sm:$0xff]
    %v2459 = vld [vmem:[%s2372 + $0x2b0] sm:$0xff]
    %v2460 = vld [vmem:[%s2372 + $0x2b8] sm:$0xff]
    %v2461 = vld [vmem:[%s2372 + $0x2c0] sm:$0xff]
    %v2462 = vld [vmem:[%s2372 + $0x2c8] sm:$0xff]
    %v2463 = vld [vmem:[%s2372 + $0x2d0] sm:$0xff]
    %v2464 = vld [vmem:[%s2372 + $0x2d8] sm:$0xff]
    %v2465 = vld [vmem:[%s2372 + $0x2e0] sm:$0xff]
    %v2466 = vld [vmem:[%s2372 + $0x2e8] sm:$0xff]
    %v2467 = vld [vmem:[%s2372 + $0x2f0] sm:$0xff]
    %v2468 = vld [vmem:[%s2372 + $0x2f8] sm:$0xff]
    %v2469 = vld [vmem:[%s2372 + $0x300] sm:$0xff]
    %v2470 = vld [vmem:[%s2372 + $0x308] sm:$0xff]
    %v2471 = vld [vmem:[%s2372 + $0x310] sm:$0xff]
    %v2472 = vld [vmem:[%s2372 + $0x318] sm:$0xff]
    %v2473 = vld [vmem:[%s2372 + $0x320] sm:$0xff]
    %v2474 = vld [vmem:[%s2372 + $0x328] sm:$0xff]
    %v2475 = vld [vmem:[%s2372 + $0x330] sm:$0xff]
    %v2476 = vld [vmem:[%s2372 + $0x338] sm:$0xff]
    %v2477 = vld [vmem:[%s2372 + $0x340] sm:$0xff]
    %v2478 = vld [vmem:[%s2372 + $0x348] sm:$0xff]
    %v2479 = vld [vmem:[%s2372 + $0x350] sm:$0xff]
    %v2480 = vld [vmem:[%s2372 + $0x358] sm:$0xff]
    %v2481 = vld [vmem:[%s2372 + $0x360] sm:$0xff]
    %v2482 = vld [vmem:[%s2372 + $0x368] sm:$0xff]
    %v2483 = vld [vmem:[%s2372 + $0x370] sm:$0xff]
    %v2484 = vld [vmem:[%s2372 + $0x378] sm:$0xff]
    %v2485 = vld [vmem:[%s2372 + $0x380] sm:$0xff]
    %v2486 = vld [vmem:[%s2372 + $0x388] sm:$0xff]
    %v2487 = vld [vmem:[%s2372 + $0x390] sm:$0xff]
    %v2488 = vld [vmem:[%s2372 + $0x398] sm:$0xff]
    %v2489 = vld [vmem:[%s2372 + $0x3a0] sm:$0xff]
    %v2490 = vld [vmem:[%s2372 + $0x3a8] sm:$0xff]
    %v2491 = vld [vmem:[%s2372 + $0x3b0] sm:$0xff]
    %v2492 = vld [vmem:[%s2372 + $0x3b8] sm:$0xff]
    %v2493 = vld [vmem:[%s2372 + $0x3c0] sm:$0xff]
    %v2494 = vld [vmem:[%s2372 + $0x3c8] sm:$0xff]
    %v2495 = vld [vmem:[%s2372 + $0x3d0] sm:$0xff]
    %v2496 = vld [vmem:[%s2372 + $0x3d8] sm:$0xff]
    %v2497 = vld [vmem:[%s2372 + $0x3e0] sm:$0xff]
    %v2498 = vld [vmem:[%s2372 + $0x3e8] sm:$0xff]
    %v2499 = vld [vmem:[%s2372 + $0x3f0] sm:$0xff]
    %v2500 = vld [vmem:[%s2372 + $0x3f8] sm:$0xff]
    %v2629 = vunpack.c.l.b16 %v2373
    %v2630 = vunpack.c.h.b16 %v2373
    %v2631 = vunpack.c.l.b16 %v2374
    %v2632 = vunpack.c.h.b16 %v2374
    %v2633 = vunpack.c.l.b16 %v2375
    %v2634 = vunpack.c.h.b16 %v2375
    %v2635 = vunpack.c.l.b16 %v2376
    %v2636 = vunpack.c.h.b16 %v2376
    %v2637 = vunpack.c.l.b16 %v2377
    %v2638 = vunpack.c.h.b16 %v2377
    %v2639 = vunpack.c.l.b16 %v2378
    %v2640 = vunpack.c.h.b16 %v2378
    %v2641 = vunpack.c.l.b16 %v2379
    %v2642 = vunpack.c.h.b16 %v2379
    %v2643 = vunpack.c.l.b16 %v2380
    %v2644 = vunpack.c.h.b16 %v2380
    %v2645 = vunpack.c.l.b16 %v2381
    %v2646 = vunpack.c.h.b16 %v2381
    %v2647 = vunpack.c.l.b16 %v2382
    %v2648 = vunpack.c.h.b16 %v2382
    %v2649 = vunpack.c.l.b16 %v2383
    %v2650 = vunpack.c.h.b16 %v2383
    %v2651 = vunpack.c.l.b16 %v2384
    %v2652 = vunpack.c.h.b16 %v2384
    %v2653 = vunpack.c.l.b16 %v2385
    %v2654 = vunpack.c.h.b16 %v2385
    %v2655 = vunpack.c.l.b16 %v2386
    %v2656 = vunpack.c.h.b16 %v2386
    %v2657 = vunpack.c.l.b16 %v2387
    %v2658 = vunpack.c.h.b16 %v2387
    %v2659 = vunpack.c.l.b16 %v2388
    %v2660 = vunpack.c.h.b16 %v2388
    %v2661 = vunpack.c.l.b16 %v2389
    %v2662 = vunpack.c.h.b16 %v2389
    %v2663 = vunpack.c.l.b16 %v2390
    %v2664 = vunpack.c.h.b16 %v2390
    %v2665 = vunpack.c.l.b16 %v2391
    %v2666 = vunpack.c.h.b16 %v2391
    %v2667 = vunpack.c.l.b16 %v2392
    %v2668 = vunpack.c.h.b16 %v2392
    %v2669 = vunpack.c.l.b16 %v2393
    %v2670 = vunpack.c.h.b16 %v2393
    %v2671 = vunpack.c.l.b16 %v2394
    %v2672 = vunpack.c.h.b16 %v2394
    %v2673 = vunpack.c.l.b16 %v2395
    %v2674 = vunpack.c.h.b16 %v2395
    %v2675 = vunpack.c.l.b16 %v2396
    %v2676 = vunpack.c.h.b16 %v2396
    %v2677 = vunpack.c.l.b16 %v2397
    %v2678 = vunpack.c.h.b16 %v2397
    %v2679 = vunpack.c.l.b16 %v2398
    %v2680 = vunpack.c.h.b16 %v2398
    %v2681 = vunpack.c.l.b16 %v2399
    %v2682 = vunpack.c.h.b16 %v2399
    %v2683 = vunpack.c.l.b16 %v2400
    %v2684 = vunpack.c.h.b16 %v2400
    %v2685 = vunpack.c.l.b16 %v2401
    %v2686 = vunpack.c.h.b16 %v2401
    %v2687 = vunpack.c.l.b16 %v2402
    %v2688 = vunpack.c.h.b16 %v2402
    %v2689 = vunpack.c.l.b16 %v2403
    %v2690 = vunpack.c.h.b16 %v2403
    %v2691 = vunpack.c.l.b16 %v2404
    %v2692 = vunpack.c.h.b16 %v2404
    %v2693 = vunpack.c.l.b16 %v2405
    %v2694 = vunpack.c.h.b16 %v2405
    %v2695 = vunpack.c.l.b16 %v2406
    %v2696 = vunpack.c.h.b16 %v2406
    %v2697 = vunpack.c.l.b16 %v2407
    %v2698 = vunpack.c.h.b16 %v2407
    %v2699 = vunpack.c.l.b16 %v2408
    %v2700 = vunpack.c.h.b16 %v2408
    %v2701 = vunpack.c.l.b16 %v2409
    %v2702 = vunpack.c.h.b16 %v2409
    %v2703 = vunpack.c.l.b16 %v2410
    %v2704 = vunpack.c.h.b16 %v2410
    %v2705 = vunpack.c.l.b16 %v2411
    %v2706 = vunpack.c.h.b16 %v2411
    %v2707 = vunpack.c.l.b16 %v2412
    %v2708 = vunpack.c.h.b16 %v2412
    %v2709 = vunpack.c.l.b16 %v2413
    %v2710 = vunpack.c.h.b16 %v2413
    %v2711 = vunpack.c.l.b16 %v2414
    %v2712 = vunpack.c.h.b16 %v2414
    %v2713 = vunpack.c.l.b16 %v2415
    %v2714 = vunpack.c.h.b16 %v2415
    %v2715 = vunpack.c.l.b16 %v2416
    %v2716 = vunpack.c.h.b16 %v2416
    %v2717 = vunpack.c.l.b16 %v2417
    %v2718 = vunpack.c.h.b16 %v2417
    %v2719 = vunpack.c.l.b16 %v2418
    %v2720 = vunpack.c.h.b16 %v2418
    %v2721 = vunpack.c.l.b16 %v2419
    %v2722 = vunpack.c.h.b16 %v2419
    %v2723 = vunpack.c.l.b16 %v2420
    %v2724 = vunpack.c.h.b16 %v2420
    %v2725 = vunpack.c.l.b16 %v2421
    %v2726 = vunpack.c.h.b16 %v2421
    %v2727 = vunpack.c.l.b16 %v2422
    %v2728 = vunpack.c.h.b16 %v2422
    %v2729 = vunpack.c.l.b16 %v2423
    %v2730 = vunpack.c.h.b16 %v2423
    %v2731 = vunpack.c.l.b16 %v2424
    %v2732 = vunpack.c.h.b16 %v2424
    %v2733 = vunpack.c.l.b16 %v2425
    %v2734 = vunpack.c.h.b16 %v2425
    %v2735 = vunpack.c.l.b16 %v2426
    %v2736 = vunpack.c.h.b16 %v2426
    %v2737 = vunpack.c.l.b16 %v2427
    %v2738 = vunpack.c.h.b16 %v2427
    %v2739 = vunpack.c.l.b16 %v2428
    %v2740 = vunpack.c.h.b16 %v2428
    %v2741 = vunpack.c.l.b16 %v2429
    %v2742 = vunpack.c.h.b16 %v2429
    %v2743 = vunpack.c.l.b16 %v2430
    %v2744 = vunpack.c.h.b16 %v2430
    %v2745 = vunpack.c.l.b16 %v2431
    %v2746 = vunpack.c.h.b16 %v2431
    %v2747 = vunpack.c.l.b16 %v2432
    %v2748 = vunpack.c.h.b16 %v2432
    %v2749 = vunpack.c.l.b16 %v2433
    %v2750 = vunpack.c.h.b16 %v2433
    %v2751 = vunpack.c.l.b16 %v2434
    %v2752 = vunpack.c.h.b16 %v2434
    %v2753 = vunpack.c.l.b16 %v2435
    %v2754 = vunpack.c.h.b16 %v2435
    %v2755 = vunpack.c.l.b16 %v2436
    %v2756 = vunpack.c.h.b16 %v2436
    %v2757 = vunpack.c.l.b16 %v2437
    %v2758 = vunpack.c.h.b16 %v2437
    %v2759 = vunpack.c.l.b16 %v2438
    %v2760 = vunpack.c.h.b16 %v2438
    %v2761 = vunpack.c.l.b16 %v2439
    %v2762 = vunpack.c.h.b16 %v2439
    %v2763 = vunpack.c.l.b16 %v2440
    %v2764 = vunpack.c.h.b16 %v2440
    %v2765 = vunpack.c.l.b16 %v2441
    %v2766 = vunpack.c.h.b16 %v2441
    %v2767 = vunpack.c.l.b16 %v2442
    %v2768 = vunpack.c.h.b16 %v2442
    %v2769 = vunpack.c.l.b16 %v2443
    %v2770 = vunpack.c.h.b16 %v2443
    %v2771 = vunpack.c.l.b16 %v2444
    %v2772 = vunpack.c.h.b16 %v2444
    %v2773 = vunpack.c.l.b16 %v2445
    %v2774 = vunpack.c.h.b16 %v2445
    %v2775 = vunpack.c.l.b16 %v2446
    %v2776 = vunpack.c.h.b16 %v2446
    %v2777 = vunpack.c.l.b16 %v2447
    %v2778 = vunpack.c.h.b16 %v2447
    %v2779 = vunpack.c.l.b16 %v2448
    %v2780 = vunpack.c.h.b16 %v2448
    %v2781 = vunpack.c.l.b16 %v2449
    %v2782 = vunpack.c.h.b16 %v2449
    %v2783 = vunpack.c.l.b16 %v2450
    %v2784 = vunpack.c.h.b16 %v2450
    %v2785 = vunpack.c.l.b16 %v2451
    %v2786 = vunpack.c.h.b16 %v2451
    %v2787 = vunpack.c.l.b16 %v2452
    %v2788 = vunpack.c.h.b16 %v2452
    %v2789 = vunpack.c.l.b16 %v2453
    %v2790 = vunpack.c.h.b16 %v2453
    %v2791 = vunpack.c.l.b16 %v2454
    %v2792 = vunpack.c.h.b16 %v2454
    %v2793 = vunpack.c.l.b16 %v2455
    %v2794 = vunpack.c.h.b16 %v2455
    %v2795 = vunpack.c.l.b16 %v2456
    %v2796 = vunpack.c.h.b16 %v2456
    %v2797 = vunpack.c.l.b16 %v2457
    %v2798 = vunpack.c.h.b16 %v2457
    %v2799 = vunpack.c.l.b16 %v2458
    %v2800 = vunpack.c.h.b16 %v2458
    %v2801 = vunpack.c.l.b16 %v2459
    %v2802 = vunpack.c.h.b16 %v2459
    %v2803 = vunpack.c.l.b16 %v2460
    %v2804 = vunpack.c.h.b16 %v2460
    %v2805 = vunpack.c.l.b16 %v2461
    %v2806 = vunpack.c.h.b16 %v2461
    %v2807 = vunpack.c.l.b16 %v2462
    %v2808 = vunpack.c.h.b16 %v2462
    %v2809 = vunpack.c.l.b16 %v2463
    %v2810 = vunpack.c.h.b16 %v2463
    %v2811 = vunpack.c.l.b16 %v2464
    %v2812 = vunpack.c.h.b16 %v2464
    %v2813 = vunpack.c.l.b16 %v2465
    %v2814 = vunpack.c.h.b16 %v2465
    %v2815 = vunpack.c.l.b16 %v2466
    %v2816 = vunpack.c.h.b16 %v2466
    %v2817 = vunpack.c.l.b16 %v2467
    %v2818 = vunpack.c.h.b16 %v2467
    %v2819 = vunpack.c.l.b16 %v2468
    %v2820 = vunpack.c.h.b16 %v2468
    %v2821 = vunpack.c.l.b16 %v2469
    %v2822 = vunpack.c.h.b16 %v2469
    %v2823 = vunpack.c.l.b16 %v2470
    %v2824 = vunpack.c.h.b16 %v2470
    %v2825 = vunpack.c.l.b16 %v2471
    %v2826 = vunpack.c.h.b16 %v2471
    %v2827 = vunpack.c.l.b16 %v2472
    %v2828 = vunpack.c.h.b16 %v2472
    %v2829 = vunpack.c.l.b16 %v2473
    %v2830 = vunpack.c.h.b16 %v2473
    %v2831 = vunpack.c.l.b16 %v2474
    %v2832 = vunpack.c.h.b16 %v2474
    %v2833 = vunpack.c.l.b16 %v2475
    %v2834 = vunpack.c.h.b16 %v2475
    %v2835 = vunpack.c.l.b16 %v2476
    %v2836 = vunpack.c.h.b16 %v2476
    %v2837 = vunpack.c.l.b16 %v2477
    %v2838 = vunpack.c.h.b16 %v2477
    %v2839 = vunpack.c.l.b16 %v2478
    %v2840 = vunpack.c.h.b16 %v2478
    %v2841 = vunpack.c.l.b16 %v2479
    %v2842 = vunpack.c.h.b16 %v2479
    %v2843 = vunpack.c.l.b16 %v2480
    %v2844 = vunpack.c.h.b16 %v2480
    %v2845 = vunpack.c.l.b16 %v2481
    %v2846 = vunpack.c.h.b16 %v2481
    %v2847 = vunpack.c.l.b16 %v2482
    %v2848 = vunpack.c.h.b16 %v2482
    %v2849 = vunpack.c.l.b16 %v2483
    %v2850 = vunpack.c.h.b16 %v2483
    %v2851 = vunpack.c.l.b16 %v2484
    %v2852 = vunpack.c.h.b16 %v2484
    %v2853 = vunpack.c.l.b16 %v2485
    %v2854 = vunpack.c.h.b16 %v2485
    %v2855 = vunpack.c.l.b16 %v2486
    %v2856 = vunpack.c.h.b16 %v2486
    %v2857 = vunpack.c.l.b16 %v2487
    %v2858 = vunpack.c.h.b16 %v2487
    %v2859 = vunpack.c.l.b16 %v2488
    %v2860 = vunpack.c.h.b16 %v2488
    %v2861 = vunpack.c.l.b16 %v2489
    %v2862 = vunpack.c.h.b16 %v2489
    %v2863 = vunpack.c.l.b16 %v2490
    %v2864 = vunpack.c.h.b16 %v2490
    %v2865 = vunpack.c.l.b16 %v2491
    %v2866 = vunpack.c.h.b16 %v2491
    %v2867 = vunpack.c.l.b16 %v2492
    %v2868 = vunpack.c.h.b16 %v2492
    %v2869 = vunpack.c.l.b16 %v2493
    %v2870 = vunpack.c.h.b16 %v2493
    %v2871 = vunpack.c.l.b16 %v2494
    %v2872 = vunpack.c.h.b16 %v2494
    %v2873 = vunpack.c.l.b16 %v2495
    %v2874 = vunpack.c.h.b16 %v2495
    %v2875 = vunpack.c.l.b16 %v2496
    %v2876 = vunpack.c.h.b16 %v2496
    %v2877 = vunpack.c.l.b16 %v2497
    %v2878 = vunpack.c.h.b16 %v2497
    %v2879 = vunpack.c.l.b16 %v2498
    %v2880 = vunpack.c.h.b16 %v2498
    %v2881 = vunpack.c.l.b16 %v2499
    %v2882 = vunpack.c.h.b16 %v2499
    %v2883 = vunpack.c.l.b16 %v2500
    %v2884 = vunpack.c.h.b16 %v2500
    %v2885 = vpack.c.b16 %v2633, %v2629
    %v2886 = vpack.c.b16 %v2634, %v2630
    %v2887 = vpack.c.b16 %v2635, %v2631
    %v2888 = vpack.c.b16 %v2636, %v2632
    %v2889 = vpack.c.b16 %v2641, %v2637
    %v2890 = vpack.c.b16 %v2642, %v2638
    %v2891 = vpack.c.b16 %v2643, %v2639
    %v2892 = vpack.c.b16 %v2644, %v2640
    %v2893 = vpack.c.b16 %v2649, %v2645
    %v2894 = vpack.c.b16 %v2650, %v2646
    %v2895 = vpack.c.b16 %v2651, %v2647
    %v2896 = vpack.c.b16 %v2652, %v2648
    %v2897 = vpack.c.b16 %v2657, %v2653
    %v2898 = vpack.c.b16 %v2658, %v2654
    %v2899 = vpack.c.b16 %v2659, %v2655
    %v2900 = vpack.c.b16 %v2660, %v2656
    %v2901 = vpack.c.b16 %v2665, %v2661
    %v2902 = vpack.c.b16 %v2666, %v2662
    %v2903 = vpack.c.b16 %v2667, %v2663
    %v2904 = vpack.c.b16 %v2668, %v2664
    %v2905 = vpack.c.b16 %v2673, %v2669
    %v2906 = vpack.c.b16 %v2674, %v2670
    %v2907 = vpack.c.b16 %v2675, %v2671
    %v2908 = vpack.c.b16 %v2676, %v2672
    %v2909 = vpack.c.b16 %v2681, %v2677
    %v2910 = vpack.c.b16 %v2682, %v2678
    %v2911 = vpack.c.b16 %v2683, %v2679
    %v2912 = vpack.c.b16 %v2684, %v2680
    %v2913 = vpack.c.b16 %v2689, %v2685
    %v2914 = vpack.c.b16 %v2690, %v2686
    %v2915 = vpack.c.b16 %v2691, %v2687
    %v2916 = vpack.c.b16 %v2692, %v2688
    %v2917 = vpack.c.b16 %v2697, %v2693
    %v2918 = vpack.c.b16 %v2698, %v2694
    %v2919 = vpack.c.b16 %v2699, %v2695
    %v2920 = vpack.c.b16 %v2700, %v2696
    %v2921 = vpack.c.b16 %v2705, %v2701
    %v2922 = vpack.c.b16 %v2706, %v2702
    %v2923 = vpack.c.b16 %v2707, %v2703
    %v2924 = vpack.c.b16 %v2708, %v2704
    %v2925 = vpack.c.b16 %v2713, %v2709
    %v2926 = vpack.c.b16 %v2714, %v2710
    %v2927 = vpack.c.b16 %v2715, %v2711
    %v2928 = vpack.c.b16 %v2716, %v2712
    %v2929 = vpack.c.b16 %v2721, %v2717
    %v2930 = vpack.c.b16 %v2722, %v2718
    %v2931 = vpack.c.b16 %v2723, %v2719
    %v2932 = vpack.c.b16 %v2724, %v2720
    %v2933 = vpack.c.b16 %v2729, %v2725
    %v2934 = vpack.c.b16 %v2730, %v2726
    %v2935 = vpack.c.b16 %v2731, %v2727
    %v2936 = vpack.c.b16 %v2732, %v2728
    %v2937 = vpack.c.b16 %v2737, %v2733
    %v2938 = vpack.c.b16 %v2738, %v2734
    %v2939 = vpack.c.b16 %v2739, %v2735
    %v2940 = vpack.c.b16 %v2740, %v2736
    %v2941 = vpack.c.b16 %v2745, %v2741
    %v2942 = vpack.c.b16 %v2746, %v2742
    %v2943 = vpack.c.b16 %v2747, %v2743
    %v2944 = vpack.c.b16 %v2748, %v2744
    %v2945 = vpack.c.b16 %v2753, %v2749
    %v2946 = vpack.c.b16 %v2754, %v2750
    %v2947 = vpack.c.b16 %v2755, %v2751
    %v2948 = vpack.c.b16 %v2756, %v2752
    %v2949 = vpack.c.b16 %v2761, %v2757
    %v2950 = vpack.c.b16 %v2762, %v2758
    %v2951 = vpack.c.b16 %v2763, %v2759
    %v2952 = vpack.c.b16 %v2764, %v2760
    %v2953 = vpack.c.b16 %v2769, %v2765
    %v2954 = vpack.c.b16 %v2770, %v2766
    %v2955 = vpack.c.b16 %v2771, %v2767
    %v2956 = vpack.c.b16 %v2772, %v2768
    %v2957 = vpack.c.b16 %v2777, %v2773
    %v2958 = vpack.c.b16 %v2778, %v2774
    %v2959 = vpack.c.b16 %v2779, %v2775
    %v2960 = vpack.c.b16 %v2780, %v2776
    %v2961 = vpack.c.b16 %v2785, %v2781
    %v2962 = vpack.c.b16 %v2786, %v2782
    %v2963 = vpack.c.b16 %v2787, %v2783
    %v2964 = vpack.c.b16 %v2788, %v2784
    %v2965 = vpack.c.b16 %v2793, %v2789
    %v2966 = vpack.c.b16 %v2794, %v2790
    %v2967 = vpack.c.b16 %v2795, %v2791
    %v2968 = vpack.c.b16 %v2796, %v2792
    %v2969 = vpack.c.b16 %v2801, %v2797
    %v2970 = vpack.c.b16 %v2802, %v2798
    %v2971 = vpack.c.b16 %v2803, %v2799
    %v2972 = vpack.c.b16 %v2804, %v2800
    %v2973 = vpack.c.b16 %v2809, %v2805
    %v2974 = vpack.c.b16 %v2810, %v2806
    %v2975 = vpack.c.b16 %v2811, %v2807
    %v2976 = vpack.c.b16 %v2812, %v2808
    %v2977 = vpack.c.b16 %v2817, %v2813
    %v2978 = vpack.c.b16 %v2818, %v2814
    %v2979 = vpack.c.b16 %v2819, %v2815
    %v2980 = vpack.c.b16 %v2820, %v2816
    %v2981 = vpack.c.b16 %v2825, %v2821
    %v2982 = vpack.c.b16 %v2826, %v2822
    %v2983 = vpack.c.b16 %v2827, %v2823
    %v2984 = vpack.c.b16 %v2828, %v2824
    %v2985 = vpack.c.b16 %v2833, %v2829
    %v2986 = vpack.c.b16 %v2834, %v2830
    %v2987 = vpack.c.b16 %v2835, %v2831
    %v2988 = vpack.c.b16 %v2836, %v2832
    %v2989 = vpack.c.b16 %v2841, %v2837
    %v2990 = vpack.c.b16 %v2842, %v2838
    %v2991 = vpack.c.b16 %v2843, %v2839
    %v2992 = vpack.c.b16 %v2844, %v2840
    %v2993 = vpack.c.b16 %v2849, %v2845
    %v2994 = vpack.c.b16 %v2850, %v2846
    %v2995 = vpack.c.b16 %v2851, %v2847
    %v2996 = vpack.c.b16 %v2852, %v2848
    %v2997 = vpack.c.b16 %v2857, %v2853
    %v2998 = vpack.c.b16 %v2858, %v2854
    %v2999 = vpack.c.b16 %v2859, %v2855
    %v3000 = vpack.c.b16 %v2860, %v2856
    %v3001 = vpack.c.b16 %v2865, %v2861
    %v3002 = vpack.c.b16 %v2866, %v2862
    %v3003 = vpack.c.b16 %v2867, %v2863
    %v3004 = vpack.c.b16 %v2868, %v2864
    %v3005 = vpack.c.b16 %v2873, %v2869
    %v3006 = vpack.c.b16 %v2874, %v2870
    %v3007 = vpack.c.b16 %v2875, %v2871
    %v3008 = vpack.c.b16 %v2876, %v2872
    %v3009 = vpack.c.b16 %v2881, %v2877
    %v3010 = vpack.c.b16 %v2882, %v2878
    %v3011 = vpack.c.b16 %v2883, %v2879
    %v3012 = vpack.c.b16 %v2884, %v2880
    %3141 = vmatprep.subr.bf16.mxu0 %v2886
    %3142 = vmatpush1.bf16.msra.mxu0 %v2885
    %3143 = vmatprep.subr.bf16.mxu0 %v2890
    %3144 = vmatpush1.bf16.msra.mxu0 %v2889
    %3145 = vmatprep.subr.bf16.mxu0 %v2894
    %3146 = vmatpush1.bf16.msra.mxu0 %v2893
    %3147 = vmatprep.subr.bf16.mxu0 %v2898
    %3148 = vmatpush1.bf16.msra.mxu0 %v2897
    %3149 = vmatprep.subr.bf16.mxu0 %v2902
    %3150 = vmatpush1.bf16.msra.mxu0 %v2901
    %3151 = vmatprep.subr.bf16.mxu0 %v2906
    %3152 = vmatpush1.bf16.msra.mxu0 %v2905
    %3153 = vmatprep.subr.bf16.mxu0 %v2910
    %3154 = vmatpush1.bf16.msra.mxu0 %v2909
    %3155 = vmatprep.subr.bf16.mxu0 %v2914
    %3156 = vmatpush1.bf16.msra.mxu0 %v2913
    %3157 = vmatprep.subr.bf16.mxu0 %v2918
    %3158 = vmatpush1.bf16.msra.mxu0 %v2917
    %3159 = vmatprep.subr.bf16.mxu0 %v2922
    %3160 = vmatpush1.bf16.msra.mxu0 %v2921
    %3161 = vmatprep.subr.bf16.mxu0 %v2926
    %3162 = vmatpush1.bf16.msra.mxu0 %v2925
    %3163 = vmatprep.subr.bf16.mxu0 %v2930
    %3164 = vmatpush1.bf16.msra.mxu0 %v2929
    %3165 = vmatprep.subr.bf16.mxu0 %v2934
    %3166 = vmatpush1.bf16.msra.mxu0 %v2933
    %3167 = vmatprep.subr.bf16.mxu0 %v2938
    %3168 = vmatpush1.bf16.msra.mxu0 %v2937
    %3169 = vmatprep.subr.bf16.mxu0 %v2942
    %3170 = vmatpush1.bf16.msra.mxu0 %v2941
    %3171 = vmatprep.subr.bf16.mxu0 %v2946
    %3172 = vmatpush1.bf16.msra.mxu0 %v2945
    %3173 = vmatprep.mubr.bf16.mxu0 %v2369
    %3174 = vmatmul.mubr.bf16.gmra.mrb[0].mxu0 %v2368
    %v3175 = vpop.f32.mrb[0].mxu0
    %v3176 = vadd.f32 0.0, %v3175
    %v3177 = vpop.f32.mrb[0].mxu0
    %v3178 = vadd.f32 0.0, %v3177
    %v3179 = vpop.f32.mrb[0].mxu0
    %v3180 = vpop.f32.mrb[0].mxu0
    %3181 = vdwg.mxu0
    %3182 = vmatprep.subr.bf16.mxu0 %v2950
    %3183 = vmatpush1.bf16.msra.mxu0 %v2949
    %3184 = vmatprep.subr.bf16.mxu0 %v2954
    %3185 = vmatpush1.bf16.msra.mxu0 %v2953
    %3186 = vmatprep.subr.bf16.mxu0 %v2958
    %3187 = vmatpush1.bf16.msra.mxu0 %v2957
    %3188 = vmatprep.subr.bf16.mxu0 %v2962
    %3189 = vmatpush1.bf16.msra.mxu0 %v2961
    %3190 = vmatprep.subr.bf16.mxu0 %v2966
    %3191 = vmatpush1.bf16.msra.mxu0 %v2965
    %3192 = vmatprep.subr.bf16.mxu0 %v2970
    %3193 = vmatpush1.bf16.msra.mxu0 %v2969
    %3194 = vmatprep.subr.bf16.mxu0 %v2974
    %3195 = vmatpush1.bf16.msra.mxu0 %v2973
    %3196 = vmatprep.subr.bf16.mxu0 %v2978
    %3197 = vmatpush1.bf16.msra.mxu0 %v2977
    %3198 = vmatprep.subr.bf16.mxu0 %v2982
    %3199 = vmatpush1.bf16.msra.mxu0 %v2981
    %3200 = vmatprep.subr.bf16.mxu0 %v2986
    %3201 = vmatpush1.bf16.msra.mxu0 %v2985
    %3202 = vmatprep.subr.bf16.mxu0 %v2990
    %3203 = vmatpush1.bf16.msra.mxu0 %v2989
    %3204 = vmatprep.subr.bf16.mxu0 %v2994
    %3205 = vmatpush1.bf16.msra.mxu0 %v2993
    %3206 = vmatprep.subr.bf16.mxu0 %v2998
    %3207 = vmatpush1.bf16.msra.mxu0 %v2997
    %3208 = vmatprep.subr.bf16.mxu0 %v3002
    %3209 = vmatpush1.bf16.msra.mxu0 %v3001
    %3210 = vmatprep.subr.bf16.mxu0 %v3006
    %3211 = vmatpush1.bf16.msra.mxu0 %v3005
    %3212 = vmatprep.subr.bf16.mxu0 %v3010
    %3213 = vmatpush1.bf16.msra.mxu0 %v3009
    %3214 = vmatprep.mubr.bf16.mxu0 %v2371
    %3215 = vmatmul.mubr.bf16.gmra.mrb[0].mxu0 %v2370
    %v3216 = vpop.f32.mrb[0].mxu0
    %v3217 = vadd.f32 %v3176, %v3216
    %v3218 = vpop.f32.mrb[0].mxu0
    %v3219 = vadd.f32 %v3178, %v3218
    %v3220 = vpop.f32.mrb[0].mxu0
    %v3221 = vpop.f32.mrb[0].mxu0
    %3222 = vdwg.mxu0
    %3223 = vmatprep.subr.bf16.mxu0 %v2888
    %3224 = vmatpush1.bf16.msra.mxu0 %v2887
    %3225 = vmatprep.subr.bf16.mxu0 %v2892
    %3226 = vmatpush1.bf16.msra.mxu0 %v2891
    %3227 = vmatprep.subr.bf16.mxu0 %v2896
    %3228 = vmatpush1.bf16.msra.mxu0 %v2895
    %3229 = vmatprep.subr.bf16.mxu0 %v2900
    %3230 = vmatpush1.bf16.msra.mxu0 %v2899
    %3231 = vmatprep.subr.bf16.mxu0 %v2904
    %3232 = vmatpush1.bf16.msra.mxu0 %v2903
    %3233 = vmatprep.subr.bf16.mxu0 %v2908
    %3234 = vmatpush1.bf16.msra.mxu0 %v2907
    %3235 = vmatprep.subr.bf16.mxu0 %v2912
    %3236 = vmatpush1.bf16.msra.mxu0 %v2911
    %3237 = vmatprep.subr.bf16.mxu0 %v2916
    %3238 = vmatpush1.bf16.msra.mxu0 %v2915
    %3239 = vmatprep.subr.bf16.mxu0 %v2920
    %3240 = vmatpush1.bf16.msra.mxu0 %v2919
    %3241 = vmatprep.subr.bf16.mxu0 %v2924
    %3242 = vmatpush1.bf16.msra.mxu0 %v2923
    %3243 = vmatprep.subr.bf16.mxu0 %v2928
    %3244 = vmatpush1.bf16.msra.mxu0 %v2927
    %3245 = vmatprep.subr.bf16.mxu0 %v2932
    %3246 = vmatpush1.bf16.msra.mxu0 %v2931
    %3247 = vmatprep.subr.bf16.mxu0 %v2936
    %3248 = vmatpush1.bf16.msra.mxu0 %v2935
    %3249 = vmatprep.subr.bf16.mxu0 %v2940
    %3250 = vmatpush1.bf16.msra.mxu0 %v2939
    %3251 = vmatprep.subr.bf16.mxu0 %v2944
    %3252 = vmatpush1.bf16.msra.mxu0 %v2943
    %3253 = vmatprep.subr.bf16.mxu0 %v2948
    %3254 = vmatpush1.bf16.msra.mxu0 %v2947
    %3255 = vmatprep.mubr.bf16.mxu0 %v2369
    %3256 = vmatmul.mubr.bf16.gmra.mrb[0].mxu0 %v2368
    %v3257 = vpop.f32.mrb[0].mxu0
    %v3258 = vadd.f32 0.0, %v3257
    %v3259 = vpop.f32.mrb[0].mxu0
    %v3260 = vadd.f32 0.0, %v3259
    %v3261 = vpop.f32.mrb[0].mxu0
    %v3262 = vpop.f32.mrb[0].mxu0
    %3263 = vdwg.mxu0
    %3264 = vmatprep.subr.bf16.mxu0 %v2952
    %3265 = vmatpush1.bf16.msra.mxu0 %v2951
    %3266 = vmatprep.subr.bf16.mxu0 %v2956
    %3267 = vmatpush1.bf16.msra.mxu0 %v2955
    %3268 = vmatprep.subr.bf16.mxu0 %v2960
    %3269 = vmatpush1.bf16.msra.mxu0 %v2959
    %3270 = vmatprep.subr.bf16.mxu0 %v2964
    %3271 = vmatpush1.bf16.msra.mxu0 %v2963
    %3272 = vmatprep.subr.bf16.mxu0 %v2968
    %3273 = vmatpush1.bf16.msra.mxu0 %v2967
    %3274 = vmatprep.subr.bf16.mxu0 %v2972
    %3275 = vmatpush1.bf16.msra.mxu0 %v2971
    %3276 = vmatprep.subr.bf16.mxu0 %v2976
    %3277 = vmatpush1.bf16.msra.mxu0 %v2975
    %3278 = vmatprep.subr.bf16.mxu0 %v2980
    %3279 = vmatpush1.bf16.msra.mxu0 %v2979
    %3280 = vmatprep.subr.bf16.mxu0 %v2984
    %3281 = vmatpush1.bf16.msra.mxu0 %v2983
    %3282 = vmatprep.subr.bf16.mxu0 %v2988
    %3283 = vmatpush1.bf16.msra.mxu0 %v2987
    %3284 = vmatprep.subr.bf16.mxu0 %v2992
    %3285 = vmatpush1.bf16.msra.mxu0 %v2991
    %3286 = vmatprep.subr.bf16.mxu0 %v2996
    %3287 = vmatpush1.bf16.msra.mxu0 %v2995
    %3288 = vmatprep.subr.bf16.mxu0 %v3000
    %3289 = vmatpush1.bf16.msra.mxu0 %v2999
    %3290 = vmatprep.subr.bf16.mxu0 %v3004
    %3291 = vmatpush1.bf16.msra.mxu0 %v3003
    %3292 = vmatprep.subr.bf16.mxu0 %v3008
    %3293 = vmatpush1.bf16.msra.mxu0 %v3007
    %3294 = vmatprep.subr.bf16.mxu0 %v3012
    %3295 = vmatpush1.bf16.msra.mxu0 %v3011
    %3296 = vmatprep.mubr.bf16.mxu0 %v2371
    %3297 = vmatmul.mubr.bf16.gmra.mrb[0].mxu0 %v2370
    %v3298 = vpop.f32.mrb[0].mxu0
    %v3299 = vadd.f32 %v3258, %v3298
    %v3300 = vpop.f32.mrb[0].mxu0
    %v3301 = vadd.f32 %v3260, %v3300
    %v3302 = vpop.f32.mrb[0].mxu0
    %v3303 = vpop.f32.mrb[0].mxu0
    %3304 = vdwg.mxu0
    %v3305 = vrot.slane %v3217, 4
    %v3306 = vadd.f32 %v3217, %v3305
    %v3307 = vrot.slane %v3306, 2
    %v3308 = vadd.f32 %v3306, %v3307
    %v3309 = vrot.slane %v3308, 1
    %v3310 = vadd.f32 %v3308, %v3309
    %v3311 = vrot.slane %v3219, 4
    %v3312 = vadd.f32 %v3219, %v3311
    %v3313 = vrot.slane %v3312, 2
    %v3314 = vadd.f32 %v3312, %v3313
    %v3315 = vrot.slane %v3314, 1
    %v3316 = vadd.f32 %v3314, %v3315
    %v3317 = vrot.slane %v3299, 4
    %v3318 = vadd.f32 %v3299, %v3317
    %v3319 = vrot.slane %v3318, 2
    %v3320 = vadd.f32 %v3318, %v3319
    %v3321 = vrot.slane %v3320, 1
    %v3322 = vadd.f32 %v3320, %v3321
    %v3323 = vrot.slane %v3301, 4
    %v3324 = vadd.f32 %v3301, %v3323
    %v3325 = vrot.slane %v3324, 2
    %v3326 = vadd.f32 %v3324, %v3325
    %v3327 = vrot.slane %v3326, 1
    %v3328 = vadd.f32 %v3326, %v3327
    %v3329 = vmul.f32 %v3217, %v3217
    %v3330 = vmul.f32 %v3219, %v3219
    %v3331 = vmul.f32 %v3299, %v3299
    %v3332 = vmul.f32 %v3301, %v3301
    %v3333 = vrot.slane %v3329, 4
    %v3334 = vadd.f32 %v3329, %v3333
    %v3335 = vrot.slane %v3334, 2
    %v3336 = vadd.f32 %v3334, %v3335
    %v3337 = vrot.slane %v3336, 1
    %v3338 = vadd.f32 %v3336, %v3337
    %v3339 = vrot.slane %v3330, 4
    %v3340 = vadd.f32 %v3330, %v3339
    %v3341 = vrot.slane %v3340, 2
    %v3342 = vadd.f32 %v3340, %v3341
    %v3343 = vrot.slane %v3342, 1
    %v3344 = vadd.f32 %v3342, %v3343
    %v3345 = vrot.slane %v3331, 4
    %v3346 = vadd.f32 %v3331, %v3345
    %v3347 = vrot.slane %v3346, 2
    %v3348 = vadd.f32 %v3346, %v3347
    %v3349 = vrot.slane %v3348, 1
    %v3350 = vadd.f32 %v3348, %v3349
    %v3351 = vrot.slane %v3332, 4
    %v3352 = vadd.f32 %v3332, %v3351
    %v3353 = vrot.slane %v3352, 2
    %v3354 = vadd.f32 %v3352, %v3353
    %v3355 = vrot.slane %v3354, 1
    %v3356 = vadd.f32 %v3354, %v3355
    %v3357 = vmul.f32 %v3310, 0.125
    %v3358 = vmul.f32 %v3316, 0.125
    %v3359 = vmul.f32 %v3322, 0.125
    %v3360 = vmul.f32 %v3328, 0.125
    %v3361 = vmul.f32 %v3338, 0.125
    %v3362 = vmul.f32 %v3344, 0.125
    %v3363 = vmul.f32 %v3350, 0.125
    %v3364 = vmul.f32 %v3356, 0.125
    %v3365 = vmul.f32 %v3357, %v3357
    %v3366 = vmul.f32 %v3358, %v3358
    %v3367 = vmul.f32 %v3359, %v3359
    %v3368 = vmul.f32 %v3360, %v3360
    %v3369 = vsub.f32 %v3361, %v3365
    %v3370 = vsub.f32 %v3362, %v3366
    %v3371 = vsub.f32 %v3363, %v3367
    %v3372 = vsub.f32 %v3364, %v3368
    %v3373 = vmax.f32 %v3369, 0.0
    %v3374 = vmax.f32 %v3370, 0.0
    %v3375 = vmax.f32 %v3371, 0.0
    %v3376 = vmax.f32 %v3372, 0.0
    %s3377 = scalar_lea.vmem [#allocation7], 8
    %v3378 = vld [vmem:[%s3377] sm:$0xf]
    %v3379 = vadd.f32 %v3373, 1e-05
    %v3380 = vadd.f32 %v3374, 1e-05
    %v3381 = vadd.f32 %v3375, 1e-05
    %v3382 = vadd.f32 %v3376, 1e-05
    %v3383 = vrsqrt.pop %v3379
    %v3384 = vrsqrt.pop %v3380
    %v3385 = vrsqrt.pop %v3381
    %v3386 = vrsqrt.pop %v3382
    %v3391 = vcombine.low %v3383, %v3384
    %v3392 = vcombine.low %v3385, %v3386
    %v3394 = vunpack.c.l.s4 1966171168
    %v3395 = vunpack.c.0.s8 %v3394
    %v3396 = vlaneseq
    %v3397 = vshrl.u32 %v3396, 7
    %v3398 = vsub.s32 %v3395, %v3397
    %v3399 = vrot.slane %v3391, %v3398
    %v3401 = vunpack.c.l.s4 1966171168
    %v3402 = vunpack.c.0.s8 %v3401
    %v3403 = vlaneseq
    %v3404 = vshrl.u32 %v3403, 7
    %v3405 = vsub.s32 %v3402, %v3404
    %v3406 = vrot.slane %v3392, %v3405
    %v3407 = vcombine.low %v3399, %v3406
    %v3409 = vunpack.c.l.s4 1966171168
    %v3410 = vunpack.c.0.s8 %v3409
    %v3411 = vlaneseq
    %v3412 = vshrl.u32 %v3411, 7
    %v3413 = vsub.s32 %v3410, %v3412
    %v3414 = vrot.slane %v3407, %v3413
    %v3416 = vmul.f32 %v3378, %v3414
    %s3417 = scalar_lea.vmem [#allocation8], 8
    %v3418 = vld [vmem:[%s3417] sm:$0xf]
    %v3420 = vlaneseq
    %v3421 = vshrl.u32 %v3420, 7
    %v3422 = vsub.s32 0, %v3421
    %v3423 = vrot.slane %v3416, %v3422
    %v3424 = vlaneseq
    %v3425 = vshrl.u32 %v3424, 7
    %v3426 = vsub.s32 1, %v3425
    %v3427 = vrot.slane %v3416, %v3426
    %v3428 = vlaneseq
    %v3429 = vshrl.u32 %v3428, 7
    %v3430 = vsub.s32 2, %v3429
    %v3431 = vrot.slane %v3416, %v3430
    %v3432 = vlaneseq
    %v3433 = vshrl.u32 %v3432, 7
    %v3434 = vsub.s32 3, %v3433
    %v3435 = vrot.slane %v3416, %v3434
    %v3440 = vmul.f32 %v3357, %v3423
    %v3441 = vmul.f32 %v3358, %v3427
    %v3442 = vmul.f32 %v3359, %v3431
    %v3443 = vmul.f32 %v3360, %v3435
    %v3448 = vcombine.low %v3440, %v3441
    %v3449 = vcombine.low %v3442, %v3443
    %v3451 = vunpack.c.l.s4 1966171168
    %v3452 = vunpack.c.0.s8 %v3451
    %v3453 = vlaneseq
    %v3454 = vshrl.u32 %v3453, 7
    %v3455 = vsub.s32 %v3452, %v3454
    %v3456 = vrot.slane %v3448, %v3455
    %v3458 = vunpack.c.l.s4 1966171168
    %v3459 = vunpack.c.0.s8 %v3458
    %v3460 = vlaneseq
    %v3461 = vshrl.u32 %v3460, 7
    %v3462 = vsub.s32 %v3459, %v3461
    %v3463 = vrot.slane %v3449, %v3462
    %v3464 = vcombine.low %v3456, %v3463
    %v3466 = vunpack.c.l.s4 1966171168
    %v3467 = vunpack.c.0.s8 %v3466
    %v3468 = vlaneseq
    %v3469 = vshrl.u32 %v3468, 7
    %v3470 = vsub.s32 %v3467, %v3469
    %v3471 = vrot.slane %v3464, %v3470
    %v3473 = vsub.f32 %v3418, %v3471
    %v3474 = vmul.f32 %v3217, %v3423
    %v3475 = vmul.f32 %v3219, %v3427
    %v3476 = vmul.f32 %v3299, %v3431
    %v3477 = vmul.f32 %v3301, %v3435
    %v3479 = vlaneseq
    %v3480 = vshrl.u32 %v3479, 7
    %v3481 = vsub.s32 0, %v3480
    %v3482 = vrot.slane %v3473, %v3481
    %v3483 = vlaneseq
    %v3484 = vshrl.u32 %v3483, 7
    %v3485 = vsub.s32 1, %v3484
    %v3486 = vrot.slane %v3473, %v3485
    %v3487 = vlaneseq
    %v3488 = vshrl.u32 %v3487, 7
    %v3489 = vsub.s32 2, %v3488
    %v3490 = vrot.slane %v3473, %v3489
    %v3491 = vlaneseq
    %v3492 = vshrl.u32 %v3491, 7
    %v3493 = vsub.s32 3, %v3492
    %v3494 = vrot.slane %v3473, %v3493
    %v3499 = vadd.f32 %v3474, %v3482
    %v3500 = vadd.f32 %v3475, %v3486
    %v3501 = vadd.f32 %v3476, %v3490
    %v3502 = vadd.f32 %v3477, %v3494
    %v3503 = vmax.f32 %v3499, 0.0
    %v3504 = vmax.f32 %v3500, 0.0
    %v3505 = vmax.f32 %v3501, 0.0
    %v3506 = vmax.f32 %v3502, 0.0
    %v3507 = vpack.c.bf16 %v3503, %v3503
    %v3508 = vpack.c.bf16 %v3504, %v3504
    %v3509 = vpack.c.bf16 %v3505, %v3505
    %v3510 = vpack.c.bf16 %v3506, %v3506
    %s3511 = scalar_lea.vmem [#allocation5], 3072
    %v3512 = vld [vmem:[%s3511] sm:$0xff]
    %v3513 = vld [vmem:[%s3511 + $0x8] sm:$0xff]
    %v3514 = vld [vmem:[%s3511 + $0x10] sm:$0xff]
    %v3515 = vld [vmem:[%s3511 + $0x18] sm:$0xff]
    %v3516 = vld [vmem:[%s3511 + $0x20] sm:$0xff]
    %v3517 = vld [vmem:[%s3511 + $0x28] sm:$0xff]
    %v3518 = vld [vmem:[%s3511 + $0x30] sm:$0xff]
    %v3519 = vld [vmem:[%s3511 + $0x38] sm:$0xff]
    %v3520 = vld [vmem:[%s3511 + $0x40] sm:$0xff]
    %v3521 = vld [vmem:[%s3511 + $0x48] sm:$0xff]
    %v3522 = vld [vmem:[%s3511 + $0x50] sm:$0xff]
    %v3523 = vld [vmem:[%s3511 + $0x58] sm:$0xff]
    %v3524 = vld [vmem:[%s3511 + $0x60] sm:$0xff]
    %v3525 = vld [vmem:[%s3511 + $0x68] sm:$0xff]
    %v3526 = vld [vmem:[%s3511 + $0x70] sm:$0xff]
    %v3527 = vld [vmem:[%s3511 + $0x78] sm:$0xff]
    %v3528 = vld [vmem:[%s3511 + $0x80] sm:$0xff]
    %v3529 = vld [vmem:[%s3511 + $0x88] sm:$0xff]
    %v3530 = vld [vmem:[%s3511 + $0x90] sm:$0xff]
    %v3531 = vld [vmem:[%s3511 + $0x98] sm:$0xff]
    %v3532 = vld [vmem:[%s3511 + $0xa0] sm:$0xff]
    %v3533 = vld [vmem:[%s3511 + $0xa8] sm:$0xff]
    %v3534 = vld [vmem:[%s3511 + $0xb0] sm:$0xff]
    %v3535 = vld [vmem:[%s3511 + $0xb8] sm:$0xff]
    %v3536 = vld [vmem:[%s3511 + $0xc0] sm:$0xff]
    %v3537 = vld [vmem:[%s3511 + $0xc8] sm:$0xff]
    %v3538 = vld [vmem:[%s3511 + $0xd0] sm:$0xff]
    %v3539 = vld [vmem:[%s3511 + $0xd8] sm:$0xff]
    %v3540 = vld [vmem:[%s3511 + $0xe0] sm:$0xff]
    %v3541 = vld [vmem:[%s3511 + $0xe8] sm:$0xff]
    %v3542 = vld [vmem:[%s3511 + $0xf0] sm:$0xff]
    %v3543 = vld [vmem:[%s3511 + $0xf8] sm:$0xff]
    %v3544 = vld [vmem:[%s3511 + $0x100] sm:$0xff]
    %v3545 = vld [vmem:[%s3511 + $0x108] sm:$0xff]
    %v3546 = vld [vmem:[%s3511 + $0x110] sm:$0xff]
    %v3547 = vld [vmem:[%s3511 + $0x118] sm:$0xff]
    %v3548 = vld [vmem:[%s3511 + $0x120] sm:$0xff]
    %v3549 = vld [vmem:[%s3511 + $0x128] sm:$0xff]
    %v3550 = vld [vmem:[%s3511 + $0x130] sm:$0xff]
    %v3551 = vld [vmem:[%s3511 + $0x138] sm:$0xff]
    %v3552 = vld [vmem:[%s3511 + $0x140] sm:$0xff]
    %v3553 = vld [vmem:[%s3511 + $0x148] sm:$0xff]
    %v3554 = vld [vmem:[%s3511 + $0x150] sm:$0xff]
    %v3555 = vld [vmem:[%s3511 + $0x158] sm:$0xff]
    %v3556 = vld [vmem:[%s3511 + $0x160] sm:$0xff]
    %v3557 = vld [vmem:[%s3511 + $0x168] sm:$0xff]
    %v3558 = vld [vmem:[%s3511 + $0x170] sm:$0xff]
    %v3559 = vld [vmem:[%s3511 + $0x178] sm:$0xff]
    %v3560 = vld [vmem:[%s3511 + $0x180] sm:$0xff]
    %v3561 = vld [vmem:[%s3511 + $0x188] sm:$0xff]
    %v3562 = vld [vmem:[%s3511 + $0x190] sm:$0xff]
    %v3563 = vld [vmem:[%s3511 + $0x198] sm:$0xff]
    %v3564 = vld [vmem:[%s3511 + $0x1a0] sm:$0xff]
    %v3565 = vld [vmem:[%s3511 + $0x1a8] sm:$0xff]
    %v3566 = vld [vmem:[%s3511 + $0x1b0] sm:$0xff]
    %v3567 = vld [vmem:[%s3511 + $0x1b8] sm:$0xff]
    %v3568 = vld [vmem:[%s3511 + $0x1c0] sm:$0xff]
    %v3569 = vld [vmem:[%s3511 + $0x1c8] sm:$0xff]
    %v3570 = vld [vmem:[%s3511 + $0x1d0] sm:$0xff]
    %v3571 = vld [vmem:[%s3511 + $0x1d8] sm:$0xff]
    %v3572 = vld [vmem:[%s3511 + $0x1e0] sm:$0xff]
    %v3573 = vld [vmem:[%s3511 + $0x1e8] sm:$0xff]
    %v3574 = vld [vmem:[%s3511 + $0x1f0] sm:$0xff]
    %v3575 = vld [vmem:[%s3511 + $0x1f8] sm:$0xff]
    %v3576 = vld [vmem:[%s3511 + $0x200] sm:$0xff]
    %v3577 = vld [vmem:[%s3511 + $0x208] sm:$0xff]
    %v3578 = vld [vmem:[%s3511 + $0x210] sm:$0xff]
    %v3579 = vld [vmem:[%s3511 + $0x218] sm:$0xff]
    %v3580 = vld [vmem:[%s3511 + $0x220] sm:$0xff]
    %v3581 = vld [vmem:[%s3511 + $0x228] sm:$0xff]
    %v3582 = vld [vmem:[%s3511 + $0x230] sm:$0xff]
    %v3583 = vld [vmem:[%s3511 + $0x238] sm:$0xff]
    %v3584 = vld [vmem:[%s3511 + $0x240] sm:$0xff]
    %v3585 = vld [vmem:[%s3511 + $0x248] sm:$0xff]
    %v3586 = vld [vmem:[%s3511 + $0x250] sm:$0xff]
    %v3587 = vld [vmem:[%s3511 + $0x258] sm:$0xff]
    %v3588 = vld [vmem:[%s3511 + $0x260] sm:$0xff]
    %v3589 = vld [vmem:[%s3511 + $0x268] sm:$0xff]
    %v3590 = vld [vmem:[%s3511 + $0x270] sm:$0xff]
    %v3591 = vld [vmem:[%s3511 + $0x278] sm:$0xff]
    %v3592 = vld [vmem:[%s3511 + $0x280] sm:$0xff]
    %v3593 = vld [vmem:[%s3511 + $0x288] sm:$0xff]
    %v3594 = vld [vmem:[%s3511 + $0x290] sm:$0xff]
    %v3595 = vld [vmem:[%s3511 + $0x298] sm:$0xff]
    %v3596 = vld [vmem:[%s3511 + $0x2a0] sm:$0xff]
    %v3597 = vld [vmem:[%s3511 + $0x2a8] sm:$0xff]
    %v3598 = vld [vmem:[%s3511 + $0x2b0] sm:$0xff]
    %v3599 = vld [vmem:[%s3511 + $0x2b8] sm:$0xff]
    %v3600 = vld [vmem:[%s3511 + $0x2c0] sm:$0xff]
    %v3601 = vld [vmem:[%s3511 + $0x2c8] sm:$0xff]
    %v3602 = vld [vmem:[%s3511 + $0x2d0] sm:$0xff]
    %v3603 = vld [vmem:[%s3511 + $0x2d8] sm:$0xff]
    %v3604 = vld [vmem:[%s3511 + $0x2e0] sm:$0xff]
    %v3605 = vld [vmem:[%s3511 + $0x2e8] sm:$0xff]
    %v3606 = vld [vmem:[%s3511 + $0x2f0] sm:$0xff]
    %v3607 = vld [vmem:[%s3511 + $0x2f8] sm:$0xff]
    %v3608 = vld [vmem:[%s3511 + $0x300] sm:$0xff]
    %v3609 = vld [vmem:[%s3511 + $0x308] sm:$0xff]
    %v3610 = vld [vmem:[%s3511 + $0x310] sm:$0xff]
    %v3611 = vld [vmem:[%s3511 + $0x318] sm:$0xff]
    %v3612 = vld [vmem:[%s3511 + $0x320] sm:$0xff]
    %v3613 = vld [vmem:[%s3511 + $0x328] sm:$0xff]
    %v3614 = vld [vmem:[%s3511 + $0x330] sm:$0xff]
    %v3615 = vld [vmem:[%s3511 + $0x338] sm:$0xff]
    %v3616 = vld [vmem:[%s3511 + $0x340] sm:$0xff]
    %v3617 = vld [vmem:[%s3511 + $0x348] sm:$0xff]
    %v3618 = vld [vmem:[%s3511 + $0x350] sm:$0xff]
    %v3619 = vld [vmem:[%s3511 + $0x358] sm:$0xff]
    %v3620 = vld [vmem:[%s3511 + $0x360] sm:$0xff]
    %v3621 = vld [vmem:[%s3511 + $0x368] sm:$0xff]
    %v3622 = vld [vmem:[%s3511 + $0x370] sm:$0xff]
    %v3623 = vld [vmem:[%s3511 + $0x378] sm:$0xff]
    %v3624 = vld [vmem:[%s3511 + $0x380] sm:$0xff]
    %v3625 = vld [vmem:[%s3511 + $0x388] sm:$0xff]
    %v3626 = vld [vmem:[%s3511 + $0x390] sm:$0xff]
    %v3627 = vld [vmem:[%s3511 + $0x398] sm:$0xff]
    %v3628 = vld [vmem:[%s3511 + $0x3a0] sm:$0xff]
    %v3629 = vld [vmem:[%s3511 + $0x3a8] sm:$0xff]
    %v3630 = vld [vmem:[%s3511 + $0x3b0] sm:$0xff]
    %v3631 = vld [vmem:[%s3511 + $0x3b8] sm:$0xff]
    %v3632 = vld [vmem:[%s3511 + $0x3c0] sm:$0xff]
    %v3633 = vld [vmem:[%s3511 + $0x3c8] sm:$0xff]
    %v3634 = vld [vmem:[%s3511 + $0x3d0] sm:$0xff]
    %v3635 = vld [vmem:[%s3511 + $0x3d8] sm:$0xff]
    %v3636 = vld [vmem:[%s3511 + $0x3e0] sm:$0xff]
    %v3637 = vld [vmem:[%s3511 + $0x3e8] sm:$0xff]
    %v3638 = vld [vmem:[%s3511 + $0x3f0] sm:$0xff]
    %v3639 = vld [vmem:[%s3511 + $0x3f8] sm:$0xff]
    %v3768 = vunpack.c.l.b16 %v3512
    %v3769 = vunpack.c.h.b16 %v3512
    %v3770 = vunpack.c.l.b16 %v3513
    %v3771 = vunpack.c.h.b16 %v3513
    %v3772 = vunpack.c.l.b16 %v3514
    %v3773 = vunpack.c.h.b16 %v3514
    %v3774 = vunpack.c.l.b16 %v3515
    %v3775 = vunpack.c.h.b16 %v3515
    %v3776 = vunpack.c.l.b16 %v3516
    %v3777 = vunpack.c.h.b16 %v3516
    %v3778 = vunpack.c.l.b16 %v3517
    %v3779 = vunpack.c.h.b16 %v3517
    %v3780 = vunpack.c.l.b16 %v3518
    %v3781 = vunpack.c.h.b16 %v3518
    %v3782 = vunpack.c.l.b16 %v3519
    %v3783 = vunpack.c.h.b16 %v3519
    %v3784 = vunpack.c.l.b16 %v3520
    %v3785 = vunpack.c.h.b16 %v3520
    %v3786 = vunpack.c.l.b16 %v3521
    %v3787 = vunpack.c.h.b16 %v3521
    %v3788 = vunpack.c.l.b16 %v3522
    %v3789 = vunpack.c.h.b16 %v3522
    %v3790 = vunpack.c.l.b16 %v3523
    %v3791 = vunpack.c.h.b16 %v3523
    %v3792 = vunpack.c.l.b16 %v3524
    %v3793 = vunpack.c.h.b16 %v3524
    %v3794 = vunpack.c.l.b16 %v3525
    %v3795 = vunpack.c.h.b16 %v3525
    %v3796 = vunpack.c.l.b16 %v3526
    %v3797 = vunpack.c.h.b16 %v3526
    %v3798 = vunpack.c.l.b16 %v3527
    %v3799 = vunpack.c.h.b16 %v3527
    %v3800 = vunpack.c.l.b16 %v3528
    %v3801 = vunpack.c.h.b16 %v3528
    %v3802 = vunpack.c.l.b16 %v3529
    %v3803 = vunpack.c.h.b16 %v3529
    %v3804 = vunpack.c.l.b16 %v3530
    %v3805 = vunpack.c.h.b16 %v3530
    %v3806 = vunpack.c.l.b16 %v3531
    %v3807 = vunpack.c.h.b16 %v3531
    %v3808 = vunpack.c.l.b16 %v3532
    %v3809 = vunpack.c.h.b16 %v3532
    %v3810 = vunpack.c.l.b16 %v3533
    %v3811 = vunpack.c.h.b16 %v3533
    %v3812 = vunpack.c.l.b16 %v3534
    %v3813 = vunpack.c.h.b16 %v3534
    %v3814 = vunpack.c.l.b16 %v3535
    %v3815 = vunpack.c.h.b16 %v3535
    %v3816 = vunpack.c.l.b16 %v3536
    %v3817 = vunpack.c.h.b16 %v3536
    %v3818 = vunpack.c.l.b16 %v3537
    %v3819 = vunpack.c.h.b16 %v3537
    %v3820 = vunpack.c.l.b16 %v3538
    %v3821 = vunpack.c.h.b16 %v3538
    %v3822 = vunpack.c.l.b16 %v3539
    %v3823 = vunpack.c.h.b16 %v3539
    %v3824 = vunpack.c.l.b16 %v3540
    %v3825 = vunpack.c.h.b16 %v3540
    %v3826 = vunpack.c.l.b16 %v3541
    %v3827 = vunpack.c.h.b16 %v3541
    %v3828 = vunpack.c.l.b16 %v3542
    %v3829 = vunpack.c.h.b16 %v3542
    %v3830 = vunpack.c.l.b16 %v3543
    %v3831 = vunpack.c.h.b16 %v3543
    %v3832 = vunpack.c.l.b16 %v3544
    %v3833 = vunpack.c.h.b16 %v3544
    %v3834 = vunpack.c.l.b16 %v3545
    %v3835 = vunpack.c.h.b16 %v3545
    %v3836 = vunpack.c.l.b16 %v3546
    %v3837 = vunpack.c.h.b16 %v3546
    %v3838 = vunpack.c.l.b16 %v3547
    %v3839 = vunpack.c.h.b16 %v3547
    %v3840 = vunpack.c.l.b16 %v3548
    %v3841 = vunpack.c.h.b16 %v3548
    %v3842 = vunpack.c.l.b16 %v3549
    %v3843 = vunpack.c.h.b16 %v3549
    %v3844 = vunpack.c.l.b16 %v3550
    %v3845 = vunpack.c.h.b16 %v3550
    %v3846 = vunpack.c.l.b16 %v3551
    %v3847 = vunpack.c.h.b16 %v3551
    %v3848 = vunpack.c.l.b16 %v3552
    %v3849 = vunpack.c.h.b16 %v3552
    %v3850 = vunpack.c.l.b16 %v3553
    %v3851 = vunpack.c.h.b16 %v3553
    %v3852 = vunpack.c.l.b16 %v3554
    %v3853 = vunpack.c.h.b16 %v3554
    %v3854 = vunpack.c.l.b16 %v3555
    %v3855 = vunpack.c.h.b16 %v3555
    %v3856 = vunpack.c.l.b16 %v3556
    %v3857 = vunpack.c.h.b16 %v3556
    %v3858 = vunpack.c.l.b16 %v3557
    %v3859 = vunpack.c.h.b16 %v3557
    %v3860 = vunpack.c.l.b16 %v3558
    %v3861 = vunpack.c.h.b16 %v3558
    %v3862 = vunpack.c.l.b16 %v3559
    %v3863 = vunpack.c.h.b16 %v3559
    %v3864 = vunpack.c.l.b16 %v3560
    %v3865 = vunpack.c.h.b16 %v3560
    %v3866 = vunpack.c.l.b16 %v3561
    %v3867 = vunpack.c.h.b16 %v3561
    %v3868 = vunpack.c.l.b16 %v3562
    %v3869 = vunpack.c.h.b16 %v3562
    %v3870 = vunpack.c.l.b16 %v3563
    %v3871 = vunpack.c.h.b16 %v3563
    %v3872 = vunpack.c.l.b16 %v3564
    %v3873 = vunpack.c.h.b16 %v3564
    %v3874 = vunpack.c.l.b16 %v3565
    %v3875 = vunpack.c.h.b16 %v3565
    %v3876 = vunpack.c.l.b16 %v3566
    %v3877 = vunpack.c.h.b16 %v3566
    %v3878 = vunpack.c.l.b16 %v3567
    %v3879 = vunpack.c.h.b16 %v3567
    %v3880 = vunpack.c.l.b16 %v3568
    %v3881 = vunpack.c.h.b16 %v3568
    %v3882 = vunpack.c.l.b16 %v3569
    %v3883 = vunpack.c.h.b16 %v3569
    %v3884 = vunpack.c.l.b16 %v3570
    %v3885 = vunpack.c.h.b16 %v3570
    %v3886 = vunpack.c.l.b16 %v3571
    %v3887 = vunpack.c.h.b16 %v3571
    %v3888 = vunpack.c.l.b16 %v3572
    %v3889 = vunpack.c.h.b16 %v3572
    %v3890 = vunpack.c.l.b16 %v3573
    %v3891 = vunpack.c.h.b16 %v3573
    %v3892 = vunpack.c.l.b16 %v3574
    %v3893 = vunpack.c.h.b16 %v3574
    %v3894 = vunpack.c.l.b16 %v3575
    %v3895 = vunpack.c.h.b16 %v3575
    %v3896 = vunpack.c.l.b16 %v3576
    %v3897 = vunpack.c.h.b16 %v3576
    %v3898 = vunpack.c.l.b16 %v3577
    %v3899 = vunpack.c.h.b16 %v3577
    %v3900 = vunpack.c.l.b16 %v3578
    %v3901 = vunpack.c.h.b16 %v3578
    %v3902 = vunpack.c.l.b16 %v3579
    %v3903 = vunpack.c.h.b16 %v3579
    %v3904 = vunpack.c.l.b16 %v3580
    %v3905 = vunpack.c.h.b16 %v3580
    %v3906 = vunpack.c.l.b16 %v3581
    %v3907 = vunpack.c.h.b16 %v3581
    %v3908 = vunpack.c.l.b16 %v3582
    %v3909 = vunpack.c.h.b16 %v3582
    %v3910 = vunpack.c.l.b16 %v3583
    %v3911 = vunpack.c.h.b16 %v3583
    %v3912 = vunpack.c.l.b16 %v3584
    %v3913 = vunpack.c.h.b16 %v3584
    %v3914 = vunpack.c.l.b16 %v3585
    %v3915 = vunpack.c.h.b16 %v3585
    %v3916 = vunpack.c.l.b16 %v3586
    %v3917 = vunpack.c.h.b16 %v3586
    %v3918 = vunpack.c.l.b16 %v3587
    %v3919 = vunpack.c.h.b16 %v3587
    %v3920 = vunpack.c.l.b16 %v3588
    %v3921 = vunpack.c.h.b16 %v3588
    %v3922 = vunpack.c.l.b16 %v3589
    %v3923 = vunpack.c.h.b16 %v3589
    %v3924 = vunpack.c.l.b16 %v3590
    %v3925 = vunpack.c.h.b16 %v3590
    %v3926 = vunpack.c.l.b16 %v3591
    %v3927 = vunpack.c.h.b16 %v3591
    %v3928 = vunpack.c.l.b16 %v3592
    %v3929 = vunpack.c.h.b16 %v3592
    %v3930 = vunpack.c.l.b16 %v3593
    %v3931 = vunpack.c.h.b16 %v3593
    %v3932 = vunpack.c.l.b16 %v3594
    %v3933 = vunpack.c.h.b16 %v3594
    %v3934 = vunpack.c.l.b16 %v3595
    %v3935 = vunpack.c.h.b16 %v3595
    %v3936 = vunpack.c.l.b16 %v3596
    %v3937 = vunpack.c.h.b16 %v3596
    %v3938 = vunpack.c.l.b16 %v3597
    %v3939 = vunpack.c.h.b16 %v3597
    %v3940 = vunpack.c.l.b16 %v3598
    %v3941 = vunpack.c.h.b16 %v3598
    %v3942 = vunpack.c.l.b16 %v3599
    %v3943 = vunpack.c.h.b16 %v3599
    %v3944 = vunpack.c.l.b16 %v3600
    %v3945 = vunpack.c.h.b16 %v3600
    %v3946 = vunpack.c.l.b16 %v3601
    %v3947 = vunpack.c.h.b16 %v3601
    %v3948 = vunpack.c.l.b16 %v3602
    %v3949 = vunpack.c.h.b16 %v3602
    %v3950 = vunpack.c.l.b16 %v3603
    %v3951 = vunpack.c.h.b16 %v3603
    %v3952 = vunpack.c.l.b16 %v3604
    %v3953 = vunpack.c.h.b16 %v3604
    %v3954 = vunpack.c.l.b16 %v3605
    %v3955 = vunpack.c.h.b16 %v3605
    %v3956 = vunpack.c.l.b16 %v3606
    %v3957 = vunpack.c.h.b16 %v3606
    %v3958 = vunpack.c.l.b16 %v3607
    %v3959 = vunpack.c.h.b16 %v3607
    %v3960 = vunpack.c.l.b16 %v3608
    %v3961 = vunpack.c.h.b16 %v3608
    %v3962 = vunpack.c.l.b16 %v3609
    %v3963 = vunpack.c.h.b16 %v3609
    %v3964 = vunpack.c.l.b16 %v3610
    %v3965 = vunpack.c.h.b16 %v3610
    %v3966 = vunpack.c.l.b16 %v3611
    %v3967 = vunpack.c.h.b16 %v3611
    %v3968 = vunpack.c.l.b16 %v3612
    %v3969 = vunpack.c.h.b16 %v3612
    %v3970 = vunpack.c.l.b16 %v3613
    %v3971 = vunpack.c.h.b16 %v3613
    %v3972 = vunpack.c.l.b16 %v3614
    %v3973 = vunpack.c.h.b16 %v3614
    %v3974 = vunpack.c.l.b16 %v3615
    %v3975 = vunpack.c.h.b16 %v3615
    %v3976 = vunpack.c.l.b16 %v3616
    %v3977 = vunpack.c.h.b16 %v3616
    %v3978 = vunpack.c.l.b16 %v3617
    %v3979 = vunpack.c.h.b16 %v3617
    %v3980 = vunpack.c.l.b16 %v3618
    %v3981 = vunpack.c.h.b16 %v3618
    %v3982 = vunpack.c.l.b16 %v3619
    %v3983 = vunpack.c.h.b16 %v3619
    %v3984 = vunpack.c.l.b16 %v3620
    %v3985 = vunpack.c.h.b16 %v3620
    %v3986 = vunpack.c.l.b16 %v3621
    %v3987 = vunpack.c.h.b16 %v3621
    %v3988 = vunpack.c.l.b16 %v3622
    %v3989 = vunpack.c.h.b16 %v3622
    %v3990 = vunpack.c.l.b16 %v3623
    %v3991 = vunpack.c.h.b16 %v3623
    %v3992 = vunpack.c.l.b16 %v3624
    %v3993 = vunpack.c.h.b16 %v3624
    %v3994 = vunpack.c.l.b16 %v3625
    %v3995 = vunpack.c.h.b16 %v3625
    %v3996 = vunpack.c.l.b16 %v3626
    %v3997 = vunpack.c.h.b16 %v3626
    %v3998 = vunpack.c.l.b16 %v3627
    %v3999 = vunpack.c.h.b16 %v3627
    %v4000 = vunpack.c.l.b16 %v3628
    %v4001 = vunpack.c.h.b16 %v3628
    %v4002 = vunpack.c.l.b16 %v3629
    %v4003 = vunpack.c.h.b16 %v3629
    %v4004 = vunpack.c.l.b16 %v3630
    %v4005 = vunpack.c.h.b16 %v3630
    %v4006 = vunpack.c.l.b16 %v3631
    %v4007 = vunpack.c.h.b16 %v3631
    %v4008 = vunpack.c.l.b16 %v3632
    %v4009 = vunpack.c.h.b16 %v3632
    %v4010 = vunpack.c.l.b16 %v3633
    %v4011 = vunpack.c.h.b16 %v3633
    %v4012 = vunpack.c.l.b16 %v3634
    %v4013 = vunpack.c.h.b16 %v3634
    %v4014 = vunpack.c.l.b16 %v3635
    %v4015 = vunpack.c.h.b16 %v3635
    %v4016 = vunpack.c.l.b16 %v3636
    %v4017 = vunpack.c.h.b16 %v3636
    %v4018 = vunpack.c.l.b16 %v3637
    %v4019 = vunpack.c.h.b16 %v3637
    %v4020 = vunpack.c.l.b16 %v3638
    %v4021 = vunpack.c.h.b16 %v3638
    %v4022 = vunpack.c.l.b16 %v3639
    %v4023 = vunpack.c.h.b16 %v3639
    %v4024 = vpack.c.b16 %v3772, %v3768
    %v4025 = vpack.c.b16 %v3773, %v3769
    %v4026 = vpack.c.b16 %v3774, %v3770
    %v4027 = vpack.c.b16 %v3775, %v3771
    %v4028 = vpack.c.b16 %v3780, %v3776
    %v4029 = vpack.c.b16 %v3781, %v3777
    %v4030 = vpack.c.b16 %v3782, %v3778
    %v4031 = vpack.c.b16 %v3783, %v3779
    %v4032 = vpack.c.b16 %v3788, %v3784
    %v4033 = vpack.c.b16 %v3789, %v3785
    %v4034 = vpack.c.b16 %v3790, %v3786
    %v4035 = vpack.c.b16 %v3791, %v3787
    %v4036 = vpack.c.b16 %v3796, %v3792
    %v4037 = vpack.c.b16 %v3797, %v3793
    %v4038 = vpack.c.b16 %v3798, %v3794
    %v4039 = vpack.c.b16 %v3799, %v3795
    %v4040 = vpack.c.b16 %v3804, %v3800
    %v4041 = vpack.c.b16 %v3805, %v3801
    %v4042 = vpack.c.b16 %v3806, %v3802
    %v4043 = vpack.c.b16 %v3807, %v3803
    %v4044 = vpack.c.b16 %v3812, %v3808
    %v4045 = vpack.c.b16 %v3813, %v3809
    %v4046 = vpack.c.b16 %v3814, %v3810
    %v4047 = vpack.c.b16 %v3815, %v3811
    %v4048 = vpack.c.b16 %v3820, %v3816
    %v4049 = vpack.c.b16 %v3821, %v3817
    %v4050 = vpack.c.b16 %v3822, %v3818
    %v4051 = vpack.c.b16 %v3823, %v3819
    %v4052 = vpack.c.b16 %v3828, %v3824
    %v4053 = vpack.c.b16 %v3829, %v3825
    %v4054 = vpack.c.b16 %v3830, %v3826
    %v4055 = vpack.c.b16 %v3831, %v3827
    %v4056 = vpack.c.b16 %v3836, %v3832
    %v4057 = vpack.c.b16 %v3837, %v3833
    %v4058 = vpack.c.b16 %v3838, %v3834
    %v4059 = vpack.c.b16 %v3839, %v3835
    %v4060 = vpack.c.b16 %v3844, %v3840
    %v4061 = vpack.c.b16 %v3845, %v3841
    %v4062 = vpack.c.b16 %v3846, %v3842
    %v4063 = vpack.c.b16 %v3847, %v3843
    %v4064 = vpack.c.b16 %v3852, %v3848
    %v4065 = vpack.c.b16 %v3853, %v3849
    %v4066 = vpack.c.b16 %v3854, %v3850
    %v4067 = vpack.c.b16 %v3855, %v3851
    %v4068 = vpack.c.b16 %v3860, %v3856
    %v4069 = vpack.c.b16 %v3861, %v3857
    %v4070 = vpack.c.b16 %v3862, %v3858
    %v4071 = vpack.c.b16 %v3863, %v3859
    %v4072 = vpack.c.b16 %v3868, %v3864
    %v4073 = vpack.c.b16 %v3869, %v3865
    %v4074 = vpack.c.b16 %v3870, %v3866
    %v4075 = vpack.c.b16 %v3871, %v3867
    %v4076 = vpack.c.b16 %v3876, %v3872
    %v4077 = vpack.c.b16 %v3877, %v3873
    %v4078 = vpack.c.b16 %v3878, %v3874
    %v4079 = vpack.c.b16 %v3879, %v3875
    %v4080 = vpack.c.b16 %v3884, %v3880
    %v4081 = vpack.c.b16 %v3885, %v3881
    %v4082 = vpack.c.b16 %v3886, %v3882
    %v4083 = vpack.c.b16 %v3887, %v3883
    %v4084 = vpack.c.b16 %v3892, %v3888
    %v4085 = vpack.c.b16 %v3893, %v3889
    %v4086 = vpack.c.b16 %v3894, %v3890
    %v4087 = vpack.c.b16 %v3895, %v3891
    %v4088 = vpack.c.b16 %v3900, %v3896
    %v4089 = vpack.c.b16 %v3901, %v3897
    %v4090 = vpack.c.b16 %v3902, %v3898
    %v4091 = vpack.c.b16 %v3903, %v3899
    %v4092 = vpack.c.b16 %v3908, %v3904
    %v4093 = vpack.c.b16 %v3909, %v3905
    %v4094 = vpack.c.b16 %v3910, %v3906
    %v4095 = vpack.c.b16 %v3911, %v3907
    %v4096 = vpack.c.b16 %v3916, %v3912
    %v4097 = vpack.c.b16 %v3917, %v3913
    %v4098 = vpack.c.b16 %v3918, %v3914
    %v4099 = vpack.c.b16 %v3919, %v3915
    %v4100 = vpack.c.b16 %v3924, %v3920
    %v4101 = vpack.c.b16 %v3925, %v3921
    %v4102 = vpack.c.b16 %v3926, %v3922
    %v4103 = vpack.c.b16 %v3927, %v3923
    %v4104 = vpack.c.b16 %v3932, %v3928
    %v4105 = vpack.c.b16 %v3933, %v3929
    %v4106 = vpack.c.b16 %v3934, %v3930
    %v4107 = vpack.c.b16 %v3935, %v3931
    %v4108 = vpack.c.b16 %v3940, %v3936
    %v4109 = vpack.c.b16 %v3941, %v3937
    %v4110 = vpack.c.b16 %v3942, %v3938
    %v4111 = vpack.c.b16 %v3943, %v3939
    %v4112 = vpack.c.b16 %v3948, %v3944
    %v4113 = vpack.c.b16 %v3949, %v3945
    %v4114 = vpack.c.b16 %v3950, %v3946
    %v4115 = vpack.c.b16 %v3951, %v3947
    %v4116 = vpack.c.b16 %v3956, %v3952
    %v4117 = vpack.c.b16 %v3957, %v3953
    %v4118 = vpack.c.b16 %v3958, %v3954
    %v4119 = vpack.c.b16 %v3959, %v3955
    %v4120 = vpack.c.b16 %v3964, %v3960
    %v4121 = vpack.c.b16 %v3965, %v3961
    %v4122 = vpack.c.b16 %v3966, %v3962
    %v4123 = vpack.c.b16 %v3967, %v3963
    %v4124 = vpack.c.b16 %v3972, %v3968
    %v4125 = vpack.c.b16 %v3973, %v3969
    %v4126 = vpack.c.b16 %v3974, %v3970
    %v4127 = vpack.c.b16 %v3975, %v3971
    %v4128 = vpack.c.b16 %v3980, %v3976
    %v4129 = vpack.c.b16 %v3981, %v3977
    %v4130 = vpack.c.b16 %v3982, %v3978
    %v4131 = vpack.c.b16 %v3983, %v3979
    %v4132 = vpack.c.b16 %v3988, %v3984
    %v4133 = vpack.c.b16 %v3989, %v3985
    %v4134 = vpack.c.b16 %v3990, %v3986
    %v4135 = vpack.c.b16 %v3991, %v3987
    %v4136 = vpack.c.b16 %v3996, %v3992
    %v4137 = vpack.c.b16 %v3997, %v3993
    %v4138 = vpack.c.b16 %v3998, %v3994
    %v4139 = vpack.c.b16 %v3999, %v3995
    %v4140 = vpack.c.b16 %v4004, %v4000
    %v4141 = vpack.c.b16 %v4005, %v4001
    %v4142 = vpack.c.b16 %v4006, %v4002
    %v4143 = vpack.c.b16 %v4007, %v4003
    %v4144 = vpack.c.b16 %v4012, %v4008
    %v4145 = vpack.c.b16 %v4013, %v4009
    %v4146 = vpack.c.b16 %v4014, %v4010
    %v4147 = vpack.c.b16 %v4015, %v4011
    %v4148 = vpack.c.b16 %v4020, %v4016
    %v4149 = vpack.c.b16 %v4021, %v4017
    %v4150 = vpack.c.b16 %v4022, %v4018
    %v4151 = vpack.c.b16 %v4023, %v4019
    %4280 = vmatprep.subr.bf16.mxu0 %v4025
    %4281 = vmatpush1.bf16.msra.mxu0 %v4024
    %4282 = vmatprep.subr.bf16.mxu0 %v4029
    %4283 = vmatpush1.bf16.msra.mxu0 %v4028
    %4284 = vmatprep.subr.bf16.mxu0 %v4033
    %4285 = vmatpush1.bf16.msra.mxu0 %v4032
    %4286 = vmatprep.subr.bf16.mxu0 %v4037
    %4287 = vmatpush1.bf16.msra.mxu0 %v4036
    %4288 = vmatprep.subr.bf16.mxu0 %v4041
    %4289 = vmatpush1.bf16.msra.mxu0 %v4040
    %4290 = vmatprep.subr.bf16.mxu0 %v4045
    %4291 = vmatpush1.bf16.msra.mxu0 %v4044
    %4292 = vmatprep.subr.bf16.mxu0 %v4049
    %4293 = vmatpush1.bf16.msra.mxu0 %v4048
    %4294 = vmatprep.subr.bf16.mxu0 %v4053
    %4295 = vmatpush1.bf16.msra.mxu0 %v4052
    %4296 = vmatprep.subr.bf16.mxu0 %v4057
    %4297 = vmatpush1.bf16.msra.mxu0 %v4056
    %4298 = vmatprep.subr.bf16.mxu0 %v4061
    %4299 = vmatpush1.bf16.msra.mxu0 %v4060
    %4300 = vmatprep.subr.bf16.mxu0 %v4065
    %4301 = vmatpush1.bf16.msra.mxu0 %v4064
    %4302 = vmatprep.subr.bf16.mxu0 %v4069
    %4303 = vmatpush1.bf16.msra.mxu0 %v4068
    %4304 = vmatprep.subr.bf16.mxu0 %v4073
    %4305 = vmatpush1.bf16.msra.mxu0 %v4072
    %4306 = vmatprep.subr.bf16.mxu0 %v4077
    %4307 = vmatpush1.bf16.msra.mxu0 %v4076
    %4308 = vmatprep.subr.bf16.mxu0 %v4081
    %4309 = vmatpush1.bf16.msra.mxu0 %v4080
    %4310 = vmatprep.subr.bf16.mxu0 %v4085
    %4311 = vmatpush1.bf16.msra.mxu0 %v4084
    %4312 = vmatprep.mubr.bf16.mxu0 %v3508
    %4313 = vmatmul.mubr.bf16.gmra.mrb[0].mxu0 %v3507
    %v4314 = vpop.f32.mrb[0].mxu0
    %v4315 = vadd.f32 0.0, %v4314
    %v4316 = vpop.f32.mrb[0].mxu0
    %v4317 = vadd.f32 0.0, %v4316
    %v4318 = vpop.f32.mrb[0].mxu0
    %v4319 = vpop.f32.mrb[0].mxu0
    %4320 = vdwg.mxu0
    %4321 = vmatprep.subr.bf16.mxu0 %v4089
    %4322 = vmatpush1.bf16.msra.mxu0 %v4088
    %4323 = vmatprep.subr.bf16.mxu0 %v4093
    %4324 = vmatpush1.bf16.msra.mxu0 %v4092
    %4325 = vmatprep.subr.bf16.mxu0 %v4097
    %4326 = vmatpush1.bf16.msra.mxu0 %v4096
    %4327 = vmatprep.subr.bf16.mxu0 %v4101
    %4328 = vmatpush1.bf16.msra.mxu0 %v4100
    %4329 = vmatprep.subr.bf16.mxu0 %v4105
    %4330 = vmatpush1.bf16.msra.mxu0 %v4104
    %4331 = vmatprep.subr.bf16.mxu0 %v4109
    %4332 = vmatpush1.bf16.msra.mxu0 %v4108
    %4333 = vmatprep.subr.bf16.mxu0 %v4113
    %4334 = vmatpush1.bf16.msra.mxu0 %v4112
    %4335 = vmatprep.subr.bf16.mxu0 %v4117
    %4336 = vmatpush1.bf16.msra.mxu0 %v4116
    %4337 = vmatprep.subr.bf16.mxu0 %v4121
    %4338 = vmatpush1.bf16.msra.mxu0 %v4120
    %4339 = vmatprep.subr.bf16.mxu0 %v4125
    %4340 = vmatpush1.bf16.msra.mxu0 %v4124
    %4341 = vmatprep.subr.bf16.mxu0 %v4129
    %4342 = vmatpush1.bf16.msra.mxu0 %v4128
    %4343 = vmatprep.subr.bf16.mxu0 %v4133
    %4344 = vmatpush1.bf16.msra.mxu0 %v4132
    %4345 = vmatprep.subr.bf16.mxu0 %v4137
    %4346 = vmatpush1.bf16.msra.mxu0 %v4136
    %4347 = vmatprep.subr.bf16.mxu0 %v4141
    %4348 = vmatpush1.bf16.msra.mxu0 %v4140
    %4349 = vmatprep.subr.bf16.mxu0 %v4145
    %4350 = vmatpush1.bf16.msra.mxu0 %v4144
    %4351 = vmatprep.subr.bf16.mxu0 %v4149
    %4352 = vmatpush1.bf16.msra.mxu0 %v4148
    %4353 = vmatprep.mubr.bf16.mxu0 %v3510
    %4354 = vmatmul.mubr.bf16.gmra.mrb[0].mxu0 %v3509
    %v4355 = vpop.f32.mrb[0].mxu0
    %v4356 = vadd.f32 %v4315, %v4355
    %v4357 = vpop.f32.mrb[0].mxu0
    %v4358 = vadd.f32 %v4317, %v4357
    %v4359 = vpop.f32.mrb[0].mxu0
    %v4360 = vpop.f32.mrb[0].mxu0
    %4361 = vdwg.mxu0
    %4362 = vmatprep.subr.bf16.mxu0 %v4027
    %4363 = vmatpush1.bf16.msra.mxu0 %v4026
    %4364 = vmatprep.subr.bf16.mxu0 %v4031
    %4365 = vmatpush1.bf16.msra.mxu0 %v4030
    %4366 = vmatprep.subr.bf16.mxu0 %v4035
    %4367 = vmatpush1.bf16.msra.mxu0 %v4034
    %4368 = vmatprep.subr.bf16.mxu0 %v4039
    %4369 = vmatpush1.bf16.msra.mxu0 %v4038
    %4370 = vmatprep.subr.bf16.mxu0 %v4043
    %4371 = vmatpush1.bf16.msra.mxu0 %v4042
    %4372 = vmatprep.subr.bf16.mxu0 %v4047
    %4373 = vmatpush1.bf16.msra.mxu0 %v4046
    %4374 = vmatprep.subr.bf16.mxu0 %v4051
    %4375 = vmatpush1.bf16.msra.mxu0 %v4050
    %4376 = vmatprep.subr.bf16.mxu0 %v4055
    %4377 = vmatpush1.bf16.msra.mxu0 %v4054
    %4378 = vmatprep.subr.bf16.mxu0 %v4059
    %4379 = vmatpush1.bf16.msra.mxu0 %v4058
    %4380 = vmatprep.subr.bf16.mxu0 %v4063
    %4381 = vmatpush1.bf16.msra.mxu0 %v4062
    %4382 = vmatprep.subr.bf16.mxu0 %v4067
    %4383 = vmatpush1.bf16.msra.mxu0 %v4066
    %4384 = vmatprep.subr.bf16.mxu0 %v4071
    %4385 = vmatpush1.bf16.msra.mxu0 %v4070
    %4386 = vmatprep.subr.bf16.mxu0 %v4075
    %4387 = vmatpush1.bf16.msra.mxu0 %v4074
    %4388 = vmatprep.subr.bf16.mxu0 %v4079
    %4389 = vmatpush1.bf16.msra.mxu0 %v4078
    %4390 = vmatprep.subr.bf16.mxu0 %v4083
    %4391 = vmatpush1.bf16.msra.mxu0 %v4082
    %4392 = vmatprep.subr.bf16.mxu0 %v4087
    %4393 = vmatpush1.bf16.msra.mxu0 %v4086
    %4394 = vmatprep.mubr.bf16.mxu0 %v3508
    %4395 = vmatmul.mubr.bf16.gmra.mrb[0].mxu0 %v3507
    %v4396 = vpop.f32.mrb[0].mxu0
    %v4397 = vadd.f32 0.0, %v4396
    %v4398 = vpop.f32.mrb[0].mxu0
    %v4399 = vadd.f32 0.0, %v4398
    %v4400 = vpop.f32.mrb[0].mxu0
    %v4401 = vpop.f32.mrb[0].mxu0
    %4402 = vdwg.mxu0
    %4403 = vmatprep.subr.bf16.mxu0 %v4091
    %4404 = vmatpush1.bf16.msra.mxu0 %v4090
    %4405 = vmatprep.subr.bf16.mxu0 %v4095
    %4406 = vmatpush1.bf16.msra.mxu0 %v4094
    %4407 = vmatprep.subr.bf16.mxu0 %v4099
    %4408 = vmatpush1.bf16.msra.mxu0 %v4098
    %4409 = vmatprep.subr.bf16.mxu0 %v4103
    %4410 = vmatpush1.bf16.msra.mxu0 %v4102
    %4411 = vmatprep.subr.bf16.mxu0 %v4107
    %4412 = vmatpush1.bf16.msra.mxu0 %v4106
    %4413 = vmatprep.subr.bf16.mxu0 %v4111
    %4414 = vmatpush1.bf16.msra.mxu0 %v4110
    %4415 = vmatprep.subr.bf16.mxu0 %v4115
    %4416 = vmatpush1.bf16.msra.mxu0 %v4114
    %4417 = vmatprep.subr.bf16.mxu0 %v4119
    %4418 = vmatpush1.bf16.msra.mxu0 %v4118
    %4419 = vmatprep.subr.bf16.mxu0 %v4123
    %4420 = vmatpush1.bf16.msra.mxu0 %v4122
    %4421 = vmatprep.subr.bf16.mxu0 %v4127
    %4422 = vmatpush1.bf16.msra.mxu0 %v4126
    %4423 = vmatprep.subr.bf16.mxu0 %v4131
    %4424 = vmatpush1.bf16.msra.mxu0 %v4130
    %4425 = vmatprep.subr.bf16.mxu0 %v4135
    %4426 = vmatpush1.bf16.msra.mxu0 %v4134
    %4427 = vmatprep.subr.bf16.mxu0 %v4139
    %4428 = vmatpush1.bf16.msra.mxu0 %v4138
    %4429 = vmatprep.subr.bf16.mxu0 %v4143
    %4430 = vmatpush1.bf16.msra.mxu0 %v4142
    %4431 = vmatprep.subr.bf16.mxu0 %v4147
    %4432 = vmatpush1.bf16.msra.mxu0 %v4146
    %4433 = vmatprep.subr.bf16.mxu0 %v4151
    %4434 = vmatpush1.bf16.msra.mxu0 %v4150
    %4435 = vmatprep.mubr.bf16.mxu0 %v3510
    %4436 = vmatmul.mubr.bf16.gmra.mrb[0].mxu0 %v3509
    %v4437 = vpop.f32.mrb[0].mxu0
    %v4438 = vadd.f32 %v4397, %v4437
    %v4439 = vpop.f32.mrb[0].mxu0
    %v4440 = vadd.f32 %v4399, %v4439
    %v4441 = vpop.f32.mrb[0].mxu0
    %v4442 = vpop.f32.mrb[0].mxu0
    %4443 = vdwg.mxu0
    %v4444 = vrot.slane %v4356, 4
    %v4445 = vadd.f32 %v4356, %v4444
    %v4446 = vrot.slane %v4445, 2
    %v4447 = vadd.f32 %v4445, %v4446
    %v4448 = vrot.slane %v4447, 1
    %v4449 = vadd.f32 %v4447, %v4448
    %v4450 = vrot.slane %v4358, 4
    %v4451 = vadd.f32 %v4358, %v4450
    %v4452 = vrot.slane %v4451, 2
    %v4453 = vadd.f32 %v4451, %v4452
    %v4454 = vrot.slane %v4453, 1
    %v4455 = vadd.f32 %v4453, %v4454
    %v4456 = vrot.slane %v4438, 4
    %v4457 = vadd.f32 %v4438, %v4456
    %v4458 = vrot.slane %v4457, 2
    %v4459 = vadd.f32 %v4457, %v4458
    %v4460 = vrot.slane %v4459, 1
    %v4461 = vadd.f32 %v4459, %v4460
    %v4462 = vrot.slane %v4440, 4
    %v4463 = vadd.f32 %v4440, %v4462
    %v4464 = vrot.slane %v4463, 2
    %v4465 = vadd.f32 %v4463, %v4464
    %v4466 = vrot.slane %v4465, 1
    %v4467 = vadd.f32 %v4465, %v4466
    %v4468 = vmul.f32 %v4356, %v4356
    %v4469 = vmul.f32 %v4358, %v4358
    %v4470 = vmul.f32 %v4438, %v4438
    %v4471 = vmul.f32 %v4440, %v4440
    %v4472 = vrot.slane %v4468, 4
    %v4473 = vadd.f32 %v4468, %v4472
    %v4474 = vrot.slane %v4473, 2
    %v4475 = vadd.f32 %v4473, %v4474
    %v4476 = vrot.slane %v4475, 1
    %v4477 = vadd.f32 %v4475, %v4476
    %v4478 = vrot.slane %v4469, 4
    %v4479 = vadd.f32 %v4469, %v4478
    %v4480 = vrot.slane %v4479, 2
    %v4481 = vadd.f32 %v4479, %v4480
    %v4482 = vrot.slane %v4481, 1
    %v4483 = vadd.f32 %v4481, %v4482
    %v4484 = vrot.slane %v4470, 4
    %v4485 = vadd.f32 %v4470, %v4484
    %v4486 = vrot.slane %v4485, 2
    %v4487 = vadd.f32 %v4485, %v4486
    %v4488 = vrot.slane %v4487, 1
    %v4489 = vadd.f32 %v4487, %v4488
    %v4490 = vrot.slane %v4471, 4
    %v4491 = vadd.f32 %v4471, %v4490
    %v4492 = vrot.slane %v4491, 2
    %v4493 = vadd.f32 %v4491, %v4492
    %v4494 = vrot.slane %v4493, 1
    %v4495 = vadd.f32 %v4493, %v4494
    %v4496 = vmul.f32 %v4449, 0.125
    %v4497 = vmul.f32 %v4455, 0.125
    %v4498 = vmul.f32 %v4461, 0.125
    %v4499 = vmul.f32 %v4467, 0.125
    %v4500 = vmul.f32 %v4477, 0.125
    %v4501 = vmul.f32 %v4483, 0.125
    %v4502 = vmul.f32 %v4489, 0.125
    %v4503 = vmul.f32 %v4495, 0.125
    %v4504 = vmul.f32 %v4496, %v4496
    %v4505 = vmul.f32 %v4497, %v4497
    %v4506 = vmul.f32 %v4498, %v4498
    %v4507 = vmul.f32 %v4499, %v4499
    %v4508 = vsub.f32 %v4500, %v4504
    %v4509 = vsub.f32 %v4501, %v4505
    %v4510 = vsub.f32 %v4502, %v4506
    %v4511 = vsub.f32 %v4503, %v4507
    %v4512 = vmax.f32 %v4508, 0.0
    %v4513 = vmax.f32 %v4509, 0.0
    %v4514 = vmax.f32 %v4510, 0.0
    %v4515 = vmax.f32 %v4511, 0.0
    %s4516 = scalar_lea.vmem [#allocation7], 12
    %v4517 = vld [vmem:[%s4516] sm:$0xf]
    %v4518 = vadd.f32 %v4512, 1e-05
    %v4519 = vadd.f32 %v4513, 1e-05
    %v4520 = vadd.f32 %v4514, 1e-05
    %v4521 = vadd.f32 %v4515, 1e-05
    %v4522 = vrsqrt.pop %v4518
    %v4523 = vrsqrt.pop %v4519
    %v4524 = vrsqrt.pop %v4520
    %v4525 = vrsqrt.pop %v4521
    %v4530 = vcombine.low %v4522, %v4523
    %v4531 = vcombine.low %v4524, %v4525
    %v4533 = vunpack.c.l.s4 1966171168
    %v4534 = vunpack.c.0.s8 %v4533
    %v4535 = vlaneseq
    %v4536 = vshrl.u32 %v4535, 7
    %v4537 = vsub.s32 %v4534, %v4536
    %v4538 = vrot.slane %v4530, %v4537
    %v4540 = vunpack.c.l.s4 1966171168
    %v4541 = vunpack.c.0.s8 %v4540
    %v4542 = vlaneseq
    %v4543 = vshrl.u32 %v4542, 7
    %v4544 = vsub.s32 %v4541, %v4543
    %v4545 = vrot.slane %v4531, %v4544
    %v4546 = vcombine.low %v4538, %v4545
    %v4548 = vunpack.c.l.s4 1966171168
    %v4549 = vunpack.c.0.s8 %v4548
    %v4550 = vlaneseq
    %v4551 = vshrl.u32 %v4550, 7
    %v4552 = vsub.s32 %v4549, %v4551
    %v4553 = vrot.slane %v4546, %v4552
    %v4555 = vmul.f32 %v4517, %v4553
    %s4556 = scalar_lea.vmem [#allocation8], 12
    %v4557 = vld [vmem:[%s4556] sm:$0xf]
    %v4559 = vlaneseq
    %v4560 = vshrl.u32 %v4559, 7
    %v4561 = vsub.s32 0, %v4560
    %v4562 = vrot.slane %v4555, %v4561
    %v4563 = vlaneseq
    %v4564 = vshrl.u32 %v4563, 7
    %v4565 = vsub.s32 1, %v4564
    %v4566 = vrot.slane %v4555, %v4565
    %v4567 = vlaneseq
    %v4568 = vshrl.u32 %v4567, 7
    %v4569 = vsub.s32 2, %v4568
    %v4570 = vrot.slane %v4555, %v4569
    %v4571 = vlaneseq
    %v4572 = vshrl.u32 %v4571, 7
    %v4573 = vsub.s32 3, %v4572
    %v4574 = vrot.slane %v4555, %v4573
    %v4579 = vmul.f32 %v4496, %v4562
    %v4580 = vmul.f32 %v4497, %v4566
    %v4581 = vmul.f32 %v4498, %v4570
    %v4582 = vmul.f32 %v4499, %v4574
    %v4587 = vcombine.low %v4579, %v4580
    %v4588 = vcombine.low %v4581, %v4582
    %v4590 = vunpack.c.l.s4 1966171168
    %v4591 = vunpack.c.0.s8 %v4590
    %v4592 = vlaneseq
    %v4593 = vshrl.u32 %v4592, 7
    %v4594 = vsub.s32 %v4591, %v4593
    %v4595 = vrot.slane %v4587, %v4594
    %v4597 = vunpack.c.l.s4 1966171168
    %v4598 = vunpack.c.0.s8 %v4597
    %v4599 = vlaneseq
    %v4600 = vshrl.u32 %v4599, 7
    %v4601 = vsub.s32 %v4598, %v4600
    %v4602 = vrot.slane %v4588, %v4601
    %v4603 = vcombine.low %v4595, %v4602
    %v4605 = vunpack.c.l.s4 1966171168
    %v4606 = vunpack.c.0.s8 %v4605
    %v4607 = vlaneseq
    %v4608 = vshrl.u32 %v4607, 7
    %v4609 = vsub.s32 %v4606, %v4608
    %v4610 = vrot.slane %v4603, %v4609
    %v4612 = vsub.f32 %v4557, %v4610
    %v4613 = vmul.f32 %v4356, %v4562
    %v4614 = vmul.f32 %v4358, %v4566
    %v4615 = vmul.f32 %v4438, %v4570
    %v4616 = vmul.f32 %v4440, %v4574
    %v4618 = vlaneseq
    %v4619 = vshrl.u32 %v4618, 7
    %v4620 = vsub.s32 0, %v4619
    %v4621 = vrot.slane %v4612, %v4620
    %v4622 = vlaneseq
    %v4623 = vshrl.u32 %v4622, 7
    %v4624 = vsub.s32 1, %v4623
    %v4625 = vrot.slane %v4612, %v4624
    %v4626 = vlaneseq
    %v4627 = vshrl.u32 %v4626, 7
    %v4628 = vsub.s32 2, %v4627
    %v4629 = vrot.slane %v4612, %v4628
    %v4630 = vlaneseq
    %v4631 = vshrl.u32 %v4630, 7
    %v4632 = vsub.s32 3, %v4631
    %v4633 = vrot.slane %v4612, %v4632
    %v4638 = vadd.f32 %v4613, %v4621
    %v4639 = vadd.f32 %v4614, %v4625
    %v4640 = vadd.f32 %v4615, %v4629
    %v4641 = vadd.f32 %v4616, %v4633
    %v4642 = vmax.f32 %v4638, 0.0
    %v4643 = vmax.f32 %v4639, 0.0
    %v4644 = vmax.f32 %v4640, 0.0
    %v4645 = vmax.f32 %v4641, 0.0
    %v4646 = vld [vmem:[#allocation10] sm:$0xf]
    %v4648 = vlaneseq
    %v4649 = vshrl.u32 %v4648, 7
    %v4650 = vsub.s32 0, %v4649
    %v4651 = vrot.slane %v4646, %v4650
    %v4652 = vlaneseq
    %v4653 = vshrl.u32 %v4652, 7
    %v4654 = vsub.s32 1, %v4653
    %v4655 = vrot.slane %v4646, %v4654
    %v4656 = vlaneseq
    %v4657 = vshrl.u32 %v4656, 7
    %v4658 = vsub.s32 2, %v4657
    %v4659 = vrot.slane %v4646, %v4658
    %v4660 = vlaneseq
    %v4661 = vshrl.u32 %v4660, 7
    %v4662 = vsub.s32 3, %v4661
    %v4663 = vrot.slane %v4646, %v4662
    %v4668 = vmul.f32 %v4642, %v4651
    %v4669 = vmul.f32 %v4643, %v4655
    %v4670 = vmul.f32 %v4644, %v4659
    %v4671 = vmul.f32 %v4645, %v4663
    %v4672 = vadd.f32 %v4668, %v4669
    %v4673 = vadd.f32 %v4672, %v4670
    %v4674 = vadd.f32 %v4673, %v4671
    %4675 = vadd.xlane.f32.xlu0 %v4674
    %v4676 = vpop.xlane.xlu0 %4675
    %v4677 = vld [vmem:[#allocation2] sm:$0x1]
    %v4679 = vlaneseq
    %v4680 = vshrl.u32 %v4679, 7
    %v4681 = vsub.s32 0, %v4680
    %v4682 = vrot.slane %v4677, %v4681
    %v4684 = vadd.f32 %v4676, %v4682
    %vm4685 = vcmask 7168
    %4686 = vst.msk [vmem:[%s6] sm:$0xff] %vm4685, %v4684
    // Predicated region
    $region46: #{domain_classifier.1} parent=1 // pred_check
      _
    $region47: #{domain_classifier.1} parent=1 // pred_check_branch
      %4688 = sbr.rel (0) target = $region49
    $region48: #{domain_classifier.1} parent=1 // pred_region
      _
    $region49: #{domain_classifier.1} parent=1 // pred_fallthru
      _
    // Predicated region
    $region50: #{domain_classifier.1} parent=1 // pred_check
      _
    $region51: #{domain_classifier.1} parent=1 // pred_check_branch
      %4690 = sbr.rel (0) target = $region53
    $region52: #{domain_classifier.1} parent=1 // pred_region
      _
    $region53: #{domain_classifier.1} parent=1 // pred_fallthru
      _
    %4691 = vsyncpa [#allocation4], 1
    %4692 = vsyncpa [#allocation6], 1
    %4693 = vsyncpa [#allocation9], 1

</llo_original>
